<compile_context>
chip_gen: v5e
topology: v5e:2x2
jax: 0.10.0
libtpu: 0.0.40
codegen_flags: <defaults>
</compile_context>

<pallas_src>
import functools

import jax
import jax.numpy as jnp
from jax.experimental import pallas as pl
from jax.experimental.pallas import tpu as pltpu


def fused_aspect_kernel(x_ref, w1_ref, b1_ref, w2_ref, b2_ref, w3_ref, b3_ref,
                        o_ref, pooled_acc, *, seq_len, n_classes):
    """Grid is (num_seq_tiles,).  Seq tiles are summed into `pooled_acc`; the
    MLP heads + log_softmax run once on the last grid step.

    x_ref : (B, tile_s, H)            current seq tile
    w1_ref: (H, A*512)   b1_ref: (1, A*512)      (aspects concatenated on N)
    w2_ref: (A, 512, 256) b2_ref: (A, 1, 256)
    w3_ref: (A, 256, CPAD) b3_ref: (A, 1, CPAD)  (class dim zero-padded to 128)
    o_ref : (B, A*CPAD)  lane-dense output slab (f32)
    pooled_acc: (B, H) f32 persistent scratch (running seq sum)
    """
    si = pl.program_id(0)

    @pl.when(si == 0)
    def _init():
        pooled_acc[...] = jnp.zeros_like(pooled_acc)

    # Running sum over the seq axis (mean = sum * 1/S applied at the end).
    pooled_acc[...] += jnp.sum(x_ref[...].astype(jnp.float32), axis=1)

    @pl.when(si == pl.num_programs(0) - 1)
    def _finalize():
        n_aspects = w2_ref.shape[0]
        d1 = w2_ref.shape[1]                       # 512
        cpad = o_ref.shape[1] // n_aspects         # 128
        batch = o_ref.shape[0]

        cdtype = w1_ref.dtype                      # bf16 or f32 compute dtype
        pooled = pooled_acc[...] * (1.0 / seq_len)  # (B, H) f32 mean over seq

        # Layer 1: one wide lane-dense MXU matmul over all aspects (N = A*512).
        h1 = jnp.dot(pooled.astype(cdtype), w1_ref[...],
                     preferred_element_type=jnp.float32)
        h1 = jnp.maximum(h1 + b1_ref[...].astype(jnp.float32), 0.0)  # (B, A*512)

        # Mask for the real (unpadded) class columns.
        col = jax.lax.broadcasted_iota(jnp.int32, (batch, cpad), 1)
        valid = col < n_classes

        # Layers 2/3 + log_softmax, statically unrolled over aspects.
        for a in range(n_aspects):
            h1_a = h1[:, a * d1:(a + 1) * d1]                        # (B, 512)
            h2 = jnp.dot(h1_a.astype(cdtype), w2_ref[a],
                         preferred_element_type=jnp.float32)
            h2 = jnp.maximum(h2 + b2_ref[a].astype(jnp.float32), 0.0)  # (B, 256)

            h3 = jnp.dot(h2.astype(cdtype), w3_ref[a],
                         preferred_element_type=jnp.float32)
            h3 = jnp.maximum(h3 + b3_ref[a].astype(jnp.float32), 0.0)  # (B, CPAD)

            # log_softmax over the real classes only (padded cols pushed to -inf-ish).
            logits = jnp.where(valid, h3, -1e30)
            m = jnp.max(logits, axis=-1, keepdims=True)
            shifted = logits - m
            lse = jnp.log(jnp.sum(jnp.exp(shifted), axis=-1, keepdims=True))
            o_ref[:, a * cpad:(a + 1) * cpad] = shifted - lse


def simple_aspect_forward(last_hidden_state, params, *, compute_dtype=None,
                          seq_tile=None):
    """last_hidden_state: (B, S, H) float32 backbone output.
    params: per-aspect weights (PyTorch Linear layout already transposed):
        w1 (A,H,512)  b1 (A,512)
        w2 (A,512,256) b2 (A,256)
        w3 (A,256,C)   b3 (A,C)
    Returns a stacked (A, B, C) array of log-softmax outputs; out[a] matches
    element `a` of the PyTorch module's list-of-tensors return."""
    B, S, H = last_hidden_state.shape
    w1, b1 = params["w1"], params["b1"]
    w2, b2 = params["w2"], params["b2"]
    w3, b3 = params["w3"], params["b3"]
    A, _, D1 = w1.shape            # D1 = 512
    D2 = w2.shape[-1]              # 256
    C = w3.shape[-1]
    CPAD = max(128, ((C + 127) // 128) * 128)

    # Pack weights: concat layer-1 on the output axis (lane-dense N = A*512),
    # pad layer-3 class dim to a full lane width.
    w1cat = jnp.transpose(w1, (1, 0, 2)).reshape(H, A * D1)     # (H, A*512)
    b1cat = b1.reshape(1, A * D1)                               # (1, A*512)
    b2r = b2[:, None, :]                                        # (A, 1, 256)
    w3pad = jnp.pad(w3, ((0, 0), (0, 0), (0, CPAD - C)))        # (A, 256, CPAD)
    b3pad = jnp.pad(b3, ((0, 0), (0, CPAD - C)))[:, None, :]    # (A, 1, CPAD)

    x = last_hidden_state
    if compute_dtype is not None:
        x = x.astype(compute_dtype)
        w1cat = w1cat.astype(compute_dtype)
        w2 = w2.astype(compute_dtype)
        w3pad = w3pad.astype(compute_dtype)
        # biases stay f32 (added to the f32 accumulator).

    tile_s = S if seq_tile is None else seq_tile
    assert S % tile_s == 0, "seq length must be divisible by seq_tile"
    assert tile_s == S or tile_s % 8 == 0, "seq tile must be sublane-aligned"
    n_seq_tiles = S // tile_s

    kernel = functools.partial(fused_aspect_kernel, seq_len=S, n_classes=C)

    out = pl.pallas_call(
        kernel,
        out_shape=jax.ShapeDtypeStruct((B, A * CPAD), jnp.float32),
        grid=(n_seq_tiles,),
        in_specs=[
            pl.BlockSpec((B, tile_s, H), lambda s: (0, s, 0)),   # x seq tile
            pl.BlockSpec((H, A * D1), lambda s: (0, 0)),         # w1cat
            pl.BlockSpec((1, A * D1), lambda s: (0, 0)),         # b1cat
            pl.BlockSpec((A, D1, D2), lambda s: (0, 0, 0)),      # w2
            pl.BlockSpec((A, 1, D2), lambda s: (0, 0, 0)),       # b2
            pl.BlockSpec((A, D2, CPAD), lambda s: (0, 0, 0)),    # w3 (padded)
            pl.BlockSpec((A, 1, CPAD), lambda s: (0, 0, 0)),     # b3 (padded)
        ],
        out_specs=pl.BlockSpec((B, A * CPAD), lambda s: (0, 0)),
        scratch_shapes=[pltpu.VMEM((B, H), jnp.float32)],        # pooled sum
        compiler_params=pltpu.CompilerParams(
            dimension_semantics=("arbitrary",),                  # seq reduction
            vmem_limit_bytes=64 * 1024 * 1024),
    )(x, w1cat, b1cat, w2, b2r, w3pad, b3pad)

    # (B, A*CPAD) -> (A, B, C), slicing away the zero-padded class columns.
    out = out.reshape(B, A, CPAD)[:, :, :C]
    return jnp.transpose(out, (1, 0, 2))


def init_params(key, hidden_size, num_aspects, num_aspect_classes):
    """Deterministic synthetic parameters (shapes follow the nn.Linear layers,
    already transposed to (in, out))."""
    ks = jax.random.split(key, 6)
    scale = 0.02
    w1 = scale * jax.random.normal(ks[0], (num_aspects, hidden_size, 512), jnp.float32)
    b1 = scale * jax.random.normal(ks[1], (num_aspects, 512), jnp.float32)
    w2 = scale * jax.random.normal(ks[2], (num_aspects, 512, 256), jnp.float32)
    b2 = scale * jax.random.normal(ks[3], (num_aspects, 256), jnp.float32)
    w3 = scale * jax.random.normal(ks[4], (num_aspects, 256, num_aspect_classes), jnp.float32)
    b3 = scale * jax.random.normal(ks[5], (num_aspects, num_aspect_classes), jnp.float32)
    return {"w1": w1, "b1": b1, "w2": w2, "b2": b2, "w3": w3, "b3": b3}


def reference_forward(last_hidden_state, params):
    """Pure-JAX reference of the same math (stacked (A,B,C) output)."""
    pooled = jnp.mean(last_hidden_state.astype(jnp.float32), axis=1)
    A = params["w1"].shape[0]
    outs = []
    for a in range(A):
        h = jnp.maximum(pooled @ params["w1"][a] + params["b1"][a], 0.0)
        h = jnp.maximum(h @ params["w2"][a] + params["b2"][a], 0.0)
        h = jnp.maximum(h @ params["w3"][a] + params["b3"][a], 0.0)
        outs.append(jax.nn.log_softmax(h, axis=1))
    return jnp.stack(outs, axis=0)


if __name__ == "__main__":
    B, S, H = 8, 16, 128            # batch, seq, (synthetic) backbone hidden size
    NUM_ASPECTS = 4
    NUM_ASPECT_CLASSES = 4

    key = jax.random.PRNGKey(0)
    k_x, k_p = jax.random.split(key)
    # Synthetic "last_hidden_state" from the (untranslated) pretrained backbone.
    last_hidden_state = jax.random.normal(k_x, (B, S, H), jnp.float32)
    params = init_params(k_p, H, NUM_ASPECTS, NUM_ASPECT_CLASSES)

    ref = reference_forward(last_hidden_state, params)        # (A, B, C)

    # f32 path (seq tiled: 2 grid steps exercise the running-sum accumulator).
    out_f32 = simple_aspect_forward(last_hidden_state, params, seq_tile=8)
    out_f32 = jax.block_until_ready(out_f32)
    assert out_f32.shape == (NUM_ASPECTS, B, NUM_ASPECT_CLASSES)
    assert jnp.max(jnp.abs(out_f32 - ref)) < 1e-4

    # bf16 compute path (MXU inputs in bf16, f32 accumulation / softmax).
    out_bf16 = simple_aspect_forward(last_hidden_state, params, seq_tile=8,
                                     compute_dtype=jnp.bfloat16)
    out_bf16 = jax.block_until_ready(out_bf16)
    assert out_bf16.shape == (NUM_ASPECTS, B, NUM_ASPECT_CLASSES)
    assert jnp.max(jnp.abs(out_bf16 - ref)) < 5e-2

    print("KERNEL_OK")
</pallas_src>

<mosaic_0001>
module attributes {stable_mosaic.version = 11 : i64} {
  func.func @fused_aspect_kernel(%arg0: i32, %arg1: memref<8x8x128xf32, #tpu.memory_space<vmem>>, %arg2: memref<128x2048xf32, #tpu.memory_space<vmem>>, %arg3: memref<1x2048xf32, #tpu.memory_space<vmem>>, %arg4: memref<4x512x256xf32, #tpu.memory_space<vmem>>, %arg5: memref<4x1x256xf32, #tpu.memory_space<vmem>>, %arg6: memref<4x256x128xf32, #tpu.memory_space<vmem>>, %arg7: memref<4x1x128xf32, #tpu.memory_space<vmem>>, %arg8: memref<8x512xf32, #tpu.memory_space<vmem>>, %arg9: memref<8x128xf32, #tpu.memory_space<vmem>>) attributes {dimension_semantics = [#tpu.dimension_semantics<arbitrary>], iteration_bounds = array<i64: 2>, scalar_prefetch = 0 : i64, scratch_operands = 1 : i64, tpu.core_type = #tpu.core_type<tc>, window_params = [{transform_indices = @transform_0, window_bounds = array<i64: 8, 8, 128>}, {pipeline_mode = #tpu.pipeline_mode<synchronous>, transform_indices = @transform_1, window_bounds = array<i64: 128, 2048>}, {pipeline_mode = #tpu.pipeline_mode<synchronous>, transform_indices = @transform_2, window_bounds = array<i64: 1, 2048>}, {pipeline_mode = #tpu.pipeline_mode<synchronous>, transform_indices = @transform_3, window_bounds = array<i64: 4, 512, 256>}, {pipeline_mode = #tpu.pipeline_mode<synchronous>, transform_indices = @transform_4, window_bounds = array<i64: 4, 1, 256>}, {pipeline_mode = #tpu.pipeline_mode<synchronous>, transform_indices = @transform_5, window_bounds = array<i64: 4, 256, 128>}, {pipeline_mode = #tpu.pipeline_mode<synchronous>, transform_indices = @transform_6, window_bounds = array<i64: 4, 1, 128>}, {pipeline_mode = #tpu.pipeline_mode<synchronous>, transform_indices = @transform_7, window_bounds = array<i64: 8, 512>}]} {
    %c0_i32 = arith.constant 0 : i32
    %0 = arith.cmpi eq, %arg0, %c0_i32 : i32
    %1 = arith.extui %0 : i1 to i32
    %c0_i32_0 = arith.constant 0 : i32
    %2 = arith.cmpi ne, %1, %c0_i32_0 : i32
    scf.if %2 {
      %cst_8 = arith.constant 0.000000e+00 : f32
      %11 = vector.broadcast %cst_8 : f32 to vector<8x128xf32>
      %c0_9 = arith.constant 0 : index
      %c0_10 = arith.constant 0 : index
      %12 = vector.load %arg9[%c0_9, %c0_10] : memref<8x128xf32, #tpu.memory_space<vmem>>, vector<8x128xf32>
      tpu.vector_store %arg9[%c0_9, %c0_10], %11 {strides = array<i32>} : memref<8x128xf32, #tpu.memory_space<vmem>>, vector<8x128xf32>,
    } else {
    }
    %c0 = arith.constant 0 : index
    %c0_1 = arith.constant 0 : index
    %3 = vector.load %arg9[%c0, %c0_1] : memref<8x128xf32, #tpu.memory_space<vmem>>, vector<8x128xf32>
    %c0_2 = arith.constant 0 : index
    %c0_3 = arith.constant 0 : index
    %c0_4 = arith.constant 0 : index
    %4 = vector.load %arg1[%c0_2, %c0_3, %c0_4] : memref<8x8x128xf32, #tpu.memory_space<vmem>>, vector<8x8x128xf32>
    %cst = arith.constant dense<0.000000e+00> : vector<8x128xf32>
    %5 = vector.multi_reduction <add>, %4, %cst [1] : vector<8x8x128xf32> to vector<8x128xf32>
    %6 = arith.addf %3, %5 : vector<8x128xf32>
    %c0_5 = arith.constant 0 : index
    %c0_6 = arith.constant 0 : index
    %7 = vector.load %arg9[%c0_5, %c0_6] : memref<8x128xf32, #tpu.memory_space<vmem>>, vector<8x128xf32>
    tpu.vector_store %arg9[%c0_5, %c0_6], %6 {strides = array<i32>} : memref<8x128xf32, #tpu.memory_space<vmem>>, vector<8x128xf32>,
    %c1_i32 = arith.constant 1 : i32
    %8 = arith.cmpi eq, %arg0, %c1_i32 : i32
    %9 = arith.extui %8 : i1 to i32
    %c0_i32_7 = arith.constant 0 : i32
    %10 = arith.cmpi ne, %9, %c0_i32_7 : i32
    scf.if %10 {
      %c0_8 = arith.constant 0 : index
      %c0_9 = arith.constant 0 : index
      %11 = vector.load %arg9[%c0_8, %c0_9] : memref<8x128xf32, #tpu.memory_space<vmem>>, vector<8x128xf32>
      %cst_10 = arith.constant 6.250000e-02 : f32
      %12 = vector.broadcast %cst_10 : f32 to vector<8x128xf32>
      %13 = arith.mulf %11, %12 : vector<8x128xf32>
      %c0_11 = arith.constant 0 : index
      %c0_12 = arith.constant 0 : index
      %14 = vector.load %arg2[%c0_11, %c0_12] : memref<128x2048xf32, #tpu.memory_space<vmem>>, vector<128x2048xf32>
      %cst_13 = arith.constant dense<0.000000e+00> : vector<8x2048xf32>
      %15 = tpu.matmul %13, %14, %cst_13 {dimension_numbers = #tpu.dot_dimension_numbers<[1], [0], [0], [1], [0, 0, 1, 1], [], []>} : vector<8x128xf32>, vector<128x2048xf32>, vector<8x2048xf32> -> vector<8x2048xf32>
      %c0_14 = arith.constant 0 : index
      %c0_15 = arith.constant 0 : index
      %16 = vector.load %arg3[%c0_14, %c0_15] : memref<1x2048xf32, #tpu.memory_space<vmem>>, vector<1x2048xf32>
      %17 = vector.broadcast %16 : vector<1x2048xf32> to vector<8x2048xf32>
      %18 = arith.addf %15, %17 : vector<8x2048xf32>
      %cst_16 = arith.constant 0.000000e+00 : f32
      %19 = vector.broadcast %cst_16 : f32 to vector<8x2048xf32>
      %20 = arith.maximumf %18, %19 : vector<8x2048xf32>
      %21 = tpu.iota {dimensions = array<i32: 1>} : vector<8x128xi32>
      %c4_i32 = arith.constant 4 : i32
      %22 = vector.broadcast %c4_i32 : i32 to vector<8x128xi32>
      %23 = arith.cmpi slt, %21, %22 : vector<8x128xi32>
      %24 = vector.extract_strided_slice %20 {offsets = [0, 0], sizes = [8, 512], strides = [1, 1]} : vector<8x2048xf32> to vector<8x512xf32>
      %c0_17 = arith.constant 0 : index
      %c0_18 = arith.constant 0 : index
      %c0_19 = arith.constant 0 : index
      %25 = vector.load %arg4[%c0_17, %c0_18, %c0_19] : memref<4x512x256xf32, #tpu.memory_space<vmem>>, vector<1x512x256xf32>
      %26 = vector.shape_cast %25 : vector<1x512x256xf32> to vector<512x256xf32>
      %cst_20 = arith.constant dense<0.000000e+00> : vector<8x256xf32>
      %27 = tpu.matmul %24, %26, %cst_20 {dimension_numbers = #tpu.dot_dimension_numbers<[1], [0], [0], [1], [0, 0, 1, 1], [], []>} : vector<8x512xf32>, vector<512x256xf32>, vector<8x256xf32> -> vector<8x256xf32>
      %c0_21 = arith.constant 0 : index
      %c0_22 = arith.constant 0 : index
      %c0_23 = arith.constant 0 : index
      %28 = vector.load %arg5[%c0_21, %c0_22, %c0_23] : memref<4x1x256xf32, #tpu.memory_space<vmem>>, vector<1x1x256xf32>
      %29 = vector.shape_cast %28 : vector<1x1x256xf32> to vector<1x256xf32>
      %30 = vector.broadcast %29 : vector<1x256xf32> to vector<8x256xf32>
      %31 = arith.addf %27, %30 : vector<8x256xf32>
      %cst_24 = arith.constant 0.000000e+00 : f32
      %32 = vector.broadcast %cst_24 : f32 to vector<8x256xf32>
      %33 = arith.maximumf %31, %32 : vector<8x256xf32>
      %c0_25 = arith.constant 0 : index
      %c0_26 = arith.constant 0 : index
      %c0_27 = arith.constant 0 : index
      %34 = vector.load %arg6[%c0_25, %c0_26, %c0_27] : memref<4x256x128xf32, #tpu.memory_space<vmem>>, vector<1x256x128xf32>
      %35 = vector.shape_cast %34 : vector<1x256x128xf32> to vector<256x128xf32>
      %cst_28 = arith.constant dense<0.000000e+00> : vector<8x128xf32>
      %36 = tpu.matmul %33, %35, %cst_28 {dimension_numbers = #tpu.dot_dimension_numbers<[1], [0], [0], [1], [0, 0, 1, 1], [], []>} : vector<8x256xf32>, vector<256x128xf32>, vector<8x128xf32> -> vector<8x128xf32>
      %c0_29 = arith.constant 0 : index
      %c0_30 = arith.constant 0 : index
      %c0_31 = arith.constant 0 : index
      %37 = vector.load %arg7[%c0_29, %c0_30, %c0_31] : memref<4x1x128xf32, #tpu.memory_space<vmem>>, vector<1x1x128xf32>
      %38 = vector.shape_cast %37 : vector<1x1x128xf32> to vector<1x128xf32>
      %39 = vector.broadcast %38 : vector<1x128xf32> to vector<8x128xf32>
      %40 = arith.addf %36, %39 : vector<8x128xf32>
      %cst_32 = arith.constant 0.000000e+00 : f32
      %41 = vector.broadcast %cst_32 : f32 to vector<8x128xf32>
      %42 = arith.maximumf %40, %41 : vector<8x128xf32>
      %cst_33 = arith.constant -1.000000e+30 : f32
      %43 = vector.broadcast %cst_33 : f32 to vector<8x128xf32>
      %44 = arith.select %23, %42, %43 : vector<8x128xi1>, vector<8x128xf32>
      %cst_34 = arith.constant dense<0xFF800000> : vector<8xf32>
      %45 = vector.multi_reduction <maximumf>, %44, %cst_34 [1] : vector<8x128xf32> to vector<8xf32>
      %46 = vector.shape_cast %45 : vector<8xf32> to vector<8x1xf32>
      %47 = vector.broadcast %46 : vector<8x1xf32> to vector<8x128xf32>
      %48 = arith.subf %44, %47 : vector<8x128xf32>
      %49 = math.exp %48 : vector<8x128xf32>
      %cst_35 = arith.constant dense<0.000000e+00> : vector<8xf32>
      %50 = vector.multi_reduction <add>, %49, %cst_35 [1] : vector<8x128xf32> to vector<8xf32>
      %51 = vector.shape_cast %50 : vector<8xf32> to vector<8x1xf32>
      %52 = math.log %51 : vector<8x1xf32>
      %53 = vector.broadcast %52 : vector<8x1xf32> to vector<8x128xf32>
      %54 = arith.subf %48, %53 : vector<8x128xf32>
      %c0_36 = arith.constant 0 : index
      %c0_37 = arith.constant 0 : index
      %55 = vector.load %arg8[%c0_36, %c0_37] : memref<8x512xf32, #tpu.memory_space<vmem>>, vector<8x128xf32>
      tpu.vector_store %arg8[%c0_36, %c0_37], %54 {strides = array<i32>} : memref<8x512xf32, #tpu.memory_space<vmem>>, vector<8x128xf32>,
      %56 = vector.extract_strided_slice %20 {offsets = [0, 512], sizes = [8, 512], strides = [1, 1]} : vector<8x2048xf32> to vector<8x512xf32>
      %c1 = arith.constant 1 : index
      %c0_38 = arith.constant 0 : index
      %c0_39 = arith.constant 0 : index
      %57 = vector.load %arg4[%c1, %c0_38, %c0_39] : memref<4x512x256xf32, #tpu.memory_space<vmem>>, vector<1x512x256xf32>
      %58 = vector.shape_cast %57 : vector<1x512x256xf32> to vector<512x256xf32>
      %cst_40 = arith.constant dense<0.000000e+00> : vector<8x256xf32>
      %59 = tpu.matmul %56, %58, %cst_40 {dimension_numbers = #tpu.dot_dimension_numbers<[1], [0], [0], [1], [0, 0, 1, 1], [], []>} : vector<8x512xf32>, vector<512x256xf32>, vector<8x256xf32> -> vector<8x256xf32>
      %c1_41 = arith.constant 1 : index
      %c0_42 = arith.constant 0 : index
      %c0_43 = arith.constant 0 : index
      %60 = vector.load %arg5[%c1_41, %c0_42, %c0_43] : memref<4x1x256xf32, #tpu.memory_space<vmem>>, vector<1x1x256xf32>
      %61 = vector.shape_cast %60 : vector<1x1x256xf32> to vector<1x256xf32>
      %62 = vector.broadcast %61 : vector<1x256xf32> to vector<8x256xf32>
      %63 = arith.addf %59, %62 : vector<8x256xf32>
      %cst_44 = arith.constant 0.000000e+00 : f32
      %64 = vector.broadcast %cst_44 : f32 to vector<8x256xf32>
      %65 = arith.maximumf %63, %64 : vector<8x256xf32>
      %c1_45 = arith.constant 1 : index
      %c0_46 = arith.constant 0 : index
      %c0_47 = arith.constant 0 : index
      %66 = vector.load %arg6[%c1_45, %c0_46, %c0_47] : memref<4x256x128xf32, #tpu.memory_space<vmem>>, vector<1x256x128xf32>
      %67 = vector.shape_cast %66 : vector<1x256x128xf32> to vector<256x128xf32>
      %cst_48 = arith.constant dense<0.000000e+00> : vector<8x128xf32>
      %68 = tpu.matmul %65, %67, %cst_48 {dimension_numbers = #tpu.dot_dimension_numbers<[1], [0], [0], [1], [0, 0, 1, 1], [], []>} : vector<8x256xf32>, vector<256x128xf32>, vector<8x128xf32> -> vector<8x128xf32>
      %c1_49 = arith.constant 1 : index
      %c0_50 = arith.constant 0 : index
      %c0_51 = arith.constant 0 : index
      %69 = vector.load %arg7[%c1_49, %c0_50, %c0_51] : memref<4x1x128xf32, #tpu.memory_space<vmem>>, vector<1x1x128xf32>
      %70 = vector.shape_cast %69 : vector<1x1x128xf32> to vector<1x128xf32>
      %71 = vector.broadcast %70 : vector<1x128xf32> to vector<8x128xf32>
      %72 = arith.addf %68, %71 : vector<8x128xf32>
      %cst_52 = arith.constant 0.000000e+00 : f32
      %73 = vector.broadcast %cst_52 : f32 to vector<8x128xf32>
      %74 = arith.maximumf %72, %73 : vector<8x128xf32>
      %cst_53 = arith.constant -1.000000e+30 : f32
      %75 = vector.broadcast %cst_53 : f32 to vector<8x128xf32>
      %76 = arith.select %23, %74, %75 : vector<8x128xi1>, vector<8x128xf32>
      %cst_54 = arith.constant dense<0xFF800000> : vector<8xf32>
      %77 = vector.multi_reduction <maximumf>, %76, %cst_54 [1] : vector<8x128xf32> to vector<8xf32>
      %78 = vector.shape_cast %77 : vector<8xf32> to vector<8x1xf32>
      %79 = vector.broadcast %78 : vector<8x1xf32> to vector<8x128xf32>
      %80 = arith.subf %76, %79 : vector<8x128xf32>
      %81 = math.exp %80 : vector<8x128xf32>
      %cst_55 = arith.constant dense<0.000000e+00> : vector<8xf32>
      %82 = vector.multi_reduction <add>, %81, %cst_55 [1] : vector<8x128xf32> to vector<8xf32>
      %83 = vector.shape_cast %82 : vector<8xf32> to vector<8x1xf32>
      %84 = math.log %83 : vector<8x1xf32>
      %85 = vector.broadcast %84 : vector<8x1xf32> to vector<8x128xf32>
      %86 = arith.subf %80, %85 : vector<8x128xf32>
      %c0_56 = arith.constant 0 : index
      %c128 = arith.constant 128 : index
      %87 = vector.load %arg8[%c0_56, %c128] : memref<8x512xf32, #tpu.memory_space<vmem>>, vector<8x128xf32>
      tpu.vector_store %arg8[%c0_56, %c128], %86 {strides = array<i32>} : memref<8x512xf32, #tpu.memory_space<vmem>>, vector<8x128xf32>,
      %88 = vector.extract_strided_slice %20 {offsets = [0, 1024], sizes = [8, 512], strides = [1, 1]} : vector<8x2048xf32> to vector<8x512xf32>
      %c2 = arith.constant 2 : index
      %c0_57 = arith.constant 0 : index
      %c0_58 = arith.constant 0 : index
      %89 = vector.load %arg4[%c2, %c0_57, %c0_58] : memref<4x512x256xf32, #tpu.memory_space<vmem>>, vector<1x512x256xf32>
      %90 = vector.shape_cast %89 : vector<1x512x256xf32> to vector<512x256xf32>
      %cst_59 = arith.constant dense<0.000000e+00> : vector<8x256xf32>
      %91 = tpu.matmul %88, %90, %cst_59 {dimension_numbers = #tpu.dot_dimension_numbers<[1], [0], [0], [1], [0, 0, 1, 1], [], []>} : vector<8x512xf32>, vector<512x256xf32>, vector<8x256xf32> -> vector<8x256xf32>
      %c2_60 = arith.constant 2 : index
      %c0_61 = arith.constant 0 : index
      %c0_62 = arith.constant 0 : index
      %92 = vector.load %arg5[%c2_60, %c0_61, %c0_62] : memref<4x1x256xf32, #tpu.memory_space<vmem>>, vector<1x1x256xf32>
      %93 = vector.shape_cast %92 : vector<1x1x256xf32> to vector<1x256xf32>
      %94 = vector.broadcast %93 : vector<1x256xf32> to vector<8x256xf32>
      %95 = arith.addf %91, %94 : vector<8x256xf32>
      %cst_63 = arith.constant 0.000000e+00 : f32
      %96 = vector.broadcast %cst_63 : f32 to vector<8x256xf32>
      %97 = arith.maximumf %95, %96 : vector<8x256xf32>
      %c2_64 = arith.constant 2 : index
      %c0_65 = arith.constant 0 : index
      %c0_66 = arith.constant 0 : index
      %98 = vector.load %arg6[%c2_64, %c0_65, %c0_66] : memref<4x256x128xf32, #tpu.memory_space<vmem>>, vector<1x256x128xf32>
      %99 = vector.shape_cast %98 : vector<1x256x128xf32> to vector<256x128xf32>
      %cst_67 = arith.constant dense<0.000000e+00> : vector<8x128xf32>
      %100 = tpu.matmul %97, %99, %cst_67 {dimension_numbers = #tpu.dot_dimension_numbers<[1], [0], [0], [1], [0, 0, 1, 1], [], []>} : vector<8x256xf32>, vector<256x128xf32>, vector<8x128xf32> -> vector<8x128xf32>
      %c2_68 = arith.constant 2 : index
      %c0_69 = arith.constant 0 : index
      %c0_70 = arith.constant 0 : index
      %101 = vector.load %arg7[%c2_68, %c0_69, %c0_70] : memref<4x1x128xf32, #tpu.memory_space<vmem>>, vector<1x1x128xf32>
      %102 = vector.shape_cast %101 : vector<1x1x128xf32> to vector<1x128xf32>
      %103 = vector.broadcast %102 : vector<1x128xf32> to vector<8x128xf32>
      %104 = arith.addf %100, %103 : vector<8x128xf32>
      %cst_71 = arith.constant 0.000000e+00 : f32
      %105 = vector.broadcast %cst_71 : f32 to vector<8x128xf32>
      %106 = arith.maximumf %104, %105 : vector<8x128xf32>
      %cst_72 = arith.constant -1.000000e+30 : f32
      %107 = vector.broadcast %cst_72 : f32 to vector<8x128xf32>
      %108 = arith.select %23, %106, %107 : vector<8x128xi1>, vector<8x128xf32>
      %cst_73 = arith.constant dense<0xFF800000> : vector<8xf32>
      %109 = vector.multi_reduction <maximumf>, %108, %cst_73 [1] : vector<8x128xf32> to vector<8xf32>
      %110 = vector.shape_cast %109 : vector<8xf32> to vector<8x1xf32>
      %111 = vector.broadcast %110 : vector<8x1xf32> to vector<8x128xf32>
      %112 = arith.subf %108, %111 : vector<8x128xf32>
      %113 = math.exp %112 : vector<8x128xf32>
      %cst_74 = arith.constant dense<0.000000e+00> : vector<8xf32>
      %114 = vector.multi_reduction <add>, %113, %cst_74 [1] : vector<8x128xf32> to vector<8xf32>
      %115 = vector.shape_cast %114 : vector<8xf32> to vector<8x1xf32>
      %116 = math.log %115 : vector<8x1xf32>
      %117 = vector.broadcast %116 : vector<8x1xf32> to vector<8x128xf32>
      %118 = arith.subf %112, %117 : vector<8x128xf32>
      %c0_75 = arith.constant 0 : index
      %c256 = arith.constant 256 : index
      %119 = vector.load %arg8[%c0_75, %c256] : memref<8x512xf32, #tpu.memory_space<vmem>>, vector<8x128xf32>
      tpu.vector_store %arg8[%c0_75, %c256], %118 {strides = array<i32>} : memref<8x512xf32, #tpu.memory_space<vmem>>, vector<8x128xf32>,
      %120 = vector.extract_strided_slice %20 {offsets = [0, 1536], sizes = [8, 512], strides = [1, 1]} : vector<8x2048xf32> to vector<8x512xf32>
      %c3 = arith.constant 3 : index
      %c0_76 = arith.constant 0 : index
      %c0_77 = arith.constant 0 : index
      %121 = vector.load %arg4[%c3, %c0_76, %c0_77] : memref<4x512x256xf32, #tpu.memory_space<vmem>>, vector<1x512x256xf32>
      %122 = vector.shape_cast %121 : vector<1x512x256xf32> to vector<512x256xf32>
      %cst_78 = arith.constant dense<0.000000e+00> : vector<8x256xf32>
      %123 = tpu.matmul %120, %122, %cst_78 {dimension_numbers = #tpu.dot_dimension_numbers<[1], [0], [0], [1], [0, 0, 1, 1], [], []>} : vector<8x512xf32>, vector<512x256xf32>, vector<8x256xf32> -> vector<8x256xf32>
      %c3_79 = arith.constant 3 : index
      %c0_80 = arith.constant 0 : index
      %c0_81 = arith.constant 0 : index
      %124 = vector.load %arg5[%c3_79, %c0_80, %c0_81] : memref<4x1x256xf32, #tpu.memory_space<vmem>>, vector<1x1x256xf32>
      %125 = vector.shape_cast %124 : vector<1x1x256xf32> to vector<1x256xf32>
      %126 = vector.broadcast %125 : vector<1x256xf32> to vector<8x256xf32>
      %127 = arith.addf %123, %126 : vector<8x256xf32>
      %cst_82 = arith.constant 0.000000e+00 : f32
      %128 = vector.broadcast %cst_82 : f32 to vector<8x256xf32>
      %129 = arith.maximumf %127, %128 : vector<8x256xf32>
      %c3_83 = arith.constant 3 : index
      %c0_84 = arith.constant 0 : index
      %c0_85 = arith.constant 0 : index
      %130 = vector.load %arg6[%c3_83, %c0_84, %c0_85] : memref<4x256x128xf32, #tpu.memory_space<vmem>>, vector<1x256x128xf32>
      %131 = vector.shape_cast %130 : vector<1x256x128xf32> to vector<256x128xf32>
      %cst_86 = arith.constant dense<0.000000e+00> : vector<8x128xf32>
      %132 = tpu.matmul %129, %131, %cst_86 {dimension_numbers = #tpu.dot_dimension_numbers<[1], [0], [0], [1], [0, 0, 1, 1], [], []>} : vector<8x256xf32>, vector<256x128xf32>, vector<8x128xf32> -> vector<8x128xf32>
      %c3_87 = arith.constant 3 : index
      %c0_88 = arith.constant 0 : index
      %c0_89 = arith.constant 0 : index
      %133 = vector.load %arg7[%c3_87, %c0_88, %c0_89] : memref<4x1x128xf32, #tpu.memory_space<vmem>>, vector<1x1x128xf32>
      %134 = vector.shape_cast %133 : vector<1x1x128xf32> to vector<1x128xf32>
      %135 = vector.broadcast %134 : vector<1x128xf32> to vector<8x128xf32>
      %136 = arith.addf %132, %135 : vector<8x128xf32>
      %cst_90 = arith.constant 0.000000e+00 : f32
      %137 = vector.broadcast %cst_90 : f32 to vector<8x128xf32>
      %138 = arith.maximumf %136, %137 : vector<8x128xf32>
      %cst_91 = arith.constant -1.000000e+30 : f32
      %139 = vector.broadcast %cst_91 : f32 to vector<8x128xf32>
      %140 = arith.select %23, %138, %139 : vector<8x128xi1>, vector<8x128xf32>
      %cst_92 = arith.constant dense<0xFF800000> : vector<8xf32>
      %141 = vector.multi_reduction <maximumf>, %140, %cst_92 [1] : vector<8x128xf32> to vector<8xf32>
      %142 = vector.shape_cast %141 : vector<8xf32> to vector<8x1xf32>
      %143 = vector.broadcast %142 : vector<8x1xf32> to vector<8x128xf32>
      %144 = arith.subf %140, %143 : vector<8x128xf32>
      %145 = math.exp %144 : vector<8x128xf32>
      %cst_93 = arith.constant dense<0.000000e+00> : vector<8xf32>
      %146 = vector.multi_reduction <add>, %145, %cst_93 [1] : vector<8x128xf32> to vector<8xf32>
      %147 = vector.shape_cast %146 : vector<8xf32> to vector<8x1xf32>
      %148 = math.log %147 : vector<8x1xf32>
      %149 = vector.broadcast %148 : vector<8x1xf32> to vector<8x128xf32>
      %150 = arith.subf %144, %149 : vector<8x128xf32>
      %c0_94 = arith.constant 0 : index
      %c384 = arith.constant 384 : index
      %151 = vector.load %arg8[%c0_94, %c384] : memref<8x512xf32, #tpu.memory_space<vmem>>, vector<8x128xf32>
      tpu.vector_store %arg8[%c0_94, %c384], %150 {strides = array<i32>} : memref<8x512xf32, #tpu.memory_space<vmem>>, vector<8x128xf32>,
    } else {
    }
    return
  }
  func.func @transform_0(%arg0: i32) -> (i32, i32, i32) {
    %c0_i32 = arith.constant 0 : i32
    %c0_i32_0 = arith.constant 0 : i32
    %c0_i32_1 = arith.constant 0 : i32
    return %c0_i32, %arg0, %c0_i32_0 : i32, i32, i32
  }
  func.func @transform_1(%arg0: i32) -> (i32, i32) {
    %c0_i32 = arith.constant 0 : i32
    %c0_i32_0 = arith.constant 0 : i32
    %c0_i32_1 = arith.constant 0 : i32
    return %c0_i32, %c0_i32_0 : i32, i32
  }
  func.func @transform_2(%arg0: i32) -> (i32, i32) {
    %c0_i32 = arith.constant 0 : i32
    %c0_i32_0 = arith.constant 0 : i32
    %c0_i32_1 = arith.constant 0 : i32
    return %c0_i32, %c0_i32_0 : i32, i32
  }
  func.func @transform_3(%arg0: i32) -> (i32, i32, i32) {
    %c0_i32 = arith.constant 0 : i32
    %c0_i32_0 = arith.constant 0 : i32
    %c0_i32_1 = arith.constant 0 : i32
    %c0_i32_2 = arith.constant 0 : i32
    return %c0_i32, %c0_i32_0, %c0_i32_1 : i32, i32, i32
  }
  func.func @transform_4(%arg0: i32) -> (i32, i32, i32) {
    %c0_i32 = arith.constant 0 : i32
    %c0_i32_0 = arith.constant 0 : i32
    %c0_i32_1 = arith.constant 0 : i32
    %c0_i32_2 = arith.constant 0 : i32
    return %c0_i32, %c0_i32_0, %c0_i32_1 : i32, i32, i32
  }
  func.func @transform_5(%arg0: i32) -> (i32, i32, i32) {
    %c0_i32 = arith.constant 0 : i32
    %c0_i32_0 = arith.constant 0 : i32
    %c0_i32_1 = arith.constant 0 : i32
    %c0_i32_2 = arith.constant 0 : i32
    return %c0_i32, %c0_i32_0, %c0_i32_1 : i32, i32, i32
  }
  func.func @transform_6(%arg0: i32) -> (i32, i32, i32) {
    %c0_i32 = arith.constant 0 : i32
    %c0_i32_0 = arith.constant 0 : i32
    %c0_i32_1 = arith.constant 0 : i32
    %c0_i32_2 = arith.constant 0 : i32
    return %c0_i32, %c0_i32_0, %c0_i32_1 : i32, i32, i32
  }
  func.func @transform_7(%arg0: i32) -> (i32, i32) {
    %c0_i32 = arith.constant 0 : i32
    %c0_i32_0 = arith.constant 0 : i32
    %c0_i32_1 = arith.constant 0 : i32
    return %c0_i32, %c0_i32_0 : i32, i32
  }
}

</mosaic_0001>

<llo_original>
// kernel: tpu_custom_call.1
$region0: #{tpu_custom_call.1}
  #allocation0 [shape = 'u32[]', space=smem, size = 0x4, offset = 0x4, fixed_abs, tag = 'smem constant byte address 0x4 - core index']
  #allocation1 [shape = 'u32[72,128]{1,0:T(1,128)}', space=vmem, size = 0x9000, scoped, tag = 'internal scratch']
  #allocation2 [shape = 'f32[8,128]{1,0:T(8,128)}', space=vmem, size = 0x1000, scoped, tag = 'scratch operand']
  %s0 = inlined_call_operand.hbm [shape: f32[8,16,128], index: 0, kind: input, shape index: {}]
  %s1 = inlined_call_operand.hbm [shape: f32[128,2048], index: 1, kind: input, shape index: {}]
  %s2 = inlined_call_operand.hbm [shape: f32[1,2048], index: 2, kind: input, shape index: {}]
  %s3 = inlined_call_operand.hbm [shape: f32[4,512,256], index: 3, kind: input, shape index: {}]
  %s4 = inlined_call_operand.hbm [shape: f32[4,1,256], index: 4, kind: input, shape index: {}]
  %s5 = inlined_call_operand.hbm [shape: f32[4,256,128], index: 5, kind: input, shape index: {}]
  %s6 = inlined_call_operand.hbm [shape: f32[4,1,128], index: 6, kind: input, shape index: {}]
  %s7 = inlined_call_operand.hbm [shape: f32[8,512], index: 7, kind: output, shape index: {}]
  %s8 = sld [smem:[#allocation0]]
  $region97: #{tpu_custom_call.1} parent=0
    _
  %s10 = ssub.s32 1, %s8
  %s11 = scalar_select 0, %s10, %s8
  $region1: #{tpu_custom_call.1} parent=0
    #allocation3 [shape = 'u8[65536]{0}', space=vmem, size = 0x10000, scoped, tag = 'input window, operand 0']
    #allocation4 [shape = 's32[2]{0}', space=sflag, size = 0x8, scoped, tag = 'scoped memory for tpu_custom_call.1']
    #allocation5 [shape = 's32[2]{0}', space=sflag, size = 0x8, scoped, tag = 'scoped memory for tpu_custom_call.1']
    #allocation6 [shape = 'u8[1048576]{0}', space=vmem, size = 0x100000, scoped, tag = 'input window, operand 1, single buffered']
    #allocation7 [shape = 's32[1]{0}', space=sflag, size = 0x4, scoped, tag = 'scoped memory for tpu_custom_call.1']
    #allocation8 [shape = 'u8[8192]{0}', space=vmem, size = 0x2000, scoped, tag = 'input window, operand 2, single buffered']
    #allocation9 [shape = 'u8[2097152]{0}', space=vmem, size = 0x200000, scoped, tag = 'input window, operand 3, single buffered']
    #allocation10 [shape = 's32[1]{0}', space=sflag, size = 0x4, scoped, tag = 'scoped memory for tpu_custom_call.1']
    #allocation11 [shape = 'u8[4096]{0}', space=vmem, size = 0x1000, scoped, tag = 'input window, operand 4, single buffered']
    #allocation12 [shape = 'u8[524288]{0}', space=vmem, size = 0x80000, scoped, tag = 'input window, operand 5, single buffered']
    #allocation13 [shape = 's32[1]{0}', space=sflag, size = 0x4, scoped, tag = 'scoped memory for tpu_custom_call.1']
    #allocation14 [shape = 'u8[2048]{0}', space=vmem, size = 0x800, scoped, tag = 'input window, operand 6, single buffered']
    #allocation15 [shape = 'u8[16384]{0}', space=vmem, size = 0x4000, scoped, tag = 'output window, operand 0, single buffered']
    %12 = vsyncpa [#allocation4], 0
    %s13 = scalar_lea.sflag [#allocation4], 1
    %14 = vsyncpa %s13, 0
    %15 = vsyncpa [#allocation7], 0
    %16 = vsyncpa [#allocation10], 0
    %17 = vsyncpa [#allocation13], 0
    %18 = vsyncpa [#allocation5], 0
    loop: start=0, step=1, limit=4
    $region2: #{tpu_custom_call.1} parent=1 // loop_pre_header
      _
    $region3: #{tpu_custom_call.1} parent=1 // loop_header
      %s20 = sphi 0, %s24
      %p21 = scmp.ge.s32.totalorder %s20, 4
      %s30 = sphi 0, %s32
      %s33 = sphi 0, %s30
      %s34 = sphi 0, %s33
      %s50 = sphi 0, %s34
      %s54 = sphi 0, %s54
      %s56 = sphi 0, %s54
      %s57 = sphi 0, %s56
      %s71 = sphi 0, %s57
      %s75 = sphi 0, %s75
      %s77 = sphi 0, %s75
      %s78 = sphi 0, %s77
      %s92 = sphi 0, %s78
      %s96 = sphi 0, %s96
      %s98 = sphi 0, %s96
      %s99 = sphi 0, %s98
      %s113 = sphi 0, %s99
      %s117 = sphi 0, %s117
      %s119 = sphi 0, %s117
      %s120 = sphi 0, %s119
      %s134 = sphi 0, %s120
      %s138 = sphi 0, %s138
      %s140 = sphi 0, %s138
      %s141 = sphi 0, %s140
      %s155 = sphi 0, %s141
      %s159 = sphi 0, %s159
      %s161 = sphi 0, %s159
      %s162 = sphi 0, %s161
      %s176 = sphi 0, %s162
      %s180 = sphi 0, %s180
      %s182 = sphi 0, %s180
      %s183 = sphi 0, %s182
      %s197 = sphi 0, %s183
    $region4: #{tpu_custom_call.1} parent=1 // loop_header_branch
      %23 = sbr.rel (%p21) target = $region8
    $region5: #{tpu_custom_call.1} parent=1 // loop_body
      %s25 = ssub.s32 %s20, 1
      %s26 = ssub.s32 %s20, 2
      %s27 = sadd.s32 %s20, 1
      %s28 = ssub.s32 %s20, %s27
      %p29 = scmp.eq.s32.totalorder %s28, 0
      %s31 = sadd.s32 %s30, 1
      %s32 = scalar_select %p29, %s30, %s31
      %p35 = pneg %p29
      %p36 = scmp.eq.s32.totalorder %s20, 1
      %p37 = por %p35, %p36
      %p38 = scmp.ne.s32.totalorder %s30, %s33
      %p39 = scmp.eq.s32.totalorder %s20, 0
      %p40 = por %p38, %p39
      %p41 = scmp.ne.s32.totalorder %s30, %s33
      %p42 = scmp.eq.s32.totalorder %s25, 1
      %p43 = por %p41, %p42
      %p44 = scmp.ne.s32.totalorder %s33, %s34
      %p45 = scmp.eq.s32.totalorder %s25, 0
      %p46 = por %p44, %p45
      %p47 = scmp.ne.s32.totalorder %s33, %s34
      %p48 = scmp.eq.s32.totalorder %s26, 1
      %p49 = por %p47, %p48
      %p51 = scmp.ne.s32.totalorder %s34, %s50
      %p52 = scmp.eq.s32.totalorder %s26, 0
      %p53 = por %p51, %p52
      %s55 = sadd.s32 %s54, 1
      %p58 = scmp.eq.s32.totalorder %s20, 1
      %p59 = scmp.ne.s32.totalorder %s54, %s56
      %p60 = scmp.eq.s32.totalorder %s20, 0
      %p61 = por %p59, %p60
      %p62 = scmp.ne.s32.totalorder %s54, %s56
      %p63 = scmp.eq.s32.totalorder %s25, 1
      %p64 = por %p62, %p63
      %p65 = scmp.ne.s32.totalorder %s56, %s57
      %p66 = scmp.eq.s32.totalorder %s25, 0
      %p67 = por %p65, %p66
      %p68 = scmp.ne.s32.totalorder %s56, %s57
      %p69 = scmp.eq.s32.totalorder %s26, 1
      %p70 = por %p68, %p69
      %p72 = scmp.ne.s32.totalorder %s57, %s71
      %p73 = scmp.eq.s32.totalorder %s26, 0
      %p74 = por %p72, %p73
      %s76 = sadd.s32 %s75, 1
      %p79 = scmp.eq.s32.totalorder %s20, 1
      %p80 = scmp.ne.s32.totalorder %s75, %s77
      %p81 = scmp.eq.s32.totalorder %s20, 0
      %p82 = por %p80, %p81
      %p83 = scmp.ne.s32.totalorder %s75, %s77
      %p84 = scmp.eq.s32.totalorder %s25, 1
      %p85 = por %p83, %p84
      %p86 = scmp.ne.s32.totalorder %s77, %s78
      %p87 = scmp.eq.s32.totalorder %s25, 0
      %p88 = por %p86, %p87
      %p89 = scmp.ne.s32.totalorder %s77, %s78
      %p90 = scmp.eq.s32.totalorder %s26, 1
      %p91 = por %p89, %p90
      %p93 = scmp.ne.s32.totalorder %s78, %s92
      %p94 = scmp.eq.s32.totalorder %s26, 0
      %p95 = por %p93, %p94
      %s97 = sadd.s32 %s96, 1
      %p100 = scmp.eq.s32.totalorder %s20, 1
      %p101 = scmp.ne.s32.totalorder %s96, %s98
      %p102 = scmp.eq.s32.totalorder %s20, 0
      %p103 = por %p101, %p102
      %p104 = scmp.ne.s32.totalorder %s96, %s98
      %p105 = scmp.eq.s32.totalorder %s25, 1
      %p106 = por %p104, %p105
      %p107 = scmp.ne.s32.totalorder %s98, %s99
      %p108 = scmp.eq.s32.totalorder %s25, 0
      %p109 = por %p107, %p108
      %p110 = scmp.ne.s32.totalorder %s98, %s99
      %p111 = scmp.eq.s32.totalorder %s26, 1
      %p112 = por %p110, %p111
      %p114 = scmp.ne.s32.totalorder %s99, %s113
      %p115 = scmp.eq.s32.totalorder %s26, 0
      %p116 = por %p114, %p115
      %s118 = sadd.s32 %s117, 1
      %p121 = scmp.eq.s32.totalorder %s20, 1
      %p122 = scmp.ne.s32.totalorder %s117, %s119
      %p123 = scmp.eq.s32.totalorder %s20, 0
      %p124 = por %p122, %p123
      %p125 = scmp.ne.s32.totalorder %s117, %s119
      %p126 = scmp.eq.s32.totalorder %s25, 1
      %p127 = por %p125, %p126
      %p128 = scmp.ne.s32.totalorder %s119, %s120
      %p129 = scmp.eq.s32.totalorder %s25, 0
      %p130 = por %p128, %p129
      %p131 = scmp.ne.s32.totalorder %s119, %s120
      %p132 = scmp.eq.s32.totalorder %s26, 1
      %p133 = por %p131, %p132
      %p135 = scmp.ne.s32.totalorder %s120, %s134
      %p136 = scmp.eq.s32.totalorder %s26, 0
      %p137 = por %p135, %p136
      %s139 = sadd.s32 %s138, 1
      %p142 = scmp.eq.s32.totalorder %s20, 1
      %p143 = scmp.ne.s32.totalorder %s138, %s140
      %p144 = scmp.eq.s32.totalorder %s20, 0
      %p145 = por %p143, %p144
      %p146 = scmp.ne.s32.totalorder %s138, %s140
      %p147 = scmp.eq.s32.totalorder %s25, 1
      %p148 = por %p146, %p147
      %p149 = scmp.ne.s32.totalorder %s140, %s141
      %p150 = scmp.eq.s32.totalorder %s25, 0
      %p151 = por %p149, %p150
      %p152 = scmp.ne.s32.totalorder %s140, %s141
      %p153 = scmp.eq.s32.totalorder %s26, 1
      %p154 = por %p152, %p153
      %p156 = scmp.ne.s32.totalorder %s141, %s155
      %p157 = scmp.eq.s32.totalorder %s26, 0
      %p158 = por %p156, %p157
      %s160 = sadd.s32 %s159, 1
      %p163 = scmp.eq.s32.totalorder %s20, 1
      %p164 = scmp.ne.s32.totalorder %s159, %s161
      %p165 = scmp.eq.s32.totalorder %s20, 0
      %p166 = por %p164, %p165
      %p167 = scmp.ne.s32.totalorder %s159, %s161
      %p168 = scmp.eq.s32.totalorder %s25, 1
      %p169 = por %p167, %p168
      %p170 = scmp.ne.s32.totalorder %s161, %s162
      %p171 = scmp.eq.s32.totalorder %s25, 0
      %p172 = por %p170, %p171
      %p173 = scmp.ne.s32.totalorder %s161, %s162
      %p174 = scmp.eq.s32.totalorder %s26, 1
      %p175 = por %p173, %p174
      %p177 = scmp.ne.s32.totalorder %s162, %s176
      %p178 = scmp.eq.s32.totalorder %s26, 0
      %p179 = por %p177, %p178
      %s181 = sadd.s32 %s180, 1
      %p184 = scmp.eq.s32.totalorder %s20, 1
      %p185 = scmp.ne.s32.totalorder %s180, %s182
      %p186 = scmp.eq.s32.totalorder %s20, 0
      %p187 = por %p185, %p186
      %p188 = scmp.ne.s32.totalorder %s180, %s182
      %p189 = scmp.eq.s32.totalorder %s25, 1
      %p190 = por %p188, %p189
      %p191 = scmp.ne.s32.totalorder %s182, %s183
      %p192 = scmp.eq.s32.totalorder %s25, 0
      %p193 = por %p191, %p192
      %p194 = scmp.ne.s32.totalorder %s182, %s183
      %p195 = scmp.eq.s32.totalorder %s26, 1
      %p196 = por %p194, %p195
      %p198 = scmp.ne.s32.totalorder %s183, %s197
      %p199 = scmp.eq.s32.totalorder %s26, 0
      %p200 = por %p198, %p199
      %p201 = scmp.le.s32.totalorder 1, %s20
      %p202 = scmp.lt.s32.totalorder %s20, 3
      %p203 = pnand %p201, %p202
      %p204 = pneg %p203
      // Predicated region
      $region9: #{tpu_custom_call.1} parent=5 // pred_check
        _
      $region10: #{tpu_custom_call.1} parent=5 // pred_check_branch
        %206 = sbr.rel (%p203) target = $region12
      $region11: #{tpu_custom_call.1} parent=5 // pred_region
        %s207 = ssub.s32 %s20, 1
        // Predicated region
        $region13: #{tpu_custom_call.1} parent=11 // pred_check
          %p208 = pneg %p67
        $region14: #{tpu_custom_call.1} parent=11 // pred_check_branch
          %210 = sbr.rel (%p208) target = $region16
        $region15: #{tpu_custom_call.1} parent=11 // pred_region
          %212 = vsyncadd [#allocation7], 0
          %s213 = sshll.u32 %s1, 4
          %s214 = int_to_ptr.hbm [resolvable:$true] %s213
          %s215 = sshll.u32 [#allocation6], 4
          %s216 = int_to_ptr.vmem [resolvable:$true] %s215
          %221 = dma.hbm_to_vmem [thread:$0]  %s214, 32768, %s216, [#allocation7], 2048, 2048, 128
        $region16: #{tpu_custom_call.1} parent=11 // pred_fallthru
          _
        // Predicated region
        $region17: #{tpu_custom_call.1} parent=11 // pred_check
          %p222 = pneg %p88
        $region18: #{tpu_custom_call.1} parent=11 // pred_check_branch
          %224 = sbr.rel (%p222) target = $region20
        $region19: #{tpu_custom_call.1} parent=11 // pred_region
          %226 = vsyncadd [#allocation7], 0
          %s228 = sshll.u32 %s2, 4
          %s229 = int_to_ptr.hbm [resolvable:$true] %s228
          %s230 = sshll.u32 [#allocation8], 4
          %s231 = int_to_ptr.vmem [resolvable:$true] %s230
          %233 = dma.hbm_to_vmem [thread:$0]  %s229, 256, %s231, [#allocation7]
        $region20: #{tpu_custom_call.1} parent=11 // pred_fallthru
          _
        // Predicated region
        $region21: #{tpu_custom_call.1} parent=11 // pred_check
          %p234 = pneg %p109
        $region22: #{tpu_custom_call.1} parent=11 // pred_check_branch
          %236 = sbr.rel (%p234) target = $region24
        $region23: #{tpu_custom_call.1} parent=11 // pred_region
          %238 = vsyncadd [#allocation10], 0
          %s239 = sshll.u32 %s3, 4
          %s240 = int_to_ptr.hbm [resolvable:$true] %s239
          %s241 = sshll.u32 [#allocation9], 4
          %s242 = int_to_ptr.vmem [resolvable:$true] %s241
          %247 = dma.hbm_to_vmem [thread:$0]  %s240, 65536, %s242, [#allocation10], 256, 256, 16
        $region24: #{tpu_custom_call.1} parent=11 // pred_fallthru
          _
        // Predicated region
        $region25: #{tpu_custom_call.1} parent=11 // pred_check
          %p248 = pneg %p130
        $region26: #{tpu_custom_call.1} parent=11 // pred_check_branch
          %250 = sbr.rel (%p248) target = $region28
        $region27: #{tpu_custom_call.1} parent=11 // pred_region
          %252 = vsyncadd [#allocation10], 0
          %s253 = sshll.u32 %s4, 4
          %s254 = int_to_ptr.hbm [resolvable:$true] %s253
          %s255 = sshll.u32 [#allocation11], 4
          %s256 = int_to_ptr.vmem [resolvable:$true] %s255
          %261 = dma.hbm_to_vmem [thread:$0]  %s254, 128, %s256, [#allocation10], 32, 32, 2
        $region28: #{tpu_custom_call.1} parent=11 // pred_fallthru
          _
        // Predicated region
        $region29: #{tpu_custom_call.1} parent=11 // pred_check
          %p262 = pneg %p151
        $region30: #{tpu_custom_call.1} parent=11 // pred_check_branch
          %264 = sbr.rel (%p262) target = $region32
        $region31: #{tpu_custom_call.1} parent=11 // pred_region
          %266 = vsyncadd [#allocation13], 0
          %s267 = sshll.u32 %s5, 4
          %s268 = int_to_ptr.hbm [resolvable:$true] %s267
          %s269 = sshll.u32 [#allocation12], 4
          %s270 = int_to_ptr.vmem [resolvable:$true] %s269
          %275 = dma.hbm_to_vmem [thread:$0]  %s268, 16384, %s270, [#allocation13], 128, 128, 8
        $region32: #{tpu_custom_call.1} parent=11 // pred_fallthru
          _
        // Predicated region
        $region33: #{tpu_custom_call.1} parent=11 // pred_check
          %p276 = pneg %p172
        $region34: #{tpu_custom_call.1} parent=11 // pred_check_branch
          %278 = sbr.rel (%p276) target = $region36
        $region35: #{tpu_custom_call.1} parent=11 // pred_region
          %280 = vsyncadd [#allocation13], 0
          %s281 = sshll.u32 %s6, 4
          %s282 = int_to_ptr.hbm [resolvable:$true] %s281
          %s283 = sshll.u32 [#allocation14], 4
          %s284 = int_to_ptr.vmem [resolvable:$true] %s283
          %289 = dma.hbm_to_vmem [thread:$0]  %s282, 64, %s284, [#allocation13], 16, 16, 1
        $region36: #{tpu_custom_call.1} parent=11 // pred_fallthru
          _
      $region12: #{tpu_custom_call.1} parent=5 // pred_fallthru
        _
      %p290 = scmp.lt.s32.totalorder %s20, 2
      // Predicated region
      $region37: #{tpu_custom_call.1} parent=5 // pred_check
        %p291 = pneg %p290
      $region38: #{tpu_custom_call.1} parent=5 // pred_check_branch
        %293 = sbr.rel (%p291) target = $region40
      $region39: #{tpu_custom_call.1} parent=5 // pred_region
        // Predicated region
        $region41: #{tpu_custom_call.1} parent=39 // pred_check
          %p294 = pneg %p40
        $region42: #{tpu_custom_call.1} parent=39 // pred_check_branch
          %296 = sbr.rel (%p294) target = $region44
        $region43: #{tpu_custom_call.1} parent=39 // pred_region
          %s297 = sand.u32 %s30, 1
          %s298 = scalar_lea.sflag [#allocation4], %s297
          %s299 = sand.u32 %s30, 1
          %s300 = smul.addr %s299, 64
          %s301 = scalar_lea.vmem [#allocation3], %s300
          %303 = vsyncadd %s298, 0
          %s304 = smul.addr %s20, 8
          %s305 = scalar_lea.hbm %s0, %s304
          %s306 = sshll.u32 %s305, 4
          %s307 = int_to_ptr.hbm [resolvable:$true] %s306
          %s308 = sshll.u32 %s301, 4
          %s309 = int_to_ptr.vmem [resolvable:$true] %s308
          %314 = dma.hbm_to_vmem [thread:$0]  %s307, 1024, %s309, %s298, 256, 128, 8
        $region44: #{tpu_custom_call.1} parent=39 // pred_fallthru
          _
      $region40: #{tpu_custom_call.1} parent=5 // pred_fallthru
        _
      %p315 = scmp.le.s32.totalorder 1, %s20
      %p316 = scmp.lt.s32.totalorder %s20, 3
      %p317 = pnand %p315, %p316
      %p318 = pneg %p317
      // Predicated region
      $region45: #{tpu_custom_call.1} parent=5 // pred_check
        _
      $region46: #{tpu_custom_call.1} parent=5 // pred_check_branch
        %320 = sbr.rel (%p317) target = $region48
      $region47: #{tpu_custom_call.1} parent=5 // pred_region
        %s321 = ssub.s32 %s20, 1
        %s322 = sand.u32 %s33, 1
        %s323 = scalar_lea.sflag [#allocation4], %s322
        %s324 = sand.u32 %s33, 1
        %s325 = smul.addr %s324, 64
        %s326 = scalar_lea.vmem [#allocation3], %s325
        // Predicated region
        $region49: #{tpu_custom_call.1} parent=47 // pred_check
          %p327 = pneg %p46
        $region50: #{tpu_custom_call.1} parent=47 // pred_check_branch
          %329 = sbr.rel (%p327) target = $region52
        $region51: #{tpu_custom_call.1} parent=47 // pred_region
          %331 = dma.done %s323, 1024
        $region52: #{tpu_custom_call.1} parent=47 // pred_fallthru
          _
        // Predicated region
        $region53: #{tpu_custom_call.1} parent=47 // pred_check
          %p332 = pneg %p67
        $region54: #{tpu_custom_call.1} parent=47 // pred_check_branch
          %334 = sbr.rel (%p332) target = $region56
        $region55: #{tpu_custom_call.1} parent=47 // pred_region
          %336 = dma.done [#allocation7], 32768
        $region56: #{tpu_custom_call.1} parent=47 // pred_fallthru
          _
        // Predicated region
        $region57: #{tpu_custom_call.1} parent=47 // pred_check
          %p337 = pneg %p88
        $region58: #{tpu_custom_call.1} parent=47 // pred_check_branch
          %339 = sbr.rel (%p337) target = $region60
        $region59: #{tpu_custom_call.1} parent=47 // pred_region
          %341 = dma.done [#allocation7], 256
        $region60: #{tpu_custom_call.1} parent=47 // pred_fallthru
          _
        // Predicated region
        $region61: #{tpu_custom_call.1} parent=47 // pred_check
          %p342 = pneg %p109
        $region62: #{tpu_custom_call.1} parent=47 // pred_check_branch
          %344 = sbr.rel (%p342) target = $region64
        $region63: #{tpu_custom_call.1} parent=47 // pred_region
          %346 = dma.done [#allocation10], 65536
        $region64: #{tpu_custom_call.1} parent=47 // pred_fallthru
          _
        // Predicated region
        $region65: #{tpu_custom_call.1} parent=47 // pred_check
          %p347 = pneg %p130
        $region66: #{tpu_custom_call.1} parent=47 // pred_check_branch
          %349 = sbr.rel (%p347) target = $region68
        $region67: #{tpu_custom_call.1} parent=47 // pred_region
          %351 = dma.done [#allocation10], 128
        $region68: #{tpu_custom_call.1} parent=47 // pred_fallthru
          _
        // Predicated region
        $region69: #{tpu_custom_call.1} parent=47 // pred_check
          %p352 = pneg %p151
        $region70: #{tpu_custom_call.1} parent=47 // pred_check_branch
          %354 = sbr.rel (%p352) target = $region72
        $region71: #{tpu_custom_call.1} parent=47 // pred_region
          %356 = dma.done [#allocation13], 16384
        $region72: #{tpu_custom_call.1} parent=47 // pred_fallthru
          _
        // Predicated region
        $region73: #{tpu_custom_call.1} parent=47 // pred_check
          %p357 = pneg %p172
        $region74: #{tpu_custom_call.1} parent=47 // pred_check_branch
          %359 = sbr.rel (%p357) target = $region76
        $region75: #{tpu_custom_call.1} parent=47 // pred_region
          %361 = dma.done [#allocation13], 64
        $region76: #{tpu_custom_call.1} parent=47 // pred_fallthru
          _
        %s362 = sand.u32 %s33, 1
        %s363 = scalar_lea.sflag [#allocation4], %s362
        %s364 = sand.u32 %s33, 1
        %s365 = smul.addr %s364, 64
        %s366 = scalar_lea.vmem [#allocation3], %s365
        %p367 = pneg %p46
        %p368 = pneg %p43
        %p369 = pneg %p67
        %p370 = pneg %p64
        %p371 = pneg %p88
        %p372 = pneg %p85
        %p373 = pneg %p109
        %p374 = pneg %p106
        %p375 = pneg %p130
        %p376 = pneg %p127
        %p377 = pneg %p151
        %p378 = pneg %p148
        %p379 = pneg %p172
        %p380 = pneg %p169
        %p381 = pneg %p193
        %p382 = pneg %p190
        %p383 = scmp.eq.s32.totalorder %s25, 0
        // Predicated region
        $region77: #{tpu_custom_call.1} parent=47 // pred_check
          %p384 = pneg %p383
        $region78: #{tpu_custom_call.1} parent=47 // pred_check_branch
          %386 = sbr.rel (%p384) target = $region80
        $region79: #{tpu_custom_call.1} parent=47 // pred_region
          %387 = vst [vmem:[#allocation2] sm:$0xff] 0.0
        $region80: #{tpu_custom_call.1} parent=47 // pred_fallthru
          _
        %v388 = vld [vmem:[#allocation2] sm:$0xff]
        %v389 = vld [vmem:[%s326] sm:$0xff]
        %v390 = vld [vmem:[%s326 + $0x8] sm:$0xff]
        %v391 = vld [vmem:[%s326 + $0x10] sm:$0xff]
        %v392 = vld [vmem:[%s326 + $0x18] sm:$0xff]
        %v393 = vld [vmem:[%s326 + $0x20] sm:$0xff]
        %v394 = vld [vmem:[%s326 + $0x28] sm:$0xff]
        %v395 = vld [vmem:[%s326 + $0x30] sm:$0xff]
        %v396 = vld [vmem:[%s326 + $0x38] sm:$0xff]
        %v397 = vrot.slane %v389, 4
        %v398 = vadd.f32 %v389, %v397
        %v399 = vrot.slane %v398, 2
        %v400 = vadd.f32 %v398, %v399
        %v401 = vrot.slane %v400, 1
        %v402 = vadd.f32 %v400, %v401
        %v403 = vrot.slane %v390, 4
        %v404 = vadd.f32 %v390, %v403
        %v405 = vrot.slane %v404, 2
        %v406 = vadd.f32 %v404, %v405
        %v407 = vrot.slane %v406, 1
        %v408 = vadd.f32 %v406, %v407
        %v409 = vrot.slane %v391, 4
        %v410 = vadd.f32 %v391, %v409
        %v411 = vrot.slane %v410, 2
        %v412 = vadd.f32 %v410, %v411
        %v413 = vrot.slane %v412, 1
        %v414 = vadd.f32 %v412, %v413
        %v415 = vrot.slane %v392, 4
        %v416 = vadd.f32 %v392, %v415
        %v417 = vrot.slane %v416, 2
        %v418 = vadd.f32 %v416, %v417
        %v419 = vrot.slane %v418, 1
        %v420 = vadd.f32 %v418, %v419
        %v421 = vrot.slane %v393, 4
        %v422 = vadd.f32 %v393, %v421
        %v423 = vrot.slane %v422, 2
        %v424 = vadd.f32 %v422, %v423
        %v425 = vrot.slane %v424, 1
        %v426 = vadd.f32 %v424, %v425
        %v427 = vrot.slane %v394, 4
        %v428 = vadd.f32 %v394, %v427
        %v429 = vrot.slane %v428, 2
        %v430 = vadd.f32 %v428, %v429
        %v431 = vrot.slane %v430, 1
        %v432 = vadd.f32 %v430, %v431
        %v433 = vrot.slane %v395, 4
        %v434 = vadd.f32 %v395, %v433
        %v435 = vrot.slane %v434, 2
        %v436 = vadd.f32 %v434, %v435
        %v437 = vrot.slane %v436, 1
        %v438 = vadd.f32 %v436, %v437
        %v439 = vrot.slane %v396, 4
        %v440 = vadd.f32 %v396, %v439
        %v441 = vrot.slane %v440, 2
        %v442 = vadd.f32 %v440, %v441
        %v443 = vrot.slane %v442, 1
        %v444 = vadd.f32 %v442, %v443
        %vm453 = vcmask 1041409
        %v454 = vsel %vm453, %v408, %v402
        %vm455 = vcmask 1042434
        %v456 = vsel %vm455, %v414, %v454
        %vm457 = vcmask 1043459
        %v458 = vsel %vm457, %v420, %v456
        %vm459 = vcmask 1044484
        %v460 = vsel %vm459, %v426, %v458
        %vm461 = vcmask 1045509
        %v462 = vsel %vm461, %v432, %v460
        %vm463 = vcmask 1046534
        %v464 = vsel %vm463, %v438, %v462
        %vm465 = vcmask 1047559
        %v466 = vsel %vm465, %v444, %v464
        %v468 = vadd.f32 %v388, %v466
        %469 = vst [vmem:[#allocation2] sm:$0xff] %v468
        %p470 = scmp.eq.s32.totalorder %s25, 1
        // Predicated region
        $region81: #{tpu_custom_call.1} parent=47 // pred_check
          %p471 = pneg %p470
        $region82: #{tpu_custom_call.1} parent=47 // pred_check_branch
          %473 = sbr.rel (%p471) target = $region84
        $region83: #{tpu_custom_call.1} parent=47 // pred_region
          %v474 = vld [vmem:[#allocation2] sm:$0xff]
          %v475 = vmul.f32 %v474, 0.0625
          %v476 = vld [vmem:[#allocation6] sm:$0xff]
          %v477 = vld [vmem:[#allocation6 + $0x8] sm:$0xff]
          %v478 = vld [vmem:[#allocation6 + $0x10] sm:$0xff]
          %v479 = vld [vmem:[#allocation6 + $0x18] sm:$0xff]
          %v480 = vld [vmem:[#allocation6 + $0x20] sm:$0xff]
          %v481 = vld [vmem:[#allocation6 + $0x28] sm:$0xff]
          %v482 = vld [vmem:[#allocation6 + $0x30] sm:$0xff]
          %v483 = vld [vmem:[#allocation6 + $0x38] sm:$0xff]
          %v484 = vld [vmem:[#allocation6 + $0x40] sm:$0xff]
          %v485 = vld [vmem:[#allocation6 + $0x48] sm:$0xff]
          %v486 = vld [vmem:[#allocation6 + $0x50] sm:$0xff]
          %v487 = vld [vmem:[#allocation6 + $0x58] sm:$0xff]
          %v488 = vld [vmem:[#allocation6 + $0x60] sm:$0xff]
          %v489 = vld [vmem:[#allocation6 + $0x68] sm:$0xff]
          %v490 = vld [vmem:[#allocation6 + $0x70] sm:$0xff]
          %v491 = vld [vmem:[#allocation6 + $0x78] sm:$0xff]
          %v492 = vld [vmem:[#allocation6 + $0x80] sm:$0xff]
          %v493 = vld [vmem:[#allocation6 + $0x88] sm:$0xff]
          %v494 = vld [vmem:[#allocation6 + $0x90] sm:$0xff]
          %v495 = vld [vmem:[#allocation6 + $0x98] sm:$0xff]
          %v496 = vld [vmem:[#allocation6 + $0xa0] sm:$0xff]
          %v497 = vld [vmem:[#allocation6 + $0xa8] sm:$0xff]
          %v498 = vld [vmem:[#allocation6 + $0xb0] sm:$0xff]
          %v499 = vld [vmem:[#allocation6 + $0xb8] sm:$0xff]
          %v500 = vld [vmem:[#allocation6 + $0xc0] sm:$0xff]
          %v501 = vld [vmem:[#allocation6 + $0xc8] sm:$0xff]
          %v502 = vld [vmem:[#allocation6 + $0xd0] sm:$0xff]
          %v503 = vld [vmem:[#allocation6 + $0xd8] sm:$0xff]
          %v504 = vld [vmem:[#allocation6 + $0xe0] sm:$0xff]
          %v505 = vld [vmem:[#allocation6 + $0xe8] sm:$0xff]
          %v506 = vld [vmem:[#allocation6 + $0xf0] sm:$0xff]
          %v507 = vld [vmem:[#allocation6 + $0xf8] sm:$0xff]
          %v508 = vld [vmem:[#allocation6 + $0x100] sm:$0xff]
          %v509 = vld [vmem:[#allocation6 + $0x108] sm:$0xff]
          %v510 = vld [vmem:[#allocation6 + $0x110] sm:$0xff]
          %v511 = vld [vmem:[#allocation6 + $0x118] sm:$0xff]
          %v512 = vld [vmem:[#allocation6 + $0x120] sm:$0xff]
          %v513 = vld [vmem:[#allocation6 + $0x128] sm:$0xff]
          %v514 = vld [vmem:[#allocation6 + $0x130] sm:$0xff]
          %v515 = vld [vmem:[#allocation6 + $0x138] sm:$0xff]
          %v516 = vld [vmem:[#allocation6 + $0x140] sm:$0xff]
          %v517 = vld [vmem:[#allocation6 + $0x148] sm:$0xff]
          %v518 = vld [vmem:[#allocation6 + $0x150] sm:$0xff]
          %v519 = vld [vmem:[#allocation6 + $0x158] sm:$0xff]
          %v520 = vld [vmem:[#allocation6 + $0x160] sm:$0xff]
          %v521 = vld [vmem:[#allocation6 + $0x168] sm:$0xff]
          %v522 = vld [vmem:[#allocation6 + $0x170] sm:$0xff]
          %v523 = vld [vmem:[#allocation6 + $0x178] sm:$0xff]
          %v524 = vld [vmem:[#allocation6 + $0x180] sm:$0xff]
          %v525 = vld [vmem:[#allocation6 + $0x188] sm:$0xff]
          %v526 = vld [vmem:[#allocation6 + $0x190] sm:$0xff]
          %v527 = vld [vmem:[#allocation6 + $0x198] sm:$0xff]
          %v528 = vld [vmem:[#allocation6 + $0x1a0] sm:$0xff]
          %v529 = vld [vmem:[#allocation6 + $0x1a8] sm:$0xff]
          %v530 = vld [vmem:[#allocation6 + $0x1b0] sm:$0xff]
          %v531 = vld [vmem:[#allocation6 + $0x1b8] sm:$0xff]
          %v532 = vld [vmem:[#allocation6 + $0x1c0] sm:$0xff]
          %v533 = vld [vmem:[#allocation6 + $0x1c8] sm:$0xff]
          %v534 = vld [vmem:[#allocation6 + $0x1d0] sm:$0xff]
          %v535 = vld [vmem:[#allocation6 + $0x1d8] sm:$0xff]
          %v536 = vld [vmem:[#allocation6 + $0x1e0] sm:$0xff]
          %v537 = vld [vmem:[#allocation6 + $0x1e8] sm:$0xff]
          %v538 = vld [vmem:[#allocation6 + $0x1f0] sm:$0xff]
          %v539 = vld [vmem:[#allocation6 + $0x1f8] sm:$0xff]
          %v540 = vld [vmem:[#allocation6 + $0x200] sm:$0xff]
          %v541 = vld [vmem:[#allocation6 + $0x208] sm:$0xff]
          %v542 = vld [vmem:[#allocation6 + $0x210] sm:$0xff]
          %v543 = vld [vmem:[#allocation6 + $0x218] sm:$0xff]
          %v544 = vld [vmem:[#allocation6 + $0x220] sm:$0xff]
          %v545 = vld [vmem:[#allocation6 + $0x228] sm:$0xff]
          %v546 = vld [vmem:[#allocation6 + $0x230] sm:$0xff]
          %v547 = vld [vmem:[#allocation6 + $0x238] sm:$0xff]
          %v548 = vld [vmem:[#allocation6 + $0x240] sm:$0xff]
          %v549 = vld [vmem:[#allocation6 + $0x248] sm:$0xff]
          %v550 = vld [vmem:[#allocation6 + $0x250] sm:$0xff]
          %v551 = vld [vmem:[#allocation6 + $0x258] sm:$0xff]
          %v552 = vld [vmem:[#allocation6 + $0x260] sm:$0xff]
          %v553 = vld [vmem:[#allocation6 + $0x268] sm:$0xff]
          %v554 = vld [vmem:[#allocation6 + $0x270] sm:$0xff]
          %v555 = vld [vmem:[#allocation6 + $0x278] sm:$0xff]
          %v556 = vld [vmem:[#allocation6 + $0x280] sm:$0xff]
          %v557 = vld [vmem:[#allocation6 + $0x288] sm:$0xff]
          %v558 = vld [vmem:[#allocation6 + $0x290] sm:$0xff]
          %v559 = vld [vmem:[#allocation6 + $0x298] sm:$0xff]
          %v560 = vld [vmem:[#allocation6 + $0x2a0] sm:$0xff]
          %v561 = vld [vmem:[#allocation6 + $0x2a8] sm:$0xff]
          %v562 = vld [vmem:[#allocation6 + $0x2b0] sm:$0xff]
          %v563 = vld [vmem:[#allocation6 + $0x2b8] sm:$0xff]
          %v564 = vld [vmem:[#allocation6 + $0x2c0] sm:$0xff]
          %v565 = vld [vmem:[#allocation6 + $0x2c8] sm:$0xff]
          %v566 = vld [vmem:[#allocation6 + $0x2d0] sm:$0xff]
          %v567 = vld [vmem:[#allocation6 + $0x2d8] sm:$0xff]
          %v568 = vld [vmem:[#allocation6 + $0x2e0] sm:$0xff]
          %v569 = vld [vmem:[#allocation6 + $0x2e8] sm:$0xff]
          %v570 = vld [vmem:[#allocation6 + $0x2f0] sm:$0xff]
          %v571 = vld [vmem:[#allocation6 + $0x2f8] sm:$0xff]
          %v572 = vld [vmem:[#allocation6 + $0x300] sm:$0xff]
          %v573 = vld [vmem:[#allocation6 + $0x308] sm:$0xff]
          %v574 = vld [vmem:[#allocation6 + $0x310] sm:$0xff]
          %v575 = vld [vmem:[#allocation6 + $0x318] sm:$0xff]
          %v576 = vld [vmem:[#allocation6 + $0x320] sm:$0xff]
          %v577 = vld [vmem:[#allocation6 + $0x328] sm:$0xff]
          %v578 = vld [vmem:[#allocation6 + $0x330] sm:$0xff]
          %v579 = vld [vmem:[#allocation6 + $0x338] sm:$0xff]
          %v580 = vld [vmem:[#allocation6 + $0x340] sm:$0xff]
          %v581 = vld [vmem:[#allocation6 + $0x348] sm:$0xff]
          %v582 = vld [vmem:[#allocation6 + $0x350] sm:$0xff]
          %v583 = vld [vmem:[#allocation6 + $0x358] sm:$0xff]
          %v584 = vld [vmem:[#allocation6 + $0x360] sm:$0xff]
          %v585 = vld [vmem:[#allocation6 + $0x368] sm:$0xff]
          %v586 = vld [vmem:[#allocation6 + $0x370] sm:$0xff]
          %v587 = vld [vmem:[#allocation6 + $0x378] sm:$0xff]
          %v588 = vld [vmem:[#allocation6 + $0x380] sm:$0xff]
          %v589 = vld [vmem:[#allocation6 + $0x388] sm:$0xff]
          %v590 = vld [vmem:[#allocation6 + $0x390] sm:$0xff]
          %v591 = vld [vmem:[#allocation6 + $0x398] sm:$0xff]
          %v592 = vld [vmem:[#allocation6 + $0x3a0] sm:$0xff]
          %v593 = vld [vmem:[#allocation6 + $0x3a8] sm:$0xff]
          %v594 = vld [vmem:[#allocation6 + $0x3b0] sm:$0xff]
          %v595 = vld [vmem:[#allocation6 + $0x3b8] sm:$0xff]
          %v596 = vld [vmem:[#allocation6 + $0x3c0] sm:$0xff]
          %v597 = vld [vmem:[#allocation6 + $0x3c8] sm:$0xff]
          %v598 = vld [vmem:[#allocation6 + $0x3d0] sm:$0xff]
          %v599 = vld [vmem:[#allocation6 + $0x3d8] sm:$0xff]
          %v600 = vld [vmem:[#allocation6 + $0x3e0] sm:$0xff]
          %v601 = vld [vmem:[#allocation6 + $0x3e8] sm:$0xff]
          %v602 = vld [vmem:[#allocation6 + $0x3f0] sm:$0xff]
          %v603 = vld [vmem:[#allocation6 + $0x3f8] sm:$0xff]
          %v604 = vld [vmem:[#allocation6 + $0x400] sm:$0xff]
          %v605 = vld [vmem:[#allocation6 + $0x408] sm:$0xff]
          %v606 = vld [vmem:[#allocation6 + $0x410] sm:$0xff]
          %v607 = vld [vmem:[#allocation6 + $0x418] sm:$0xff]
          %v608 = vld [vmem:[#allocation6 + $0x420] sm:$0xff]
          %v609 = vld [vmem:[#allocation6 + $0x428] sm:$0xff]
          %v610 = vld [vmem:[#allocation6 + $0x430] sm:$0xff]
          %v611 = vld [vmem:[#allocation6 + $0x438] sm:$0xff]
          %v612 = vld [vmem:[#allocation6 + $0x440] sm:$0xff]
          %v613 = vld [vmem:[#allocation6 + $0x448] sm:$0xff]
          %v614 = vld [vmem:[#allocation6 + $0x450] sm:$0xff]
          %v615 = vld [vmem:[#allocation6 + $0x458] sm:$0xff]
          %v616 = vld [vmem:[#allocation6 + $0x460] sm:$0xff]
          %v617 = vld [vmem:[#allocation6 + $0x468] sm:$0xff]
          %v618 = vld [vmem:[#allocation6 + $0x470] sm:$0xff]
          %v619 = vld [vmem:[#allocation6 + $0x478] sm:$0xff]
          %v620 = vld [vmem:[#allocation6 + $0x480] sm:$0xff]
          %v621 = vld [vmem:[#allocation6 + $0x488] sm:$0xff]
          %v622 = vld [vmem:[#allocation6 + $0x490] sm:$0xff]
          %v623 = vld [vmem:[#allocation6 + $0x498] sm:$0xff]
          %v624 = vld [vmem:[#allocation6 + $0x4a0] sm:$0xff]
          %v625 = vld [vmem:[#allocation6 + $0x4a8] sm:$0xff]
          %v626 = vld [vmem:[#allocation6 + $0x4b0] sm:$0xff]
          %v627 = vld [vmem:[#allocation6 + $0x4b8] sm:$0xff]
          %v628 = vld [vmem:[#allocation6 + $0x4c0] sm:$0xff]
          %v629 = vld [vmem:[#allocation6 + $0x4c8] sm:$0xff]
          %v630 = vld [vmem:[#allocation6 + $0x4d0] sm:$0xff]
          %v631 = vld [vmem:[#allocation6 + $0x4d8] sm:$0xff]
          %v632 = vld [vmem:[#allocation6 + $0x4e0] sm:$0xff]
          %v633 = vld [vmem:[#allocation6 + $0x4e8] sm:$0xff]
          %v634 = vld [vmem:[#allocation6 + $0x4f0] sm:$0xff]
          %v635 = vld [vmem:[#allocation6 + $0x4f8] sm:$0xff]
          %v636 = vld [vmem:[#allocation6 + $0x500] sm:$0xff]
          %v637 = vld [vmem:[#allocation6 + $0x508] sm:$0xff]
          %v638 = vld [vmem:[#allocation6 + $0x510] sm:$0xff]
          %v639 = vld [vmem:[#allocation6 + $0x518] sm:$0xff]
          %v640 = vld [vmem:[#allocation6 + $0x520] sm:$0xff]
          %v641 = vld [vmem:[#allocation6 + $0x528] sm:$0xff]
          %v642 = vld [vmem:[#allocation6 + $0x530] sm:$0xff]
          %v643 = vld [vmem:[#allocation6 + $0x538] sm:$0xff]
          %v644 = vld [vmem:[#allocation6 + $0x540] sm:$0xff]
          %v645 = vld [vmem:[#allocation6 + $0x548] sm:$0xff]
          %v646 = vld [vmem:[#allocation6 + $0x550] sm:$0xff]
          %v647 = vld [vmem:[#allocation6 + $0x558] sm:$0xff]
          %v648 = vld [vmem:[#allocation6 + $0x560] sm:$0xff]
          %v649 = vld [vmem:[#allocation6 + $0x568] sm:$0xff]
          %v650 = vld [vmem:[#allocation6 + $0x570] sm:$0xff]
          %v651 = vld [vmem:[#allocation6 + $0x578] sm:$0xff]
          %v652 = vld [vmem:[#allocation6 + $0x580] sm:$0xff]
          %v653 = vld [vmem:[#allocation6 + $0x588] sm:$0xff]
          %v654 = vld [vmem:[#allocation6 + $0x590] sm:$0xff]
          %v655 = vld [vmem:[#allocation6 + $0x598] sm:$0xff]
          %v656 = vld [vmem:[#allocation6 + $0x5a0] sm:$0xff]
          %v657 = vld [vmem:[#allocation6 + $0x5a8] sm:$0xff]
          %v658 = vld [vmem:[#allocation6 + $0x5b0] sm:$0xff]
          %v659 = vld [vmem:[#allocation6 + $0x5b8] sm:$0xff]
          %v660 = vld [vmem:[#allocation6 + $0x5c0] sm:$0xff]
          %v661 = vld [vmem:[#allocation6 + $0x5c8] sm:$0xff]
          %v662 = vld [vmem:[#allocation6 + $0x5d0] sm:$0xff]
          %v663 = vld [vmem:[#allocation6 + $0x5d8] sm:$0xff]
          %v664 = vld [vmem:[#allocation6 + $0x5e0] sm:$0xff]
          %v665 = vld [vmem:[#allocation6 + $0x5e8] sm:$0xff]
          %v666 = vld [vmem:[#allocation6 + $0x5f0] sm:$0xff]
          %v667 = vld [vmem:[#allocation6 + $0x5f8] sm:$0xff]
          %v668 = vld [vmem:[#allocation6 + $0x600] sm:$0xff]
          %v669 = vld [vmem:[#allocation6 + $0x608] sm:$0xff]
          %v670 = vld [vmem:[#allocation6 + $0x610] sm:$0xff]
          %v671 = vld [vmem:[#allocation6 + $0x618] sm:$0xff]
          %v672 = vld [vmem:[#allocation6 + $0x620] sm:$0xff]
          %v673 = vld [vmem:[#allocation6 + $0x628] sm:$0xff]
          %v674 = vld [vmem:[#allocation6 + $0x630] sm:$0xff]
          %v675 = vld [vmem:[#allocation6 + $0x638] sm:$0xff]
          %v676 = vld [vmem:[#allocation6 + $0x640] sm:$0xff]
          %v677 = vld [vmem:[#allocation6 + $0x648] sm:$0xff]
          %v678 = vld [vmem:[#allocation6 + $0x650] sm:$0xff]
          %v679 = vld [vmem:[#allocation6 + $0x658] sm:$0xff]
          %v680 = vld [vmem:[#allocation6 + $0x660] sm:$0xff]
          %v681 = vld [vmem:[#allocation6 + $0x668] sm:$0xff]
          %v682 = vld [vmem:[#allocation6 + $0x670] sm:$0xff]
          %v683 = vld [vmem:[#allocation6 + $0x678] sm:$0xff]
          %v684 = vld [vmem:[#allocation6 + $0x680] sm:$0xff]
          %v685 = vld [vmem:[#allocation6 + $0x688] sm:$0xff]
          %v686 = vld [vmem:[#allocation6 + $0x690] sm:$0xff]
          %v687 = vld [vmem:[#allocation6 + $0x698] sm:$0xff]
          %v688 = vld [vmem:[#allocation6 + $0x6a0] sm:$0xff]
          %v689 = vld [vmem:[#allocation6 + $0x6a8] sm:$0xff]
          %v690 = vld [vmem:[#allocation6 + $0x6b0] sm:$0xff]
          %v691 = vld [vmem:[#allocation6 + $0x6b8] sm:$0xff]
          %v692 = vld [vmem:[#allocation6 + $0x6c0] sm:$0xff]
          %v693 = vld [vmem:[#allocation6 + $0x6c8] sm:$0xff]
          %v694 = vld [vmem:[#allocation6 + $0x6d0] sm:$0xff]
          %v695 = vld [vmem:[#allocation6 + $0x6d8] sm:$0xff]
          %v696 = vld [vmem:[#allocation6 + $0x6e0] sm:$0xff]
          %v697 = vld [vmem:[#allocation6 + $0x6e8] sm:$0xff]
          %v698 = vld [vmem:[#allocation6 + $0x6f0] sm:$0xff]
          %v699 = vld [vmem:[#allocation6 + $0x6f8] sm:$0xff]
          %v700 = vld [vmem:[#allocation6 + $0x700] sm:$0xff]
          %v701 = vld [vmem:[#allocation6 + $0x708] sm:$0xff]
          %v702 = vld [vmem:[#allocation6 + $0x710] sm:$0xff]
          %v703 = vld [vmem:[#allocation6 + $0x718] sm:$0xff]
          %v704 = vld [vmem:[#allocation6 + $0x720] sm:$0xff]
          %v705 = vld [vmem:[#allocation6 + $0x728] sm:$0xff]
          %v706 = vld [vmem:[#allocation6 + $0x730] sm:$0xff]
          %v707 = vld [vmem:[#allocation6 + $0x738] sm:$0xff]
          %v708 = vld [vmem:[#allocation6 + $0x740] sm:$0xff]
          %v709 = vld [vmem:[#allocation6 + $0x748] sm:$0xff]
          %v710 = vld [vmem:[#allocation6 + $0x750] sm:$0xff]
          %v711 = vld [vmem:[#allocation6 + $0x758] sm:$0xff]
          %v712 = vld [vmem:[#allocation6 + $0x760] sm:$0xff]
          %v713 = vld [vmem:[#allocation6 + $0x768] sm:$0xff]
          %v714 = vld [vmem:[#allocation6 + $0x770] sm:$0xff]
          %v715 = vld [vmem:[#allocation6 + $0x778] sm:$0xff]
          %v716 = vld [vmem:[#allocation6 + $0x780] sm:$0xff]
          %v717 = vld [vmem:[#allocation6 + $0x788] sm:$0xff]
          %v718 = vld [vmem:[#allocation6 + $0x790] sm:$0xff]
          %v719 = vld [vmem:[#allocation6 + $0x798] sm:$0xff]
          %v720 = vld [vmem:[#allocation6 + $0x7a0] sm:$0xff]
          %v721 = vld [vmem:[#allocation6 + $0x7a8] sm:$0xff]
          %v722 = vld [vmem:[#allocation6 + $0x7b0] sm:$0xff]
          %v723 = vld [vmem:[#allocation6 + $0x7b8] sm:$0xff]
          %v724 = vld [vmem:[#allocation6 + $0x7c0] sm:$0xff]
          %v725 = vld [vmem:[#allocation6 + $0x7c8] sm:$0xff]
          %v726 = vld [vmem:[#allocation6 + $0x7d0] sm:$0xff]
          %v727 = vld [vmem:[#allocation6 + $0x7d8] sm:$0xff]
          %v728 = vld [vmem:[#allocation6 + $0x7e0] sm:$0xff]
          %v729 = vld [vmem:[#allocation6 + $0x7e8] sm:$0xff]
          %v730 = vld [vmem:[#allocation6 + $0x7f0] sm:$0xff]
          %v731 = vld [vmem:[#allocation6 + $0x7f8] sm:$0xff]
          %v732 = vld [vmem:[#allocation8] sm:$0xff]
          %v733 = vld [vmem:[#allocation8 + $0x8] sm:$0xff]
          %v736 = vperm.slane %v732, 0
          %v737 = vperm.slane %v732, 1
          %v738 = vperm.slane %v732, 2
          %v739 = vperm.slane %v732, 3
          %v740 = vperm.slane %v732, 4
          %v741 = vperm.slane %v732, 5
          %v742 = vperm.slane %v732, 6
          %v743 = vperm.slane %v732, 7
          %v744 = vperm.slane %v733, 0
          %v745 = vperm.slane %v733, 1
          %v746 = vperm.slane %v733, 2
          %v747 = vperm.slane %v733, 3
          %v748 = vperm.slane %v733, 4
          %v749 = vperm.slane %v733, 5
          %v750 = vperm.slane %v733, 6
          %v751 = vperm.slane %v733, 7
          %768 = vmatpush.msra.mxu0 %v716
          %769 = vmatpush.msra.mxu0 %v700
          %770 = vmatpush.msra.mxu0 %v684
          %771 = vmatpush.msra.mxu0 %v668
          %772 = vmatpush.msra.mxu0 %v652
          %773 = vmatpush.msra.mxu0 %v636
          %774 = vmatpush.msra.mxu0 %v620
          %775 = vmatpush.msra.mxu0 %v604
          %776 = vmatpush.msra.mxu0 %v588
          %777 = vmatpush.msra.mxu0 %v572
          %778 = vmatpush.msra.mxu0 %v556
          %779 = vmatpush.msra.mxu0 %v540
          %780 = vmatpush.msra.mxu0 %v524
          %781 = vmatpush.msra.mxu0 %v508
          %782 = vmatpush.msra.mxu0 %v492
          %783 = vmatpush.msra.mxu0 %v476
          %784 = vmatmul.f32.gmra.mxu0 %v475
          %v785 = vpop.f32.mrf.mxu0
          %v786 = vadd.f32 %v736, %v785
          %787 = vdwg.mxu0
          %788 = vmatpush.msra.mxu0 %v717
          %789 = vmatpush.msra.mxu0 %v701
          %790 = vmatpush.msra.mxu0 %v685
          %791 = vmatpush.msra.mxu0 %v669
          %792 = vmatpush.msra.mxu0 %v653
          %793 = vmatpush.msra.mxu0 %v637
          %794 = vmatpush.msra.mxu0 %v621
          %795 = vmatpush.msra.mxu0 %v605
          %796 = vmatpush.msra.mxu0 %v589
          %797 = vmatpush.msra.mxu0 %v573
          %798 = vmatpush.msra.mxu0 %v557
          %799 = vmatpush.msra.mxu0 %v541
          %800 = vmatpush.msra.mxu0 %v525
          %801 = vmatpush.msra.mxu0 %v509
          %802 = vmatpush.msra.mxu0 %v493
          %803 = vmatpush.msra.mxu0 %v477
          %804 = vmatmul.f32.gmra.mxu0 %v475
          %v805 = vpop.f32.mrf.mxu0
          %v806 = vadd.f32 %v737, %v805
          %807 = vdwg.mxu0
          %808 = vmatpush.msra.mxu0 %v718
          %809 = vmatpush.msra.mxu0 %v702
          %810 = vmatpush.msra.mxu0 %v686
          %811 = vmatpush.msra.mxu0 %v670
          %812 = vmatpush.msra.mxu0 %v654
          %813 = vmatpush.msra.mxu0 %v638
          %814 = vmatpush.msra.mxu0 %v622
          %815 = vmatpush.msra.mxu0 %v606
          %816 = vmatpush.msra.mxu0 %v590
          %817 = vmatpush.msra.mxu0 %v574
          %818 = vmatpush.msra.mxu0 %v558
          %819 = vmatpush.msra.mxu0 %v542
          %820 = vmatpush.msra.mxu0 %v526
          %821 = vmatpush.msra.mxu0 %v510
          %822 = vmatpush.msra.mxu0 %v494
          %823 = vmatpush.msra.mxu0 %v478
          %824 = vmatmul.f32.gmra.mxu0 %v475
          %v825 = vpop.f32.mrf.mxu0
          %v826 = vadd.f32 %v738, %v825
          %827 = vdwg.mxu0
          %828 = vmatpush.msra.mxu0 %v719
          %829 = vmatpush.msra.mxu0 %v703
          %830 = vmatpush.msra.mxu0 %v687
          %831 = vmatpush.msra.mxu0 %v671
          %832 = vmatpush.msra.mxu0 %v655
          %833 = vmatpush.msra.mxu0 %v639
          %834 = vmatpush.msra.mxu0 %v623
          %835 = vmatpush.msra.mxu0 %v607
          %836 = vmatpush.msra.mxu0 %v591
          %837 = vmatpush.msra.mxu0 %v575
          %838 = vmatpush.msra.mxu0 %v559
          %839 = vmatpush.msra.mxu0 %v543
          %840 = vmatpush.msra.mxu0 %v527
          %841 = vmatpush.msra.mxu0 %v511
          %842 = vmatpush.msra.mxu0 %v495
          %843 = vmatpush.msra.mxu0 %v479
          %844 = vmatmul.f32.gmra.mxu0 %v475
          %v845 = vpop.f32.mrf.mxu0
          %v846 = vadd.f32 %v739, %v845
          %847 = vdwg.mxu0
          %848 = vmatpush.msra.mxu0 %v720
          %849 = vmatpush.msra.mxu0 %v704
          %850 = vmatpush.msra.mxu0 %v688
          %851 = vmatpush.msra.mxu0 %v672
          %852 = vmatpush.msra.mxu0 %v656
          %853 = vmatpush.msra.mxu0 %v640
          %854 = vmatpush.msra.mxu0 %v624
          %855 = vmatpush.msra.mxu0 %v608
          %856 = vmatpush.msra.mxu0 %v592
          %857 = vmatpush.msra.mxu0 %v576
          %858 = vmatpush.msra.mxu0 %v560
          %859 = vmatpush.msra.mxu0 %v544
          %860 = vmatpush.msra.mxu0 %v528
          %861 = vmatpush.msra.mxu0 %v512
          %862 = vmatpush.msra.mxu0 %v496
          %863 = vmatpush.msra.mxu0 %v480
          %864 = vmatmul.f32.gmra.mxu0 %v475
          %v865 = vpop.f32.mrf.mxu0
          %v866 = vadd.f32 %v740, %v865
          %867 = vdwg.mxu0
          %868 = vmatpush.msra.mxu0 %v721
          %869 = vmatpush.msra.mxu0 %v705
          %870 = vmatpush.msra.mxu0 %v689
          %871 = vmatpush.msra.mxu0 %v673
          %872 = vmatpush.msra.mxu0 %v657
          %873 = vmatpush.msra.mxu0 %v641
          %874 = vmatpush.msra.mxu0 %v625
          %875 = vmatpush.msra.mxu0 %v609
          %876 = vmatpush.msra.mxu0 %v593
          %877 = vmatpush.msra.mxu0 %v577
          %878 = vmatpush.msra.mxu0 %v561
          %879 = vmatpush.msra.mxu0 %v545
          %880 = vmatpush.msra.mxu0 %v529
          %881 = vmatpush.msra.mxu0 %v513
          %882 = vmatpush.msra.mxu0 %v497
          %883 = vmatpush.msra.mxu0 %v481
          %884 = vmatmul.f32.gmra.mxu0 %v475
          %v885 = vpop.f32.mrf.mxu0
          %v886 = vadd.f32 %v741, %v885
          %887 = vdwg.mxu0
          %888 = vmatpush.msra.mxu0 %v722
          %889 = vmatpush.msra.mxu0 %v706
          %890 = vmatpush.msra.mxu0 %v690
          %891 = vmatpush.msra.mxu0 %v674
          %892 = vmatpush.msra.mxu0 %v658
          %893 = vmatpush.msra.mxu0 %v642
          %894 = vmatpush.msra.mxu0 %v626
          %895 = vmatpush.msra.mxu0 %v610
          %896 = vmatpush.msra.mxu0 %v594
          %897 = vmatpush.msra.mxu0 %v578
          %898 = vmatpush.msra.mxu0 %v562
          %899 = vmatpush.msra.mxu0 %v546
          %900 = vmatpush.msra.mxu0 %v530
          %901 = vmatpush.msra.mxu0 %v514
          %902 = vmatpush.msra.mxu0 %v498
          %903 = vmatpush.msra.mxu0 %v482
          %904 = vmatmul.f32.gmra.mxu0 %v475
          %v905 = vpop.f32.mrf.mxu0
          %v906 = vadd.f32 %v742, %v905
          %907 = vdwg.mxu0
          %908 = vmatpush.msra.mxu0 %v723
          %909 = vmatpush.msra.mxu0 %v707
          %910 = vmatpush.msra.mxu0 %v691
          %911 = vmatpush.msra.mxu0 %v675
          %912 = vmatpush.msra.mxu0 %v659
          %913 = vmatpush.msra.mxu0 %v643
          %914 = vmatpush.msra.mxu0 %v627
          %915 = vmatpush.msra.mxu0 %v611
          %916 = vmatpush.msra.mxu0 %v595
          %917 = vmatpush.msra.mxu0 %v579
          %918 = vmatpush.msra.mxu0 %v563
          %919 = vmatpush.msra.mxu0 %v547
          %920 = vmatpush.msra.mxu0 %v531
          %921 = vmatpush.msra.mxu0 %v515
          %922 = vmatpush.msra.mxu0 %v499
          %923 = vmatpush.msra.mxu0 %v483
          %924 = vmatmul.f32.gmra.mxu0 %v475
          %v925 = vpop.f32.mrf.mxu0
          %v926 = vadd.f32 %v743, %v925
          %927 = vdwg.mxu0
          %928 = vmatpush.msra.mxu0 %v724
          %929 = vmatpush.msra.mxu0 %v708
          %930 = vmatpush.msra.mxu0 %v692
          %931 = vmatpush.msra.mxu0 %v676
          %932 = vmatpush.msra.mxu0 %v660
          %933 = vmatpush.msra.mxu0 %v644
          %934 = vmatpush.msra.mxu0 %v628
          %935 = vmatpush.msra.mxu0 %v612
          %936 = vmatpush.msra.mxu0 %v596
          %937 = vmatpush.msra.mxu0 %v580
          %938 = vmatpush.msra.mxu0 %v564
          %939 = vmatpush.msra.mxu0 %v548
          %940 = vmatpush.msra.mxu0 %v532
          %941 = vmatpush.msra.mxu0 %v516
          %942 = vmatpush.msra.mxu0 %v500
          %943 = vmatpush.msra.mxu0 %v484
          %944 = vmatmul.f32.gmra.mxu0 %v475
          %v945 = vpop.f32.mrf.mxu0
          %v946 = vadd.f32 %v744, %v945
          %947 = vdwg.mxu0
          %948 = vmatpush.msra.mxu0 %v725
          %949 = vmatpush.msra.mxu0 %v709
          %950 = vmatpush.msra.mxu0 %v693
          %951 = vmatpush.msra.mxu0 %v677
          %952 = vmatpush.msra.mxu0 %v661
          %953 = vmatpush.msra.mxu0 %v645
          %954 = vmatpush.msra.mxu0 %v629
          %955 = vmatpush.msra.mxu0 %v613
          %956 = vmatpush.msra.mxu0 %v597
          %957 = vmatpush.msra.mxu0 %v581
          %958 = vmatpush.msra.mxu0 %v565
          %959 = vmatpush.msra.mxu0 %v549
          %960 = vmatpush.msra.mxu0 %v533
          %961 = vmatpush.msra.mxu0 %v517
          %962 = vmatpush.msra.mxu0 %v501
          %963 = vmatpush.msra.mxu0 %v485
          %964 = vmatmul.f32.gmra.mxu0 %v475
          %v965 = vpop.f32.mrf.mxu0
          %v966 = vadd.f32 %v745, %v965
          %967 = vdwg.mxu0
          %968 = vmatpush.msra.mxu0 %v726
          %969 = vmatpush.msra.mxu0 %v710
          %970 = vmatpush.msra.mxu0 %v694
          %971 = vmatpush.msra.mxu0 %v678
          %972 = vmatpush.msra.mxu0 %v662
          %973 = vmatpush.msra.mxu0 %v646
          %974 = vmatpush.msra.mxu0 %v630
          %975 = vmatpush.msra.mxu0 %v614
          %976 = vmatpush.msra.mxu0 %v598
          %977 = vmatpush.msra.mxu0 %v582
          %978 = vmatpush.msra.mxu0 %v566
          %979 = vmatpush.msra.mxu0 %v550
          %980 = vmatpush.msra.mxu0 %v534
          %981 = vmatpush.msra.mxu0 %v518
          %982 = vmatpush.msra.mxu0 %v502
          %983 = vmatpush.msra.mxu0 %v486
          %984 = vmatmul.f32.gmra.mxu0 %v475
          %v985 = vpop.f32.mrf.mxu0
          %v986 = vadd.f32 %v746, %v985
          %987 = vdwg.mxu0
          %988 = vmatpush.msra.mxu0 %v727
          %989 = vmatpush.msra.mxu0 %v711
          %990 = vmatpush.msra.mxu0 %v695
          %991 = vmatpush.msra.mxu0 %v679
          %992 = vmatpush.msra.mxu0 %v663
          %993 = vmatpush.msra.mxu0 %v647
          %994 = vmatpush.msra.mxu0 %v631
          %995 = vmatpush.msra.mxu0 %v615
          %996 = vmatpush.msra.mxu0 %v599
          %997 = vmatpush.msra.mxu0 %v583
          %998 = vmatpush.msra.mxu0 %v567
          %999 = vmatpush.msra.mxu0 %v551
          %1000 = vmatpush.msra.mxu0 %v535
          %1001 = vmatpush.msra.mxu0 %v519
          %1002 = vmatpush.msra.mxu0 %v503
          %1003 = vmatpush.msra.mxu0 %v487
          %1004 = vmatmul.f32.gmra.mxu0 %v475
          %v1005 = vpop.f32.mrf.mxu0
          %v1006 = vadd.f32 %v747, %v1005
          %1007 = vdwg.mxu0
          %1008 = vmatpush.msra.mxu0 %v728
          %1009 = vmatpush.msra.mxu0 %v712
          %1010 = vmatpush.msra.mxu0 %v696
          %1011 = vmatpush.msra.mxu0 %v680
          %1012 = vmatpush.msra.mxu0 %v664
          %1013 = vmatpush.msra.mxu0 %v648
          %1014 = vmatpush.msra.mxu0 %v632
          %1015 = vmatpush.msra.mxu0 %v616
          %1016 = vmatpush.msra.mxu0 %v600
          %1017 = vmatpush.msra.mxu0 %v584
          %1018 = vmatpush.msra.mxu0 %v568
          %1019 = vmatpush.msra.mxu0 %v552
          %1020 = vmatpush.msra.mxu0 %v536
          %1021 = vmatpush.msra.mxu0 %v520
          %1022 = vmatpush.msra.mxu0 %v504
          %1023 = vmatpush.msra.mxu0 %v488
          %1024 = vmatmul.f32.gmra.mxu0 %v475
          %v1025 = vpop.f32.mrf.mxu0
          %v1026 = vadd.f32 %v748, %v1025
          %1027 = vdwg.mxu0
          %1028 = vmatpush.msra.mxu0 %v729
          %1029 = vmatpush.msra.mxu0 %v713
          %1030 = vmatpush.msra.mxu0 %v697
          %1031 = vmatpush.msra.mxu0 %v681
          %1032 = vmatpush.msra.mxu0 %v665
          %1033 = vmatpush.msra.mxu0 %v649
          %1034 = vmatpush.msra.mxu0 %v633
          %1035 = vmatpush.msra.mxu0 %v617
          %1036 = vmatpush.msra.mxu0 %v601
          %1037 = vmatpush.msra.mxu0 %v585
          %1038 = vmatpush.msra.mxu0 %v569
          %1039 = vmatpush.msra.mxu0 %v553
          %1040 = vmatpush.msra.mxu0 %v537
          %1041 = vmatpush.msra.mxu0 %v521
          %1042 = vmatpush.msra.mxu0 %v505
          %1043 = vmatpush.msra.mxu0 %v489
          %1044 = vmatmul.f32.gmra.mxu0 %v475
          %v1045 = vpop.f32.mrf.mxu0
          %v1046 = vadd.f32 %v749, %v1045
          %1047 = vdwg.mxu0
          %1048 = vmatpush.msra.mxu0 %v730
          %1049 = vmatpush.msra.mxu0 %v714
          %1050 = vmatpush.msra.mxu0 %v698
          %1051 = vmatpush.msra.mxu0 %v682
          %1052 = vmatpush.msra.mxu0 %v666
          %1053 = vmatpush.msra.mxu0 %v650
          %1054 = vmatpush.msra.mxu0 %v634
          %1055 = vmatpush.msra.mxu0 %v618
          %1056 = vmatpush.msra.mxu0 %v602
          %1057 = vmatpush.msra.mxu0 %v586
          %1058 = vmatpush.msra.mxu0 %v570
          %1059 = vmatpush.msra.mxu0 %v554
          %1060 = vmatpush.msra.mxu0 %v538
          %1061 = vmatpush.msra.mxu0 %v522
          %1062 = vmatpush.msra.mxu0 %v506
          %1063 = vmatpush.msra.mxu0 %v490
          %1064 = vmatmul.f32.gmra.mxu0 %v475
          %v1065 = vpop.f32.mrf.mxu0
          %v1066 = vadd.f32 %v750, %v1065
          %1067 = vdwg.mxu0
          %1068 = vmatpush.msra.mxu0 %v731
          %1069 = vmatpush.msra.mxu0 %v715
          %1070 = vmatpush.msra.mxu0 %v699
          %1071 = vmatpush.msra.mxu0 %v683
          %1072 = vmatpush.msra.mxu0 %v667
          %1073 = vmatpush.msra.mxu0 %v651
          %1074 = vmatpush.msra.mxu0 %v635
          %1075 = vmatpush.msra.mxu0 %v619
          %1076 = vmatpush.msra.mxu0 %v603
          %1077 = vmatpush.msra.mxu0 %v587
          %1078 = vmatpush.msra.mxu0 %v571
          %1079 = vmatpush.msra.mxu0 %v555
          %1080 = vmatpush.msra.mxu0 %v539
          %1081 = vmatpush.msra.mxu0 %v523
          %1082 = vmatpush.msra.mxu0 %v507
          %1083 = vmatpush.msra.mxu0 %v491
          %1084 = vmatmul.f32.gmra.mxu0 %v475
          %v1085 = vpop.f32.mrf.mxu0
          %v1086 = vadd.f32 %v751, %v1085
          %1087 = vdwg.mxu0
          %v1088 = vmax.f32 %v786, 0.0
          %v1089 = vmax.f32 %v806, 0.0
          %v1090 = vmax.f32 %v826, 0.0
          %v1091 = vmax.f32 %v846, 0.0
          %v1092 = vmax.f32 %v866, 0.0
          %v1093 = vmax.f32 %v886, 0.0
          %v1094 = vmax.f32 %v906, 0.0
          %v1095 = vmax.f32 %v926, 0.0
          %v1096 = vmax.f32 %v946, 0.0
          %v1097 = vmax.f32 %v966, 0.0
          %v1098 = vmax.f32 %v986, 0.0
          %v1099 = vmax.f32 %v1006, 0.0
          %v1100 = vmax.f32 %v1026, 0.0
          %v1101 = vmax.f32 %v1046, 0.0
          %v1102 = vmax.f32 %v1066, 0.0
          %v1103 = vmax.f32 %v1086, 0.0
          %v1104 = vlaneseq
          %v1105 = vand.u32 %v1104, 127
          %vm1106 = vcmp.lt.s32.totalorder %v1105, 4
          %v1107 = vld [vmem:[#allocation9] sm:$0xff]
          %v1108 = vld [vmem:[#allocation9 + $0x8] sm:$0xff]
          %v1109 = vld [vmem:[#allocation9 + $0x10] sm:$0xff]
          %v1110 = vld [vmem:[#allocation9 + $0x18] sm:$0xff]
          %v1111 = vld [vmem:[#allocation9 + $0x20] sm:$0xff]
          %v1112 = vld [vmem:[#allocation9 + $0x28] sm:$0xff]
          %v1113 = vld [vmem:[#allocation9 + $0x30] sm:$0xff]
          %v1114 = vld [vmem:[#allocation9 + $0x38] sm:$0xff]
          %v1115 = vld [vmem:[#allocation9 + $0x40] sm:$0xff]
          %v1116 = vld [vmem:[#allocation9 + $0x48] sm:$0xff]
          %v1117 = vld [vmem:[#allocation9 + $0x50] sm:$0xff]
          %v1118 = vld [vmem:[#allocation9 + $0x58] sm:$0xff]
          %v1119 = vld [vmem:[#allocation9 + $0x60] sm:$0xff]
          %v1120 = vld [vmem:[#allocation9 + $0x68] sm:$0xff]
          %v1121 = vld [vmem:[#allocation9 + $0x70] sm:$0xff]
          %v1122 = vld [vmem:[#allocation9 + $0x78] sm:$0xff]
          %v1123 = vld [vmem:[#allocation9 + $0x80] sm:$0xff]
          %v1124 = vld [vmem:[#allocation9 + $0x88] sm:$0xff]
          %v1125 = vld [vmem:[#allocation9 + $0x90] sm:$0xff]
          %v1126 = vld [vmem:[#allocation9 + $0x98] sm:$0xff]
          %v1127 = vld [vmem:[#allocation9 + $0xa0] sm:$0xff]
          %v1128 = vld [vmem:[#allocation9 + $0xa8] sm:$0xff]
          %v1129 = vld [vmem:[#allocation9 + $0xb0] sm:$0xff]
          %v1130 = vld [vmem:[#allocation9 + $0xb8] sm:$0xff]
          %v1131 = vld [vmem:[#allocation9 + $0xc0] sm:$0xff]
          %v1132 = vld [vmem:[#allocation9 + $0xc8] sm:$0xff]
          %v1133 = vld [vmem:[#allocation9 + $0xd0] sm:$0xff]
          %v1134 = vld [vmem:[#allocation9 + $0xd8] sm:$0xff]
          %v1135 = vld [vmem:[#allocation9 + $0xe0] sm:$0xff]
          %v1136 = vld [vmem:[#allocation9 + $0xe8] sm:$0xff]
          %v1137 = vld [vmem:[#allocation9 + $0xf0] sm:$0xff]
          %v1138 = vld [vmem:[#allocation9 + $0xf8] sm:$0xff]
          %v1139 = vld [vmem:[#allocation9 + $0x100] sm:$0xff]
          %v1140 = vld [vmem:[#allocation9 + $0x108] sm:$0xff]
          %v1141 = vld [vmem:[#allocation9 + $0x110] sm:$0xff]
          %v1142 = vld [vmem:[#allocation9 + $0x118] sm:$0xff]
          %v1143 = vld [vmem:[#allocation9 + $0x120] sm:$0xff]
          %v1144 = vld [vmem:[#allocation9 + $0x128] sm:$0xff]
          %v1145 = vld [vmem:[#allocation9 + $0x130] sm:$0xff]
          %v1146 = vld [vmem:[#allocation9 + $0x138] sm:$0xff]
          %v1147 = vld [vmem:[#allocation9 + $0x140] sm:$0xff]
          %v1148 = vld [vmem:[#allocation9 + $0x148] sm:$0xff]
          %v1149 = vld [vmem:[#allocation9 + $0x150] sm:$0xff]
          %v1150 = vld [vmem:[#allocation9 + $0x158] sm:$0xff]
          %v1151 = vld [vmem:[#allocation9 + $0x160] sm:$0xff]
          %v1152 = vld [vmem:[#allocation9 + $0x168] sm:$0xff]
          %v1153 = vld [vmem:[#allocation9 + $0x170] sm:$0xff]
          %v1154 = vld [vmem:[#allocation9 + $0x178] sm:$0xff]
          %v1155 = vld [vmem:[#allocation9 + $0x180] sm:$0xff]
          %v1156 = vld [vmem:[#allocation9 + $0x188] sm:$0xff]
          %v1157 = vld [vmem:[#allocation9 + $0x190] sm:$0xff]
          %v1158 = vld [vmem:[#allocation9 + $0x198] sm:$0xff]
          %v1159 = vld [vmem:[#allocation9 + $0x1a0] sm:$0xff]
          %v1160 = vld [vmem:[#allocation9 + $0x1a8] sm:$0xff]
          %v1161 = vld [vmem:[#allocation9 + $0x1b0] sm:$0xff]
          %v1162 = vld [vmem:[#allocation9 + $0x1b8] sm:$0xff]
          %v1163 = vld [vmem:[#allocation9 + $0x1c0] sm:$0xff]
          %v1164 = vld [vmem:[#allocation9 + $0x1c8] sm:$0xff]
          %v1165 = vld [vmem:[#allocation9 + $0x1d0] sm:$0xff]
          %v1166 = vld [vmem:[#allocation9 + $0x1d8] sm:$0xff]
          %v1167 = vld [vmem:[#allocation9 + $0x1e0] sm:$0xff]
          %v1168 = vld [vmem:[#allocation9 + $0x1e8] sm:$0xff]
          %v1169 = vld [vmem:[#allocation9 + $0x1f0] sm:$0xff]
          %v1170 = vld [vmem:[#allocation9 + $0x1f8] sm:$0xff]
          %v1171 = vld [vmem:[#allocation9 + $0x200] sm:$0xff]
          %v1172 = vld [vmem:[#allocation9 + $0x208] sm:$0xff]
          %v1173 = vld [vmem:[#allocation9 + $0x210] sm:$0xff]
          %v1174 = vld [vmem:[#allocation9 + $0x218] sm:$0xff]
          %v1175 = vld [vmem:[#allocation9 + $0x220] sm:$0xff]
          %v1176 = vld [vmem:[#allocation9 + $0x228] sm:$0xff]
          %v1177 = vld [vmem:[#allocation9 + $0x230] sm:$0xff]
          %v1178 = vld [vmem:[#allocation9 + $0x238] sm:$0xff]
          %v1179 = vld [vmem:[#allocation9 + $0x240] sm:$0xff]
          %v1180 = vld [vmem:[#allocation9 + $0x248] sm:$0xff]
          %v1181 = vld [vmem:[#allocation9 + $0x250] sm:$0xff]
          %v1182 = vld [vmem:[#allocation9 + $0x258] sm:$0xff]
          %v1183 = vld [vmem:[#allocation9 + $0x260] sm:$0xff]
          %v1184 = vld [vmem:[#allocation9 + $0x268] sm:$0xff]
          %v1185 = vld [vmem:[#allocation9 + $0x270] sm:$0xff]
          %v1186 = vld [vmem:[#allocation9 + $0x278] sm:$0xff]
          %v1187 = vld [vmem:[#allocation9 + $0x280] sm:$0xff]
          %v1188 = vld [vmem:[#allocation9 + $0x288] sm:$0xff]
          %v1189 = vld [vmem:[#allocation9 + $0x290] sm:$0xff]
          %v1190 = vld [vmem:[#allocation9 + $0x298] sm:$0xff]
          %v1191 = vld [vmem:[#allocation9 + $0x2a0] sm:$0xff]
          %v1192 = vld [vmem:[#allocation9 + $0x2a8] sm:$0xff]
          %v1193 = vld [vmem:[#allocation9 + $0x2b0] sm:$0xff]
          %v1194 = vld [vmem:[#allocation9 + $0x2b8] sm:$0xff]
          %v1195 = vld [vmem:[#allocation9 + $0x2c0] sm:$0xff]
          %v1196 = vld [vmem:[#allocation9 + $0x2c8] sm:$0xff]
          %v1197 = vld [vmem:[#allocation9 + $0x2d0] sm:$0xff]
          %v1198 = vld [vmem:[#allocation9 + $0x2d8] sm:$0xff]
          %v1199 = vld [vmem:[#allocation9 + $0x2e0] sm:$0xff]
          %v1200 = vld [vmem:[#allocation9 + $0x2e8] sm:$0xff]
          %v1201 = vld [vmem:[#allocation9 + $0x2f0] sm:$0xff]
          %v1202 = vld [vmem:[#allocation9 + $0x2f8] sm:$0xff]
          %v1203 = vld [vmem:[#allocation9 + $0x300] sm:$0xff]
          %v1204 = vld [vmem:[#allocation9 + $0x308] sm:$0xff]
          %v1205 = vld [vmem:[#allocation9 + $0x310] sm:$0xff]
          %v1206 = vld [vmem:[#allocation9 + $0x318] sm:$0xff]
          %v1207 = vld [vmem:[#allocation9 + $0x320] sm:$0xff]
          %v1208 = vld [vmem:[#allocation9 + $0x328] sm:$0xff]
          %v1209 = vld [vmem:[#allocation9 + $0x330] sm:$0xff]
          %v1210 = vld [vmem:[#allocation9 + $0x338] sm:$0xff]
          %v1211 = vld [vmem:[#allocation9 + $0x340] sm:$0xff]
          %v1212 = vld [vmem:[#allocation9 + $0x348] sm:$0xff]
          %v1213 = vld [vmem:[#allocation9 + $0x350] sm:$0xff]
          %v1214 = vld [vmem:[#allocation9 + $0x358] sm:$0xff]
          %v1215 = vld [vmem:[#allocation9 + $0x360] sm:$0xff]
          %v1216 = vld [vmem:[#allocation9 + $0x368] sm:$0xff]
          %v1217 = vld [vmem:[#allocation9 + $0x370] sm:$0xff]
          %v1218 = vld [vmem:[#allocation9 + $0x378] sm:$0xff]
          %v1219 = vld [vmem:[#allocation9 + $0x380] sm:$0xff]
          %v1220 = vld [vmem:[#allocation9 + $0x388] sm:$0xff]
          %v1221 = vld [vmem:[#allocation9 + $0x390] sm:$0xff]
          %v1222 = vld [vmem:[#allocation9 + $0x398] sm:$0xff]
          %v1223 = vld [vmem:[#allocation9 + $0x3a0] sm:$0xff]
          %v1224 = vld [vmem:[#allocation9 + $0x3a8] sm:$0xff]
          %v1225 = vld [vmem:[#allocation9 + $0x3b0] sm:$0xff]
          %v1226 = vld [vmem:[#allocation9 + $0x3b8] sm:$0xff]
          %v1227 = vld [vmem:[#allocation9 + $0x3c0] sm:$0xff]
          %v1228 = vld [vmem:[#allocation9 + $0x3c8] sm:$0xff]
          %v1229 = vld [vmem:[#allocation9 + $0x3d0] sm:$0xff]
          %v1230 = vld [vmem:[#allocation9 + $0x3d8] sm:$0xff]
          %v1231 = vld [vmem:[#allocation9 + $0x3e0] sm:$0xff]
          %v1232 = vld [vmem:[#allocation9 + $0x3e8] sm:$0xff]
          %v1233 = vld [vmem:[#allocation9 + $0x3f0] sm:$0xff]
          %v1234 = vld [vmem:[#allocation9 + $0x3f8] sm:$0xff]
          %v1235 = vld [vmem:[#allocation11] sm:$0x3]
          %v1237 = vperm.slane %v1235, 0
          %v1238 = vperm.slane %v1235, 1
          %1241 = vmatpush.msra.mxu0 %v1137
          %1242 = vmatpush.msra.mxu0 %v1135
          %1243 = vmatpush.msra.mxu0 %v1133
          %1244 = vmatpush.msra.mxu0 %v1131
          %1245 = vmatpush.msra.mxu0 %v1129
          %1246 = vmatpush.msra.mxu0 %v1127
          %1247 = vmatpush.msra.mxu0 %v1125
          %1248 = vmatpush.msra.mxu0 %v1123
          %1249 = vmatpush.msra.mxu0 %v1121
          %1250 = vmatpush.msra.mxu0 %v1119
          %1251 = vmatpush.msra.mxu0 %v1117
          %1252 = vmatpush.msra.mxu0 %v1115
          %1253 = vmatpush.msra.mxu0 %v1113
          %1254 = vmatpush.msra.mxu0 %v1111
          %1255 = vmatpush.msra.mxu0 %v1109
          %1256 = vmatpush.msra.mxu0 %v1107
          %1257 = vmatmul.f32.gmra.mxu0 %v1088
          %v1258 = vpop.f32.mrf.mxu0
          %v1259 = vadd.f32 %v1237, %v1258
          %1260 = vdwg.mxu0
          %1261 = vmatpush.msra.mxu0 %v1169
          %1262 = vmatpush.msra.mxu0 %v1167
          %1263 = vmatpush.msra.mxu0 %v1165
          %1264 = vmatpush.msra.mxu0 %v1163
          %1265 = vmatpush.msra.mxu0 %v1161
          %1266 = vmatpush.msra.mxu0 %v1159
          %1267 = vmatpush.msra.mxu0 %v1157
          %1268 = vmatpush.msra.mxu0 %v1155
          %1269 = vmatpush.msra.mxu0 %v1153
          %1270 = vmatpush.msra.mxu0 %v1151
          %1271 = vmatpush.msra.mxu0 %v1149
          %1272 = vmatpush.msra.mxu0 %v1147
          %1273 = vmatpush.msra.mxu0 %v1145
          %1274 = vmatpush.msra.mxu0 %v1143
          %1275 = vmatpush.msra.mxu0 %v1141
          %1276 = vmatpush.msra.mxu0 %v1139
          %1277 = vmatmul.f32.gmra.mxu0 %v1089
          %v1278 = vpop.f32.mrf.mxu0
          %v1279 = vadd.f32 %v1259, %v1278
          %1280 = vdwg.mxu0
          %1281 = vmatpush.msra.mxu0 %v1201
          %1282 = vmatpush.msra.mxu0 %v1199
          %1283 = vmatpush.msra.mxu0 %v1197
          %1284 = vmatpush.msra.mxu0 %v1195
          %1285 = vmatpush.msra.mxu0 %v1193
          %1286 = vmatpush.msra.mxu0 %v1191
          %1287 = vmatpush.msra.mxu0 %v1189
          %1288 = vmatpush.msra.mxu0 %v1187
          %1289 = vmatpush.msra.mxu0 %v1185
          %1290 = vmatpush.msra.mxu0 %v1183
          %1291 = vmatpush.msra.mxu0 %v1181
          %1292 = vmatpush.msra.mxu0 %v1179
          %1293 = vmatpush.msra.mxu0 %v1177
          %1294 = vmatpush.msra.mxu0 %v1175
          %1295 = vmatpush.msra.mxu0 %v1173
          %1296 = vmatpush.msra.mxu0 %v1171
          %1297 = vmatmul.f32.gmra.mxu0 %v1090
          %v1298 = vpop.f32.mrf.mxu0
          %v1299 = vadd.f32 %v1279, %v1298
          %1300 = vdwg.mxu0
          %1301 = vmatpush.msra.mxu0 %v1233
          %1302 = vmatpush.msra.mxu0 %v1231
          %1303 = vmatpush.msra.mxu0 %v1229
          %1304 = vmatpush.msra.mxu0 %v1227
          %1305 = vmatpush.msra.mxu0 %v1225
          %1306 = vmatpush.msra.mxu0 %v1223
          %1307 = vmatpush.msra.mxu0 %v1221
          %1308 = vmatpush.msra.mxu0 %v1219
          %1309 = vmatpush.msra.mxu0 %v1217
          %1310 = vmatpush.msra.mxu0 %v1215
          %1311 = vmatpush.msra.mxu0 %v1213
          %1312 = vmatpush.msra.mxu0 %v1211
          %1313 = vmatpush.msra.mxu0 %v1209
          %1314 = vmatpush.msra.mxu0 %v1207
          %1315 = vmatpush.msra.mxu0 %v1205
          %1316 = vmatpush.msra.mxu0 %v1203
          %1317 = vmatmul.f32.gmra.mxu0 %v1091
          %v1318 = vpop.f32.mrf.mxu0
          %v1319 = vadd.f32 %v1299, %v1318
          %1320 = vdwg.mxu0
          %1321 = vmatpush.msra.mxu0 %v1138
          %1322 = vmatpush.msra.mxu0 %v1136
          %1323 = vmatpush.msra.mxu0 %v1134
          %1324 = vmatpush.msra.mxu0 %v1132
          %1325 = vmatpush.msra.mxu0 %v1130
          %1326 = vmatpush.msra.mxu0 %v1128
          %1327 = vmatpush.msra.mxu0 %v1126
          %1328 = vmatpush.msra.mxu0 %v1124
          %1329 = vmatpush.msra.mxu0 %v1122
          %1330 = vmatpush.msra.mxu0 %v1120
          %1331 = vmatpush.msra.mxu0 %v1118
          %1332 = vmatpush.msra.mxu0 %v1116
          %1333 = vmatpush.msra.mxu0 %v1114
          %1334 = vmatpush.msra.mxu0 %v1112
          %1335 = vmatpush.msra.mxu0 %v1110
          %1336 = vmatpush.msra.mxu0 %v1108
          %1337 = vmatmul.f32.gmra.mxu0 %v1088
          %v1338 = vpop.f32.mrf.mxu0
          %v1339 = vadd.f32 %v1238, %v1338
          %1340 = vdwg.mxu0
          %1341 = vmatpush.msra.mxu0 %v1170
          %1342 = vmatpush.msra.mxu0 %v1168
          %1343 = vmatpush.msra.mxu0 %v1166
          %1344 = vmatpush.msra.mxu0 %v1164
          %1345 = vmatpush.msra.mxu0 %v1162
          %1346 = vmatpush.msra.mxu0 %v1160
          %1347 = vmatpush.msra.mxu0 %v1158
          %1348 = vmatpush.msra.mxu0 %v1156
          %1349 = vmatpush.msra.mxu0 %v1154
          %1350 = vmatpush.msra.mxu0 %v1152
          %1351 = vmatpush.msra.mxu0 %v1150
          %1352 = vmatpush.msra.mxu0 %v1148
          %1353 = vmatpush.msra.mxu0 %v1146
          %1354 = vmatpush.msra.mxu0 %v1144
          %1355 = vmatpush.msra.mxu0 %v1142
          %1356 = vmatpush.msra.mxu0 %v1140
          %1357 = vmatmul.f32.gmra.mxu0 %v1089
          %v1358 = vpop.f32.mrf.mxu0
          %v1359 = vadd.f32 %v1339, %v1358
          %1360 = vdwg.mxu0
          %1361 = vmatpush.msra.mxu0 %v1202
          %1362 = vmatpush.msra.mxu0 %v1200
          %1363 = vmatpush.msra.mxu0 %v1198
          %1364 = vmatpush.msra.mxu0 %v1196
          %1365 = vmatpush.msra.mxu0 %v1194
          %1366 = vmatpush.msra.mxu0 %v1192
          %1367 = vmatpush.msra.mxu0 %v1190
          %1368 = vmatpush.msra.mxu0 %v1188
          %1369 = vmatpush.msra.mxu0 %v1186
          %1370 = vmatpush.msra.mxu0 %v1184
          %1371 = vmatpush.msra.mxu0 %v1182
          %1372 = vmatpush.msra.mxu0 %v1180
          %1373 = vmatpush.msra.mxu0 %v1178
          %1374 = vmatpush.msra.mxu0 %v1176
          %1375 = vmatpush.msra.mxu0 %v1174
          %1376 = vmatpush.msra.mxu0 %v1172
          %1377 = vmatmul.f32.gmra.mxu0 %v1090
          %v1378 = vpop.f32.mrf.mxu0
          %v1379 = vadd.f32 %v1359, %v1378
          %1380 = vdwg.mxu0
          %1381 = vmatpush.msra.mxu0 %v1234
          %1382 = vmatpush.msra.mxu0 %v1232
          %1383 = vmatpush.msra.mxu0 %v1230
          %1384 = vmatpush.msra.mxu0 %v1228
          %1385 = vmatpush.msra.mxu0 %v1226
          %1386 = vmatpush.msra.mxu0 %v1224
          %1387 = vmatpush.msra.mxu0 %v1222
          %1388 = vmatpush.msra.mxu0 %v1220
          %1389 = vmatpush.msra.mxu0 %v1218
          %1390 = vmatpush.msra.mxu0 %v1216
          %1391 = vmatpush.msra.mxu0 %v1214
          %1392 = vmatpush.msra.mxu0 %v1212
          %1393 = vmatpush.msra.mxu0 %v1210
          %1394 = vmatpush.msra.mxu0 %v1208
          %1395 = vmatpush.msra.mxu0 %v1206
          %1396 = vmatpush.msra.mxu0 %v1204
          %1397 = vmatmul.f32.gmra.mxu0 %v1091
          %v1398 = vpop.f32.mrf.mxu0
          %v1399 = vadd.f32 %v1379, %v1398
          %1400 = vdwg.mxu0
          %v1401 = vmax.f32 %v1319, 0.0
          %v1402 = vmax.f32 %v1399, 0.0
          %v1403 = vld [vmem:[#allocation12] sm:$0xff]
          %v1404 = vld [vmem:[#allocation12 + $0x8] sm:$0xff]
          %v1405 = vld [vmem:[#allocation12 + $0x10] sm:$0xff]
          %v1406 = vld [vmem:[#allocation12 + $0x18] sm:$0xff]
          %v1407 = vld [vmem:[#allocation12 + $0x20] sm:$0xff]
          %v1408 = vld [vmem:[#allocation12 + $0x28] sm:$0xff]
          %v1409 = vld [vmem:[#allocation12 + $0x30] sm:$0xff]
          %v1410 = vld [vmem:[#allocation12 + $0x38] sm:$0xff]
          %v1411 = vld [vmem:[#allocation12 + $0x40] sm:$0xff]
          %v1412 = vld [vmem:[#allocation12 + $0x48] sm:$0xff]
          %v1413 = vld [vmem:[#allocation12 + $0x50] sm:$0xff]
          %v1414 = vld [vmem:[#allocation12 + $0x58] sm:$0xff]
          %v1415 = vld [vmem:[#allocation12 + $0x60] sm:$0xff]
          %v1416 = vld [vmem:[#allocation12 + $0x68] sm:$0xff]
          %v1417 = vld [vmem:[#allocation12 + $0x70] sm:$0xff]
          %v1418 = vld [vmem:[#allocation12 + $0x78] sm:$0xff]
          %v1419 = vld [vmem:[#allocation12 + $0x80] sm:$0xff]
          %v1420 = vld [vmem:[#allocation12 + $0x88] sm:$0xff]
          %v1421 = vld [vmem:[#allocation12 + $0x90] sm:$0xff]
          %v1422 = vld [vmem:[#allocation12 + $0x98] sm:$0xff]
          %v1423 = vld [vmem:[#allocation12 + $0xa0] sm:$0xff]
          %v1424 = vld [vmem:[#allocation12 + $0xa8] sm:$0xff]
          %v1425 = vld [vmem:[#allocation12 + $0xb0] sm:$0xff]
          %v1426 = vld [vmem:[#allocation12 + $0xb8] sm:$0xff]
          %v1427 = vld [vmem:[#allocation12 + $0xc0] sm:$0xff]
          %v1428 = vld [vmem:[#allocation12 + $0xc8] sm:$0xff]
          %v1429 = vld [vmem:[#allocation12 + $0xd0] sm:$0xff]
          %v1430 = vld [vmem:[#allocation12 + $0xd8] sm:$0xff]
          %v1431 = vld [vmem:[#allocation12 + $0xe0] sm:$0xff]
          %v1432 = vld [vmem:[#allocation12 + $0xe8] sm:$0xff]
          %v1433 = vld [vmem:[#allocation12 + $0xf0] sm:$0xff]
          %v1434 = vld [vmem:[#allocation12 + $0xf8] sm:$0xff]
          %v1435 = vld [vmem:[#allocation14] sm:$0x1]
          %v1437 = vperm.slane %v1435, 0
          %1439 = vmatpush.msra.mxu0 %v1418
          %1440 = vmatpush.msra.mxu0 %v1417
          %1441 = vmatpush.msra.mxu0 %v1416
          %1442 = vmatpush.msra.mxu0 %v1415
          %1443 = vmatpush.msra.mxu0 %v1414
          %1444 = vmatpush.msra.mxu0 %v1413
          %1445 = vmatpush.msra.mxu0 %v1412
          %1446 = vmatpush.msra.mxu0 %v1411
          %1447 = vmatpush.msra.mxu0 %v1410
          %1448 = vmatpush.msra.mxu0 %v1409
          %1449 = vmatpush.msra.mxu0 %v1408
          %1450 = vmatpush.msra.mxu0 %v1407
          %1451 = vmatpush.msra.mxu0 %v1406
          %1452 = vmatpush.msra.mxu0 %v1405
          %1453 = vmatpush.msra.mxu0 %v1404
          %1454 = vmatpush.msra.mxu0 %v1403
          %1455 = vmatmul.f32.gmra.mxu0 %v1401
          %v1456 = vpop.f32.mrf.mxu0
          %v1457 = vadd.f32 %v1437, %v1456
          %1458 = vdwg.mxu0
          %1459 = vmatpush.msra.mxu0 %v1434
          %1460 = vmatpush.msra.mxu0 %v1433
          %1461 = vmatpush.msra.mxu0 %v1432
          %1462 = vmatpush.msra.mxu0 %v1431
          %1463 = vmatpush.msra.mxu0 %v1430
          %1464 = vmatpush.msra.mxu0 %v1429
          %1465 = vmatpush.msra.mxu0 %v1428
          %1466 = vmatpush.msra.mxu0 %v1427
          %1467 = vmatpush.msra.mxu0 %v1426
          %1468 = vmatpush.msra.mxu0 %v1425
          %1469 = vmatpush.msra.mxu0 %v1424
          %1470 = vmatpush.msra.mxu0 %v1423
          %1471 = vmatpush.msra.mxu0 %v1422
          %1472 = vmatpush.msra.mxu0 %v1421
          %1473 = vmatpush.msra.mxu0 %v1420
          %1474 = vmatpush.msra.mxu0 %v1419
          %1475 = vmatmul.f32.gmra.mxu0 %v1402
          %v1476 = vpop.f32.mrf.mxu0
          %v1477 = vadd.f32 %v1457, %v1476
          %1478 = vdwg.mxu0
          %v1479 = vmax.f32 %v1477, 0.0
          %v1480 = vsel %vm1106, %v1479, -1e+30
          %1481 = vmax.xlane.f32.xlu0 %v1480
          %v1482 = vpop.xlane.xlu0 %1481
          %v1483 = vsub.f32 %v1480, %v1482
          %v1484 = vmul.f32 %v1483, 1.442695
          %v1485 = vpow.pop %v1484
          %1486 = vadd.xlane.f32.xlu0 %v1485
          %v1487 = vpop.xlane.xlu0 %1486
          %v1488 = vlog2.pop %v1487
          %v1489 = vmul.f32 %v1488, 0.6931472
          %v1490 = vsub.f32 %v1483, %v1489
          %1491 = vst [vmem:[#allocation15] sm:$0xff] %v1490
          %s1492 = scalar_lea.vmem [#allocation9], 1024
          %v1493 = vld [vmem:[%s1492] sm:$0xff]
          %v1494 = vld [vmem:[%s1492 + $0x8] sm:$0xff]
          %v1495 = vld [vmem:[%s1492 + $0x10] sm:$0xff]
          %v1496 = vld [vmem:[%s1492 + $0x18] sm:$0xff]
          %v1497 = vld [vmem:[%s1492 + $0x20] sm:$0xff]
          %v1498 = vld [vmem:[%s1492 + $0x28] sm:$0xff]
          %v1499 = vld [vmem:[%s1492 + $0x30] sm:$0xff]
          %v1500 = vld [vmem:[%s1492 + $0x38] sm:$0xff]
          %v1501 = vld [vmem:[%s1492 + $0x40] sm:$0xff]
          %v1502 = vld [vmem:[%s1492 + $0x48] sm:$0xff]
          %v1503 = vld [vmem:[%s1492 + $0x50] sm:$0xff]
          %v1504 = vld [vmem:[%s1492 + $0x58] sm:$0xff]
          %v1505 = vld [vmem:[%s1492 + $0x60] sm:$0xff]
          %v1506 = vld [vmem:[%s1492 + $0x68] sm:$0xff]
          %v1507 = vld [vmem:[%s1492 + $0x70] sm:$0xff]
          %v1508 = vld [vmem:[%s1492 + $0x78] sm:$0xff]
          %v1509 = vld [vmem:[%s1492 + $0x80] sm:$0xff]
          %v1510 = vld [vmem:[%s1492 + $0x88] sm:$0xff]
          %v1511 = vld [vmem:[%s1492 + $0x90] sm:$0xff]
          %v1512 = vld [vmem:[%s1492 + $0x98] sm:$0xff]
          %v1513 = vld [vmem:[%s1492 + $0xa0] sm:$0xff]
          %v1514 = vld [vmem:[%s1492 + $0xa8] sm:$0xff]
          %v1515 = vld [vmem:[%s1492 + $0xb0] sm:$0xff]
          %v1516 = vld [vmem:[%s1492 + $0xb8] sm:$0xff]
          %v1517 = vld [vmem:[%s1492 + $0xc0] sm:$0xff]
          %v1518 = vld [vmem:[%s1492 + $0xc8] sm:$0xff]
          %v1519 = vld [vmem:[%s1492 + $0xd0] sm:$0xff]
          %v1520 = vld [vmem:[%s1492 + $0xd8] sm:$0xff]
          %v1521 = vld [vmem:[%s1492 + $0xe0] sm:$0xff]
          %v1522 = vld [vmem:[%s1492 + $0xe8] sm:$0xff]
          %v1523 = vld [vmem:[%s1492 + $0xf0] sm:$0xff]
          %v1524 = vld [vmem:[%s1492 + $0xf8] sm:$0xff]
          %v1525 = vld [vmem:[%s1492 + $0x100] sm:$0xff]
          %v1526 = vld [vmem:[%s1492 + $0x108] sm:$0xff]
          %v1527 = vld [vmem:[%s1492 + $0x110] sm:$0xff]
          %v1528 = vld [vmem:[%s1492 + $0x118] sm:$0xff]
          %v1529 = vld [vmem:[%s1492 + $0x120] sm:$0xff]
          %v1530 = vld [vmem:[%s1492 + $0x128] sm:$0xff]
          %v1531 = vld [vmem:[%s1492 + $0x130] sm:$0xff]
          %v1532 = vld [vmem:[%s1492 + $0x138] sm:$0xff]
          %v1533 = vld [vmem:[%s1492 + $0x140] sm:$0xff]
          %v1534 = vld [vmem:[%s1492 + $0x148] sm:$0xff]
          %v1535 = vld [vmem:[%s1492 + $0x150] sm:$0xff]
          %v1536 = vld [vmem:[%s1492 + $0x158] sm:$0xff]
          %v1537 = vld [vmem:[%s1492 + $0x160] sm:$0xff]
          %v1538 = vld [vmem:[%s1492 + $0x168] sm:$0xff]
          %v1539 = vld [vmem:[%s1492 + $0x170] sm:$0xff]
          %v1540 = vld [vmem:[%s1492 + $0x178] sm:$0xff]
          %v1541 = vld [vmem:[%s1492 + $0x180] sm:$0xff]
          %v1542 = vld [vmem:[%s1492 + $0x188] sm:$0xff]
          %v1543 = vld [vmem:[%s1492 + $0x190] sm:$0xff]
          %v1544 = vld [vmem:[%s1492 + $0x198] sm:$0xff]
          %v1545 = vld [vmem:[%s1492 + $0x1a0] sm:$0xff]
          %v1546 = vld [vmem:[%s1492 + $0x1a8] sm:$0xff]
          %v1547 = vld [vmem:[%s1492 + $0x1b0] sm:$0xff]
          %v1548 = vld [vmem:[%s1492 + $0x1b8] sm:$0xff]
          %v1549 = vld [vmem:[%s1492 + $0x1c0] sm:$0xff]
          %v1550 = vld [vmem:[%s1492 + $0x1c8] sm:$0xff]
          %v1551 = vld [vmem:[%s1492 + $0x1d0] sm:$0xff]
          %v1552 = vld [vmem:[%s1492 + $0x1d8] sm:$0xff]
          %v1553 = vld [vmem:[%s1492 + $0x1e0] sm:$0xff]
          %v1554 = vld [vmem:[%s1492 + $0x1e8] sm:$0xff]
          %v1555 = vld [vmem:[%s1492 + $0x1f0] sm:$0xff]
          %v1556 = vld [vmem:[%s1492 + $0x1f8] sm:$0xff]
          %v1557 = vld [vmem:[%s1492 + $0x200] sm:$0xff]
          %v1558 = vld [vmem:[%s1492 + $0x208] sm:$0xff]
          %v1559 = vld [vmem:[%s1492 + $0x210] sm:$0xff]
          %v1560 = vld [vmem:[%s1492 + $0x218] sm:$0xff]
          %v1561 = vld [vmem:[%s1492 + $0x220] sm:$0xff]
          %v1562 = vld [vmem:[%s1492 + $0x228] sm:$0xff]
          %v1563 = vld [vmem:[%s1492 + $0x230] sm:$0xff]
          %v1564 = vld [vmem:[%s1492 + $0x238] sm:$0xff]
          %v1565 = vld [vmem:[%s1492 + $0x240] sm:$0xff]
          %v1566 = vld [vmem:[%s1492 + $0x248] sm:$0xff]
          %v1567 = vld [vmem:[%s1492 + $0x250] sm:$0xff]
          %v1568 = vld [vmem:[%s1492 + $0x258] sm:$0xff]
          %v1569 = vld [vmem:[%s1492 + $0x260] sm:$0xff]
          %v1570 = vld [vmem:[%s1492 + $0x268] sm:$0xff]
          %v1571 = vld [vmem:[%s1492 + $0x270] sm:$0xff]
          %v1572 = vld [vmem:[%s1492 + $0x278] sm:$0xff]
          %v1573 = vld [vmem:[%s1492 + $0x280] sm:$0xff]
          %v1574 = vld [vmem:[%s1492 + $0x288] sm:$0xff]
          %v1575 = vld [vmem:[%s1492 + $0x290] sm:$0xff]
          %v1576 = vld [vmem:[%s1492 + $0x298] sm:$0xff]
          %v1577 = vld [vmem:[%s1492 + $0x2a0] sm:$0xff]
          %v1578 = vld [vmem:[%s1492 + $0x2a8] sm:$0xff]
          %v1579 = vld [vmem:[%s1492 + $0x2b0] sm:$0xff]
          %v1580 = vld [vmem:[%s1492 + $0x2b8] sm:$0xff]
          %v1581 = vld [vmem:[%s1492 + $0x2c0] sm:$0xff]
          %v1582 = vld [vmem:[%s1492 + $0x2c8] sm:$0xff]
          %v1583 = vld [vmem:[%s1492 + $0x2d0] sm:$0xff]
          %v1584 = vld [vmem:[%s1492 + $0x2d8] sm:$0xff]
          %v1585 = vld [vmem:[%s1492 + $0x2e0] sm:$0xff]
          %v1586 = vld [vmem:[%s1492 + $0x2e8] sm:$0xff]
          %v1587 = vld [vmem:[%s1492 + $0x2f0] sm:$0xff]
          %v1588 = vld [vmem:[%s1492 + $0x2f8] sm:$0xff]
          %v1589 = vld [vmem:[%s1492 + $0x300] sm:$0xff]
          %v1590 = vld [vmem:[%s1492 + $0x308] sm:$0xff]
          %v1591 = vld [vmem:[%s1492 + $0x310] sm:$0xff]
          %v1592 = vld [vmem:[%s1492 + $0x318] sm:$0xff]
          %v1593 = vld [vmem:[%s1492 + $0x320] sm:$0xff]
          %v1594 = vld [vmem:[%s1492 + $0x328] sm:$0xff]
          %v1595 = vld [vmem:[%s1492 + $0x330] sm:$0xff]
          %v1596 = vld [vmem:[%s1492 + $0x338] sm:$0xff]
          %v1597 = vld [vmem:[%s1492 + $0x340] sm:$0xff]
          %v1598 = vld [vmem:[%s1492 + $0x348] sm:$0xff]
          %v1599 = vld [vmem:[%s1492 + $0x350] sm:$0xff]
          %v1600 = vld [vmem:[%s1492 + $0x358] sm:$0xff]
          %v1601 = vld [vmem:[%s1492 + $0x360] sm:$0xff]
          %v1602 = vld [vmem:[%s1492 + $0x368] sm:$0xff]
          %v1603 = vld [vmem:[%s1492 + $0x370] sm:$0xff]
          %v1604 = vld [vmem:[%s1492 + $0x378] sm:$0xff]
          %v1605 = vld [vmem:[%s1492 + $0x380] sm:$0xff]
          %v1606 = vld [vmem:[%s1492 + $0x388] sm:$0xff]
          %v1607 = vld [vmem:[%s1492 + $0x390] sm:$0xff]
          %v1608 = vld [vmem:[%s1492 + $0x398] sm:$0xff]
          %v1609 = vld [vmem:[%s1492 + $0x3a0] sm:$0xff]
          %v1610 = vld [vmem:[%s1492 + $0x3a8] sm:$0xff]
          %v1611 = vld [vmem:[%s1492 + $0x3b0] sm:$0xff]
          %v1612 = vld [vmem:[%s1492 + $0x3b8] sm:$0xff]
          %v1613 = vld [vmem:[%s1492 + $0x3c0] sm:$0xff]
          %v1614 = vld [vmem:[%s1492 + $0x3c8] sm:$0xff]
          %v1615 = vld [vmem:[%s1492 + $0x3d0] sm:$0xff]
          %v1616 = vld [vmem:[%s1492 + $0x3d8] sm:$0xff]
          %v1617 = vld [vmem:[%s1492 + $0x3e0] sm:$0xff]
          %v1618 = vld [vmem:[%s1492 + $0x3e8] sm:$0xff]
          %v1619 = vld [vmem:[%s1492 + $0x3f0] sm:$0xff]
          %v1620 = vld [vmem:[%s1492 + $0x3f8] sm:$0xff]
          %s1621 = scalar_lea.vmem [#allocation11], 2
          %v1622 = vld [vmem:[%s1621] sm:$0x3]
          %v1624 = vperm.slane %v1622, 0
          %v1625 = vperm.slane %v1622, 1
          %1628 = vmatpush.msra.mxu0 %v1523
          %1629 = vmatpush.msra.mxu0 %v1521
          %1630 = vmatpush.msra.mxu0 %v1519
          %1631 = vmatpush.msra.mxu0 %v1517
          %1632 = vmatpush.msra.mxu0 %v1515
          %1633 = vmatpush.msra.mxu0 %v1513
          %1634 = vmatpush.msra.mxu0 %v1511
          %1635 = vmatpush.msra.mxu0 %v1509
          %1636 = vmatpush.msra.mxu0 %v1507
          %1637 = vmatpush.msra.mxu0 %v1505
          %1638 = vmatpush.msra.mxu0 %v1503
          %1639 = vmatpush.msra.mxu0 %v1501
          %1640 = vmatpush.msra.mxu0 %v1499
          %1641 = vmatpush.msra.mxu0 %v1497
          %1642 = vmatpush.msra.mxu0 %v1495
          %1643 = vmatpush.msra.mxu0 %v1493
          %1644 = vmatmul.f32.gmra.mxu0 %v1092
          %v1645 = vpop.f32.mrf.mxu0
          %v1646 = vadd.f32 %v1624, %v1645
          %1647 = vdwg.mxu0
          %1648 = vmatpush.msra.mxu0 %v1555
          %1649 = vmatpush.msra.mxu0 %v1553
          %1650 = vmatpush.msra.mxu0 %v1551
          %1651 = vmatpush.msra.mxu0 %v1549
          %1652 = vmatpush.msra.mxu0 %v1547
          %1653 = vmatpush.msra.mxu0 %v1545
          %1654 = vmatpush.msra.mxu0 %v1543
          %1655 = vmatpush.msra.mxu0 %v1541
          %1656 = vmatpush.msra.mxu0 %v1539
          %1657 = vmatpush.msra.mxu0 %v1537
          %1658 = vmatpush.msra.mxu0 %v1535
          %1659 = vmatpush.msra.mxu0 %v1533
          %1660 = vmatpush.msra.mxu0 %v1531
          %1661 = vmatpush.msra.mxu0 %v1529
          %1662 = vmatpush.msra.mxu0 %v1527
          %1663 = vmatpush.msra.mxu0 %v1525
          %1664 = vmatmul.f32.gmra.mxu0 %v1093
          %v1665 = vpop.f32.mrf.mxu0
          %v1666 = vadd.f32 %v1646, %v1665
          %1667 = vdwg.mxu0
          %1668 = vmatpush.msra.mxu0 %v1587
          %1669 = vmatpush.msra.mxu0 %v1585
          %1670 = vmatpush.msra.mxu0 %v1583
          %1671 = vmatpush.msra.mxu0 %v1581
          %1672 = vmatpush.msra.mxu0 %v1579
          %1673 = vmatpush.msra.mxu0 %v1577
          %1674 = vmatpush.msra.mxu0 %v1575
          %1675 = vmatpush.msra.mxu0 %v1573
          %1676 = vmatpush.msra.mxu0 %v1571
          %1677 = vmatpush.msra.mxu0 %v1569
          %1678 = vmatpush.msra.mxu0 %v1567
          %1679 = vmatpush.msra.mxu0 %v1565
          %1680 = vmatpush.msra.mxu0 %v1563
          %1681 = vmatpush.msra.mxu0 %v1561
          %1682 = vmatpush.msra.mxu0 %v1559
          %1683 = vmatpush.msra.mxu0 %v1557
          %1684 = vmatmul.f32.gmra.mxu0 %v1094
          %v1685 = vpop.f32.mrf.mxu0
          %v1686 = vadd.f32 %v1666, %v1685
          %1687 = vdwg.mxu0
          %1688 = vmatpush.msra.mxu0 %v1619
          %1689 = vmatpush.msra.mxu0 %v1617
          %1690 = vmatpush.msra.mxu0 %v1615
          %1691 = vmatpush.msra.mxu0 %v1613
          %1692 = vmatpush.msra.mxu0 %v1611
          %1693 = vmatpush.msra.mxu0 %v1609
          %1694 = vmatpush.msra.mxu0 %v1607
          %1695 = vmatpush.msra.mxu0 %v1605
          %1696 = vmatpush.msra.mxu0 %v1603
          %1697 = vmatpush.msra.mxu0 %v1601
          %1698 = vmatpush.msra.mxu0 %v1599
          %1699 = vmatpush.msra.mxu0 %v1597
          %1700 = vmatpush.msra.mxu0 %v1595
          %1701 = vmatpush.msra.mxu0 %v1593
          %1702 = vmatpush.msra.mxu0 %v1591
          %1703 = vmatpush.msra.mxu0 %v1589
          %1704 = vmatmul.f32.gmra.mxu0 %v1095
          %v1705 = vpop.f32.mrf.mxu0
          %v1706 = vadd.f32 %v1686, %v1705
          %1707 = vdwg.mxu0
          %1708 = vmatpush.msra.mxu0 %v1524
          %1709 = vmatpush.msra.mxu0 %v1522
          %1710 = vmatpush.msra.mxu0 %v1520
          %1711 = vmatpush.msra.mxu0 %v1518
          %1712 = vmatpush.msra.mxu0 %v1516
          %1713 = vmatpush.msra.mxu0 %v1514
          %1714 = vmatpush.msra.mxu0 %v1512
          %1715 = vmatpush.msra.mxu0 %v1510
          %1716 = vmatpush.msra.mxu0 %v1508
          %1717 = vmatpush.msra.mxu0 %v1506
          %1718 = vmatpush.msra.mxu0 %v1504
          %1719 = vmatpush.msra.mxu0 %v1502
          %1720 = vmatpush.msra.mxu0 %v1500
          %1721 = vmatpush.msra.mxu0 %v1498
          %1722 = vmatpush.msra.mxu0 %v1496
          %1723 = vmatpush.msra.mxu0 %v1494
          %1724 = vmatmul.f32.gmra.mxu0 %v1092
          %v1725 = vpop.f32.mrf.mxu0
          %v1726 = vadd.f32 %v1625, %v1725
          %1727 = vdwg.mxu0
          %1728 = vmatpush.msra.mxu0 %v1556
          %1729 = vmatpush.msra.mxu0 %v1554
          %1730 = vmatpush.msra.mxu0 %v1552
          %1731 = vmatpush.msra.mxu0 %v1550
          %1732 = vmatpush.msra.mxu0 %v1548
          %1733 = vmatpush.msra.mxu0 %v1546
          %1734 = vmatpush.msra.mxu0 %v1544
          %1735 = vmatpush.msra.mxu0 %v1542
          %1736 = vmatpush.msra.mxu0 %v1540
          %1737 = vmatpush.msra.mxu0 %v1538
          %1738 = vmatpush.msra.mxu0 %v1536
          %1739 = vmatpush.msra.mxu0 %v1534
          %1740 = vmatpush.msra.mxu0 %v1532
          %1741 = vmatpush.msra.mxu0 %v1530
          %1742 = vmatpush.msra.mxu0 %v1528
          %1743 = vmatpush.msra.mxu0 %v1526
          %1744 = vmatmul.f32.gmra.mxu0 %v1093
          %v1745 = vpop.f32.mrf.mxu0
          %v1746 = vadd.f32 %v1726, %v1745
          %1747 = vdwg.mxu0
          %1748 = vmatpush.msra.mxu0 %v1588
          %1749 = vmatpush.msra.mxu0 %v1586
          %1750 = vmatpush.msra.mxu0 %v1584
          %1751 = vmatpush.msra.mxu0 %v1582
          %1752 = vmatpush.msra.mxu0 %v1580
          %1753 = vmatpush.msra.mxu0 %v1578
          %1754 = vmatpush.msra.mxu0 %v1576
          %1755 = vmatpush.msra.mxu0 %v1574
          %1756 = vmatpush.msra.mxu0 %v1572
          %1757 = vmatpush.msra.mxu0 %v1570
          %1758 = vmatpush.msra.mxu0 %v1568
          %1759 = vmatpush.msra.mxu0 %v1566
          %1760 = vmatpush.msra.mxu0 %v1564
          %1761 = vmatpush.msra.mxu0 %v1562
          %1762 = vmatpush.msra.mxu0 %v1560
          %1763 = vmatpush.msra.mxu0 %v1558
          %1764 = vmatmul.f32.gmra.mxu0 %v1094
          %v1765 = vpop.f32.mrf.mxu0
          %v1766 = vadd.f32 %v1746, %v1765
          %1767 = vdwg.mxu0
          %1768 = vmatpush.msra.mxu0 %v1620
          %1769 = vmatpush.msra.mxu0 %v1618
          %1770 = vmatpush.msra.mxu0 %v1616
          %1771 = vmatpush.msra.mxu0 %v1614
          %1772 = vmatpush.msra.mxu0 %v1612
          %1773 = vmatpush.msra.mxu0 %v1610
          %1774 = vmatpush.msra.mxu0 %v1608
          %1775 = vmatpush.msra.mxu0 %v1606
          %1776 = vmatpush.msra.mxu0 %v1604
          %1777 = vmatpush.msra.mxu0 %v1602
          %1778 = vmatpush.msra.mxu0 %v1600
          %1779 = vmatpush.msra.mxu0 %v1598
          %1780 = vmatpush.msra.mxu0 %v1596
          %1781 = vmatpush.msra.mxu0 %v1594
          %1782 = vmatpush.msra.mxu0 %v1592
          %1783 = vmatpush.msra.mxu0 %v1590
          %1784 = vmatmul.f32.gmra.mxu0 %v1095
          %v1785 = vpop.f32.mrf.mxu0
          %v1786 = vadd.f32 %v1766, %v1785
          %1787 = vdwg.mxu0
          %v1788 = vmax.f32 %v1706, 0.0
          %v1789 = vmax.f32 %v1786, 0.0
          %s1790 = scalar_lea.vmem [#allocation12], 256
          %v1791 = vld [vmem:[%s1790] sm:$0xff]
          %v1792 = vld [vmem:[%s1790 + $0x8] sm:$0xff]
          %v1793 = vld [vmem:[%s1790 + $0x10] sm:$0xff]
          %v1794 = vld [vmem:[%s1790 + $0x18] sm:$0xff]
          %v1795 = vld [vmem:[%s1790 + $0x20] sm:$0xff]
          %v1796 = vld [vmem:[%s1790 + $0x28] sm:$0xff]
          %v1797 = vld [vmem:[%s1790 + $0x30] sm:$0xff]
          %v1798 = vld [vmem:[%s1790 + $0x38] sm:$0xff]
          %v1799 = vld [vmem:[%s1790 + $0x40] sm:$0xff]
          %v1800 = vld [vmem:[%s1790 + $0x48] sm:$0xff]
          %v1801 = vld [vmem:[%s1790 + $0x50] sm:$0xff]
          %v1802 = vld [vmem:[%s1790 + $0x58] sm:$0xff]
          %v1803 = vld [vmem:[%s1790 + $0x60] sm:$0xff]
          %v1804 = vld [vmem:[%s1790 + $0x68] sm:$0xff]
          %v1805 = vld [vmem:[%s1790 + $0x70] sm:$0xff]
          %v1806 = vld [vmem:[%s1790 + $0x78] sm:$0xff]
          %v1807 = vld [vmem:[%s1790 + $0x80] sm:$0xff]
          %v1808 = vld [vmem:[%s1790 + $0x88] sm:$0xff]
          %v1809 = vld [vmem:[%s1790 + $0x90] sm:$0xff]
          %v1810 = vld [vmem:[%s1790 + $0x98] sm:$0xff]
          %v1811 = vld [vmem:[%s1790 + $0xa0] sm:$0xff]
          %v1812 = vld [vmem:[%s1790 + $0xa8] sm:$0xff]
          %v1813 = vld [vmem:[%s1790 + $0xb0] sm:$0xff]
          %v1814 = vld [vmem:[%s1790 + $0xb8] sm:$0xff]
          %v1815 = vld [vmem:[%s1790 + $0xc0] sm:$0xff]
          %v1816 = vld [vmem:[%s1790 + $0xc8] sm:$0xff]
          %v1817 = vld [vmem:[%s1790 + $0xd0] sm:$0xff]
          %v1818 = vld [vmem:[%s1790 + $0xd8] sm:$0xff]
          %v1819 = vld [vmem:[%s1790 + $0xe0] sm:$0xff]
          %v1820 = vld [vmem:[%s1790 + $0xe8] sm:$0xff]
          %v1821 = vld [vmem:[%s1790 + $0xf0] sm:$0xff]
          %v1822 = vld [vmem:[%s1790 + $0xf8] sm:$0xff]
          %s1823 = scalar_lea.vmem [#allocation14], 1
          %v1824 = vld [vmem:[%s1823] sm:$0x1]
          %v1826 = vperm.slane %v1824, 0
          %1828 = vmatpush.msra.mxu0 %v1806
          %1829 = vmatpush.msra.mxu0 %v1805
          %1830 = vmatpush.msra.mxu0 %v1804
          %1831 = vmatpush.msra.mxu0 %v1803
          %1832 = vmatpush.msra.mxu0 %v1802
          %1833 = vmatpush.msra.mxu0 %v1801
          %1834 = vmatpush.msra.mxu0 %v1800
          %1835 = vmatpush.msra.mxu0 %v1799
          %1836 = vmatpush.msra.mxu0 %v1798
          %1837 = vmatpush.msra.mxu0 %v1797
          %1838 = vmatpush.msra.mxu0 %v1796
          %1839 = vmatpush.msra.mxu0 %v1795
          %1840 = vmatpush.msra.mxu0 %v1794
          %1841 = vmatpush.msra.mxu0 %v1793
          %1842 = vmatpush.msra.mxu0 %v1792
          %1843 = vmatpush.msra.mxu0 %v1791
          %1844 = vmatmul.f32.gmra.mxu0 %v1788
          %v1845 = vpop.f32.mrf.mxu0
          %v1846 = vadd.f32 %v1826, %v1845
          %1847 = vdwg.mxu0
          %1848 = vmatpush.msra.mxu0 %v1822
          %1849 = vmatpush.msra.mxu0 %v1821
          %1850 = vmatpush.msra.mxu0 %v1820
          %1851 = vmatpush.msra.mxu0 %v1819
          %1852 = vmatpush.msra.mxu0 %v1818
          %1853 = vmatpush.msra.mxu0 %v1817
          %1854 = vmatpush.msra.mxu0 %v1816
          %1855 = vmatpush.msra.mxu0 %v1815
          %1856 = vmatpush.msra.mxu0 %v1814
          %1857 = vmatpush.msra.mxu0 %v1813
          %1858 = vmatpush.msra.mxu0 %v1812
          %1859 = vmatpush.msra.mxu0 %v1811
          %1860 = vmatpush.msra.mxu0 %v1810
          %1861 = vmatpush.msra.mxu0 %v1809
          %1862 = vmatpush.msra.mxu0 %v1808
          %1863 = vmatpush.msra.mxu0 %v1807
          %1864 = vmatmul.f32.gmra.mxu0 %v1789
          %v1865 = vpop.f32.mrf.mxu0
          %v1866 = vadd.f32 %v1846, %v1865
          %1867 = vdwg.mxu0
          %v1868 = vmax.f32 %v1866, 0.0
          %v1869 = vsel %vm1106, %v1868, -1e+30
          %1870 = vmax.xlane.f32.xlu0 %v1869
          %v1871 = vpop.xlane.xlu0 %1870
          %v1872 = vsub.f32 %v1869, %v1871
          %v1873 = vmul.f32 %v1872, 1.442695
          %v1874 = vpow.pop %v1873
          %1875 = vadd.xlane.f32.xlu0 %v1874
          %v1876 = vpop.xlane.xlu0 %1875
          %v1877 = vlog2.pop %v1876
          %v1878 = vmul.f32 %v1877, 0.6931472
          %v1879 = vsub.f32 %v1872, %v1878
          %1880 = vst [vmem:[#allocation15 + $0x8] sm:$0xff] %v1879
          %s1881 = scalar_lea.vmem [#allocation9], 2048
          %v1882 = vld [vmem:[%s1881] sm:$0xff]
          %v1883 = vld [vmem:[%s1881 + $0x8] sm:$0xff]
          %v1884 = vld [vmem:[%s1881 + $0x10] sm:$0xff]
          %v1885 = vld [vmem:[%s1881 + $0x18] sm:$0xff]
          %v1886 = vld [vmem:[%s1881 + $0x20] sm:$0xff]
          %v1887 = vld [vmem:[%s1881 + $0x28] sm:$0xff]
          %v1888 = vld [vmem:[%s1881 + $0x30] sm:$0xff]
          %v1889 = vld [vmem:[%s1881 + $0x38] sm:$0xff]
          %v1890 = vld [vmem:[%s1881 + $0x40] sm:$0xff]
          %v1891 = vld [vmem:[%s1881 + $0x48] sm:$0xff]
          %v1892 = vld [vmem:[%s1881 + $0x50] sm:$0xff]
          %v1893 = vld [vmem:[%s1881 + $0x58] sm:$0xff]
          %v1894 = vld [vmem:[%s1881 + $0x60] sm:$0xff]
          %v1895 = vld [vmem:[%s1881 + $0x68] sm:$0xff]
          %v1896 = vld [vmem:[%s1881 + $0x70] sm:$0xff]
          %v1897 = vld [vmem:[%s1881 + $0x78] sm:$0xff]
          %v1898 = vld [vmem:[%s1881 + $0x80] sm:$0xff]
          %v1899 = vld [vmem:[%s1881 + $0x88] sm:$0xff]
          %v1900 = vld [vmem:[%s1881 + $0x90] sm:$0xff]
          %v1901 = vld [vmem:[%s1881 + $0x98] sm:$0xff]
          %v1902 = vld [vmem:[%s1881 + $0xa0] sm:$0xff]
          %v1903 = vld [vmem:[%s1881 + $0xa8] sm:$0xff]
          %v1904 = vld [vmem:[%s1881 + $0xb0] sm:$0xff]
          %v1905 = vld [vmem:[%s1881 + $0xb8] sm:$0xff]
          %v1906 = vld [vmem:[%s1881 + $0xc0] sm:$0xff]
          %v1907 = vld [vmem:[%s1881 + $0xc8] sm:$0xff]
          %v1908 = vld [vmem:[%s1881 + $0xd0] sm:$0xff]
          %v1909 = vld [vmem:[%s1881 + $0xd8] sm:$0xff]
          %v1910 = vld [vmem:[%s1881 + $0xe0] sm:$0xff]
          %v1911 = vld [vmem:[%s1881 + $0xe8] sm:$0xff]
          %v1912 = vld [vmem:[%s1881 + $0xf0] sm:$0xff]
          %v1913 = vld [vmem:[%s1881 + $0xf8] sm:$0xff]
          %v1914 = vld [vmem:[%s1881 + $0x100] sm:$0xff]
          %v1915 = vld [vmem:[%s1881 + $0x108] sm:$0xff]
          %v1916 = vld [vmem:[%s1881 + $0x110] sm:$0xff]
          %v1917 = vld [vmem:[%s1881 + $0x118] sm:$0xff]
          %v1918 = vld [vmem:[%s1881 + $0x120] sm:$0xff]
          %v1919 = vld [vmem:[%s1881 + $0x128] sm:$0xff]
          %v1920 = vld [vmem:[%s1881 + $0x130] sm:$0xff]
          %v1921 = vld [vmem:[%s1881 + $0x138] sm:$0xff]
          %v1922 = vld [vmem:[%s1881 + $0x140] sm:$0xff]
          %v1923 = vld [vmem:[%s1881 + $0x148] sm:$0xff]
          %v1924 = vld [vmem:[%s1881 + $0x150] sm:$0xff]
          %v1925 = vld [vmem:[%s1881 + $0x158] sm:$0xff]
          %v1926 = vld [vmem:[%s1881 + $0x160] sm:$0xff]
          %v1927 = vld [vmem:[%s1881 + $0x168] sm:$0xff]
          %v1928 = vld [vmem:[%s1881 + $0x170] sm:$0xff]
          %v1929 = vld [vmem:[%s1881 + $0x178] sm:$0xff]
          %v1930 = vld [vmem:[%s1881 + $0x180] sm:$0xff]
          %v1931 = vld [vmem:[%s1881 + $0x188] sm:$0xff]
          %v1932 = vld [vmem:[%s1881 + $0x190] sm:$0xff]
          %v1933 = vld [vmem:[%s1881 + $0x198] sm:$0xff]
          %v1934 = vld [vmem:[%s1881 + $0x1a0] sm:$0xff]
          %v1935 = vld [vmem:[%s1881 + $0x1a8] sm:$0xff]
          %v1936 = vld [vmem:[%s1881 + $0x1b0] sm:$0xff]
          %v1937 = vld [vmem:[%s1881 + $0x1b8] sm:$0xff]
          %v1938 = vld [vmem:[%s1881 + $0x1c0] sm:$0xff]
          %v1939 = vld [vmem:[%s1881 + $0x1c8] sm:$0xff]
          %v1940 = vld [vmem:[%s1881 + $0x1d0] sm:$0xff]
          %v1941 = vld [vmem:[%s1881 + $0x1d8] sm:$0xff]
          %v1942 = vld [vmem:[%s1881 + $0x1e0] sm:$0xff]
          %v1943 = vld [vmem:[%s1881 + $0x1e8] sm:$0xff]
          %v1944 = vld [vmem:[%s1881 + $0x1f0] sm:$0xff]
          %v1945 = vld [vmem:[%s1881 + $0x1f8] sm:$0xff]
          %v1946 = vld [vmem:[%s1881 + $0x200] sm:$0xff]
          %v1947 = vld [vmem:[%s1881 + $0x208] sm:$0xff]
          %v1948 = vld [vmem:[%s1881 + $0x210] sm:$0xff]
          %v1949 = vld [vmem:[%s1881 + $0x218] sm:$0xff]
          %v1950 = vld [vmem:[%s1881 + $0x220] sm:$0xff]
          %v1951 = vld [vmem:[%s1881 + $0x228] sm:$0xff]
          %v1952 = vld [vmem:[%s1881 + $0x230] sm:$0xff]
          %v1953 = vld [vmem:[%s1881 + $0x238] sm:$0xff]
          %v1954 = vld [vmem:[%s1881 + $0x240] sm:$0xff]
          %v1955 = vld [vmem:[%s1881 + $0x248] sm:$0xff]
          %v1956 = vld [vmem:[%s1881 + $0x250] sm:$0xff]
          %v1957 = vld [vmem:[%s1881 + $0x258] sm:$0xff]
          %v1958 = vld [vmem:[%s1881 + $0x260] sm:$0xff]
          %v1959 = vld [vmem:[%s1881 + $0x268] sm:$0xff]
          %v1960 = vld [vmem:[%s1881 + $0x270] sm:$0xff]
          %v1961 = vld [vmem:[%s1881 + $0x278] sm:$0xff]
          %v1962 = vld [vmem:[%s1881 + $0x280] sm:$0xff]
          %v1963 = vld [vmem:[%s1881 + $0x288] sm:$0xff]
          %v1964 = vld [vmem:[%s1881 + $0x290] sm:$0xff]
          %v1965 = vld [vmem:[%s1881 + $0x298] sm:$0xff]
          %v1966 = vld [vmem:[%s1881 + $0x2a0] sm:$0xff]
          %v1967 = vld [vmem:[%s1881 + $0x2a8] sm:$0xff]
          %v1968 = vld [vmem:[%s1881 + $0x2b0] sm:$0xff]
          %v1969 = vld [vmem:[%s1881 + $0x2b8] sm:$0xff]
          %v1970 = vld [vmem:[%s1881 + $0x2c0] sm:$0xff]
          %v1971 = vld [vmem:[%s1881 + $0x2c8] sm:$0xff]
          %v1972 = vld [vmem:[%s1881 + $0x2d0] sm:$0xff]
          %v1973 = vld [vmem:[%s1881 + $0x2d8] sm:$0xff]
          %v1974 = vld [vmem:[%s1881 + $0x2e0] sm:$0xff]
          %v1975 = vld [vmem:[%s1881 + $0x2e8] sm:$0xff]
          %v1976 = vld [vmem:[%s1881 + $0x2f0] sm:$0xff]
          %v1977 = vld [vmem:[%s1881 + $0x2f8] sm:$0xff]
          %v1978 = vld [vmem:[%s1881 + $0x300] sm:$0xff]
          %v1979 = vld [vmem:[%s1881 + $0x308] sm:$0xff]
          %v1980 = vld [vmem:[%s1881 + $0x310] sm:$0xff]
          %v1981 = vld [vmem:[%s1881 + $0x318] sm:$0xff]
          %v1982 = vld [vmem:[%s1881 + $0x320] sm:$0xff]
          %v1983 = vld [vmem:[%s1881 + $0x328] sm:$0xff]
          %v1984 = vld [vmem:[%s1881 + $0x330] sm:$0xff]
          %v1985 = vld [vmem:[%s1881 + $0x338] sm:$0xff]
          %v1986 = vld [vmem:[%s1881 + $0x340] sm:$0xff]
          %v1987 = vld [vmem:[%s1881 + $0x348] sm:$0xff]
          %v1988 = vld [vmem:[%s1881 + $0x350] sm:$0xff]
          %v1989 = vld [vmem:[%s1881 + $0x358] sm:$0xff]
          %v1990 = vld [vmem:[%s1881 + $0x360] sm:$0xff]
          %v1991 = vld [vmem:[%s1881 + $0x368] sm:$0xff]
          %v1992 = vld [vmem:[%s1881 + $0x370] sm:$0xff]
          %v1993 = vld [vmem:[%s1881 + $0x378] sm:$0xff]
          %v1994 = vld [vmem:[%s1881 + $0x380] sm:$0xff]
          %v1995 = vld [vmem:[%s1881 + $0x388] sm:$0xff]
          %v1996 = vld [vmem:[%s1881 + $0x390] sm:$0xff]
          %v1997 = vld [vmem:[%s1881 + $0x398] sm:$0xff]
          %v1998 = vld [vmem:[%s1881 + $0x3a0] sm:$0xff]
          %v1999 = vld [vmem:[%s1881 + $0x3a8] sm:$0xff]
          %v2000 = vld [vmem:[%s1881 + $0x3b0] sm:$0xff]
          %v2001 = vld [vmem:[%s1881 + $0x3b8] sm:$0xff]
          %v2002 = vld [vmem:[%s1881 + $0x3c0] sm:$0xff]
          %v2003 = vld [vmem:[%s1881 + $0x3c8] sm:$0xff]
          %v2004 = vld [vmem:[%s1881 + $0x3d0] sm:$0xff]
          %v2005 = vld [vmem:[%s1881 + $0x3d8] sm:$0xff]
          %v2006 = vld [vmem:[%s1881 + $0x3e0] sm:$0xff]
          %v2007 = vld [vmem:[%s1881 + $0x3e8] sm:$0xff]
          %v2008 = vld [vmem:[%s1881 + $0x3f0] sm:$0xff]
          %v2009 = vld [vmem:[%s1881 + $0x3f8] sm:$0xff]
          %s2010 = scalar_lea.vmem [#allocation11], 4
          %v2011 = vld [vmem:[%s2010] sm:$0x3]
          %v2013 = vperm.slane %v2011, 0
          %v2014 = vperm.slane %v2011, 1
          %2017 = vmatpush.msra.mxu0 %v1912
          %2018 = vmatpush.msra.mxu0 %v1910
          %2019 = vmatpush.msra.mxu0 %v1908
          %2020 = vmatpush.msra.mxu0 %v1906
          %2021 = vmatpush.msra.mxu0 %v1904
          %2022 = vmatpush.msra.mxu0 %v1902
          %2023 = vmatpush.msra.mxu0 %v1900
          %2024 = vmatpush.msra.mxu0 %v1898
          %2025 = vmatpush.msra.mxu0 %v1896
          %2026 = vmatpush.msra.mxu0 %v1894
          %2027 = vmatpush.msra.mxu0 %v1892
          %2028 = vmatpush.msra.mxu0 %v1890
          %2029 = vmatpush.msra.mxu0 %v1888
          %2030 = vmatpush.msra.mxu0 %v1886
          %2031 = vmatpush.msra.mxu0 %v1884
          %2032 = vmatpush.msra.mxu0 %v1882
          %2033 = vmatmul.f32.gmra.mxu0 %v1096
          %v2034 = vpop.f32.mrf.mxu0
          %v2035 = vadd.f32 %v2013, %v2034
          %2036 = vdwg.mxu0
          %2037 = vmatpush.msra.mxu0 %v1944
          %2038 = vmatpush.msra.mxu0 %v1942
          %2039 = vmatpush.msra.mxu0 %v1940
          %2040 = vmatpush.msra.mxu0 %v1938
          %2041 = vmatpush.msra.mxu0 %v1936
          %2042 = vmatpush.msra.mxu0 %v1934
          %2043 = vmatpush.msra.mxu0 %v1932
          %2044 = vmatpush.msra.mxu0 %v1930
          %2045 = vmatpush.msra.mxu0 %v1928
          %2046 = vmatpush.msra.mxu0 %v1926
          %2047 = vmatpush.msra.mxu0 %v1924
          %2048 = vmatpush.msra.mxu0 %v1922
          %2049 = vmatpush.msra.mxu0 %v1920
          %2050 = vmatpush.msra.mxu0 %v1918
          %2051 = vmatpush.msra.mxu0 %v1916
          %2052 = vmatpush.msra.mxu0 %v1914
          %2053 = vmatmul.f32.gmra.mxu0 %v1097
          %v2054 = vpop.f32.mrf.mxu0
          %v2055 = vadd.f32 %v2035, %v2054
          %2056 = vdwg.mxu0
          %2057 = vmatpush.msra.mxu0 %v1976
          %2058 = vmatpush.msra.mxu0 %v1974
          %2059 = vmatpush.msra.mxu0 %v1972
          %2060 = vmatpush.msra.mxu0 %v1970
          %2061 = vmatpush.msra.mxu0 %v1968
          %2062 = vmatpush.msra.mxu0 %v1966
          %2063 = vmatpush.msra.mxu0 %v1964
          %2064 = vmatpush.msra.mxu0 %v1962
          %2065 = vmatpush.msra.mxu0 %v1960
          %2066 = vmatpush.msra.mxu0 %v1958
          %2067 = vmatpush.msra.mxu0 %v1956
          %2068 = vmatpush.msra.mxu0 %v1954
          %2069 = vmatpush.msra.mxu0 %v1952
          %2070 = vmatpush.msra.mxu0 %v1950
          %2071 = vmatpush.msra.mxu0 %v1948
          %2072 = vmatpush.msra.mxu0 %v1946
          %2073 = vmatmul.f32.gmra.mxu0 %v1098
          %v2074 = vpop.f32.mrf.mxu0
          %v2075 = vadd.f32 %v2055, %v2074
          %2076 = vdwg.mxu0
          %2077 = vmatpush.msra.mxu0 %v2008
          %2078 = vmatpush.msra.mxu0 %v2006
          %2079 = vmatpush.msra.mxu0 %v2004
          %2080 = vmatpush.msra.mxu0 %v2002
          %2081 = vmatpush.msra.mxu0 %v2000
          %2082 = vmatpush.msra.mxu0 %v1998
          %2083 = vmatpush.msra.mxu0 %v1996
          %2084 = vmatpush.msra.mxu0 %v1994
          %2085 = vmatpush.msra.mxu0 %v1992
          %2086 = vmatpush.msra.mxu0 %v1990
          %2087 = vmatpush.msra.mxu0 %v1988
          %2088 = vmatpush.msra.mxu0 %v1986
          %2089 = vmatpush.msra.mxu0 %v1984
          %2090 = vmatpush.msra.mxu0 %v1982
          %2091 = vmatpush.msra.mxu0 %v1980
          %2092 = vmatpush.msra.mxu0 %v1978
          %2093 = vmatmul.f32.gmra.mxu0 %v1099
          %v2094 = vpop.f32.mrf.mxu0
          %v2095 = vadd.f32 %v2075, %v2094
          %2096 = vdwg.mxu0
          %2097 = vmatpush.msra.mxu0 %v1913
          %2098 = vmatpush.msra.mxu0 %v1911
          %2099 = vmatpush.msra.mxu0 %v1909
          %2100 = vmatpush.msra.mxu0 %v1907
          %2101 = vmatpush.msra.mxu0 %v1905
          %2102 = vmatpush.msra.mxu0 %v1903
          %2103 = vmatpush.msra.mxu0 %v1901
          %2104 = vmatpush.msra.mxu0 %v1899
          %2105 = vmatpush.msra.mxu0 %v1897
          %2106 = vmatpush.msra.mxu0 %v1895
          %2107 = vmatpush.msra.mxu0 %v1893
          %2108 = vmatpush.msra.mxu0 %v1891
          %2109 = vmatpush.msra.mxu0 %v1889
          %2110 = vmatpush.msra.mxu0 %v1887
          %2111 = vmatpush.msra.mxu0 %v1885
          %2112 = vmatpush.msra.mxu0 %v1883
          %2113 = vmatmul.f32.gmra.mxu0 %v1096
          %v2114 = vpop.f32.mrf.mxu0
          %v2115 = vadd.f32 %v2014, %v2114
          %2116 = vdwg.mxu0
          %2117 = vmatpush.msra.mxu0 %v1945
          %2118 = vmatpush.msra.mxu0 %v1943
          %2119 = vmatpush.msra.mxu0 %v1941
          %2120 = vmatpush.msra.mxu0 %v1939
          %2121 = vmatpush.msra.mxu0 %v1937
          %2122 = vmatpush.msra.mxu0 %v1935
          %2123 = vmatpush.msra.mxu0 %v1933
          %2124 = vmatpush.msra.mxu0 %v1931
          %2125 = vmatpush.msra.mxu0 %v1929
          %2126 = vmatpush.msra.mxu0 %v1927
          %2127 = vmatpush.msra.mxu0 %v1925
          %2128 = vmatpush.msra.mxu0 %v1923
          %2129 = vmatpush.msra.mxu0 %v1921
          %2130 = vmatpush.msra.mxu0 %v1919
          %2131 = vmatpush.msra.mxu0 %v1917
          %2132 = vmatpush.msra.mxu0 %v1915
          %2133 = vmatmul.f32.gmra.mxu0 %v1097
          %v2134 = vpop.f32.mrf.mxu0
          %v2135 = vadd.f32 %v2115, %v2134
          %2136 = vdwg.mxu0
          %2137 = vmatpush.msra.mxu0 %v1977
          %2138 = vmatpush.msra.mxu0 %v1975
          %2139 = vmatpush.msra.mxu0 %v1973
          %2140 = vmatpush.msra.mxu0 %v1971
          %2141 = vmatpush.msra.mxu0 %v1969
          %2142 = vmatpush.msra.mxu0 %v1967
          %2143 = vmatpush.msra.mxu0 %v1965
          %2144 = vmatpush.msra.mxu0 %v1963
          %2145 = vmatpush.msra.mxu0 %v1961
          %2146 = vmatpush.msra.mxu0 %v1959
          %2147 = vmatpush.msra.mxu0 %v1957
          %2148 = vmatpush.msra.mxu0 %v1955
          %2149 = vmatpush.msra.mxu0 %v1953
          %2150 = vmatpush.msra.mxu0 %v1951
          %2151 = vmatpush.msra.mxu0 %v1949
          %2152 = vmatpush.msra.mxu0 %v1947
          %2153 = vmatmul.f32.gmra.mxu0 %v1098
          %v2154 = vpop.f32.mrf.mxu0
          %v2155 = vadd.f32 %v2135, %v2154
          %2156 = vdwg.mxu0
          %2157 = vmatpush.msra.mxu0 %v2009
          %2158 = vmatpush.msra.mxu0 %v2007
          %2159 = vmatpush.msra.mxu0 %v2005
          %2160 = vmatpush.msra.mxu0 %v2003
          %2161 = vmatpush.msra.mxu0 %v2001
          %2162 = vmatpush.msra.mxu0 %v1999
          %2163 = vmatpush.msra.mxu0 %v1997
          %2164 = vmatpush.msra.mxu0 %v1995
          %2165 = vmatpush.msra.mxu0 %v1993
          %2166 = vmatpush.msra.mxu0 %v1991
          %2167 = vmatpush.msra.mxu0 %v1989
          %2168 = vmatpush.msra.mxu0 %v1987
          %2169 = vmatpush.msra.mxu0 %v1985
          %2170 = vmatpush.msra.mxu0 %v1983
          %2171 = vmatpush.msra.mxu0 %v1981
          %2172 = vmatpush.msra.mxu0 %v1979
          %2173 = vmatmul.f32.gmra.mxu0 %v1099
          %v2174 = vpop.f32.mrf.mxu0
          %v2175 = vadd.f32 %v2155, %v2174
          %2176 = vdwg.mxu0
          %v2177 = vmax.f32 %v2095, 0.0
          %v2178 = vmax.f32 %v2175, 0.0
          %s2179 = scalar_lea.vmem [#allocation12], 512
          %v2180 = vld [vmem:[%s2179] sm:$0xff]
          %v2181 = vld [vmem:[%s2179 + $0x8] sm:$0xff]
          %v2182 = vld [vmem:[%s2179 + $0x10] sm:$0xff]
          %v2183 = vld [vmem:[%s2179 + $0x18] sm:$0xff]
          %v2184 = vld [vmem:[%s2179 + $0x20] sm:$0xff]
          %v2185 = vld [vmem:[%s2179 + $0x28] sm:$0xff]
          %v2186 = vld [vmem:[%s2179 + $0x30] sm:$0xff]
          %v2187 = vld [vmem:[%s2179 + $0x38] sm:$0xff]
          %v2188 = vld [vmem:[%s2179 + $0x40] sm:$0xff]
          %v2189 = vld [vmem:[%s2179 + $0x48] sm:$0xff]
          %v2190 = vld [vmem:[%s2179 + $0x50] sm:$0xff]
          %v2191 = vld [vmem:[%s2179 + $0x58] sm:$0xff]
          %v2192 = vld [vmem:[%s2179 + $0x60] sm:$0xff]
          %v2193 = vld [vmem:[%s2179 + $0x68] sm:$0xff]
          %v2194 = vld [vmem:[%s2179 + $0x70] sm:$0xff]
          %v2195 = vld [vmem:[%s2179 + $0x78] sm:$0xff]
          %v2196 = vld [vmem:[%s2179 + $0x80] sm:$0xff]
          %v2197 = vld [vmem:[%s2179 + $0x88] sm:$0xff]
          %v2198 = vld [vmem:[%s2179 + $0x90] sm:$0xff]
          %v2199 = vld [vmem:[%s2179 + $0x98] sm:$0xff]
          %v2200 = vld [vmem:[%s2179 + $0xa0] sm:$0xff]
          %v2201 = vld [vmem:[%s2179 + $0xa8] sm:$0xff]
          %v2202 = vld [vmem:[%s2179 + $0xb0] sm:$0xff]
          %v2203 = vld [vmem:[%s2179 + $0xb8] sm:$0xff]
          %v2204 = vld [vmem:[%s2179 + $0xc0] sm:$0xff]
          %v2205 = vld [vmem:[%s2179 + $0xc8] sm:$0xff]
          %v2206 = vld [vmem:[%s2179 + $0xd0] sm:$0xff]
          %v2207 = vld [vmem:[%s2179 + $0xd8] sm:$0xff]
          %v2208 = vld [vmem:[%s2179 + $0xe0] sm:$0xff]
          %v2209 = vld [vmem:[%s2179 + $0xe8] sm:$0xff]
          %v2210 = vld [vmem:[%s2179 + $0xf0] sm:$0xff]
          %v2211 = vld [vmem:[%s2179 + $0xf8] sm:$0xff]
          %s2212 = scalar_lea.vmem [#allocation14], 2
          %v2213 = vld [vmem:[%s2212] sm:$0x1]
          %v2215 = vperm.slane %v2213, 0
          %2217 = vmatpush.msra.mxu0 %v2195
          %2218 = vmatpush.msra.mxu0 %v2194
          %2219 = vmatpush.msra.mxu0 %v2193
          %2220 = vmatpush.msra.mxu0 %v2192
          %2221 = vmatpush.msra.mxu0 %v2191
          %2222 = vmatpush.msra.mxu0 %v2190
          %2223 = vmatpush.msra.mxu0 %v2189
          %2224 = vmatpush.msra.mxu0 %v2188
          %2225 = vmatpush.msra.mxu0 %v2187
          %2226 = vmatpush.msra.mxu0 %v2186
          %2227 = vmatpush.msra.mxu0 %v2185
          %2228 = vmatpush.msra.mxu0 %v2184
          %2229 = vmatpush.msra.mxu0 %v2183
          %2230 = vmatpush.msra.mxu0 %v2182
          %2231 = vmatpush.msra.mxu0 %v2181
          %2232 = vmatpush.msra.mxu0 %v2180
          %2233 = vmatmul.f32.gmra.mxu0 %v2177
          %v2234 = vpop.f32.mrf.mxu0
          %v2235 = vadd.f32 %v2215, %v2234
          %2236 = vdwg.mxu0
          %2237 = vmatpush.msra.mxu0 %v2211
          %2238 = vmatpush.msra.mxu0 %v2210
          %2239 = vmatpush.msra.mxu0 %v2209
          %2240 = vmatpush.msra.mxu0 %v2208
          %2241 = vmatpush.msra.mxu0 %v2207
          %2242 = vmatpush.msra.mxu0 %v2206
          %2243 = vmatpush.msra.mxu0 %v2205
          %2244 = vmatpush.msra.mxu0 %v2204
          %2245 = vmatpush.msra.mxu0 %v2203
          %2246 = vmatpush.msra.mxu0 %v2202
          %2247 = vmatpush.msra.mxu0 %v2201
          %2248 = vmatpush.msra.mxu0 %v2200
          %2249 = vmatpush.msra.mxu0 %v2199
          %2250 = vmatpush.msra.mxu0 %v2198
          %2251 = vmatpush.msra.mxu0 %v2197
          %2252 = vmatpush.msra.mxu0 %v2196
          %2253 = vmatmul.f32.gmra.mxu0 %v2178
          %v2254 = vpop.f32.mrf.mxu0
          %v2255 = vadd.f32 %v2235, %v2254
          %2256 = vdwg.mxu0
          %v2257 = vmax.f32 %v2255, 0.0
          %v2258 = vsel %vm1106, %v2257, -1e+30
          %2259 = vmax.xlane.f32.xlu0 %v2258
          %v2260 = vpop.xlane.xlu0 %2259
          %v2261 = vsub.f32 %v2258, %v2260
          %v2262 = vmul.f32 %v2261, 1.442695
          %v2263 = vpow.pop %v2262
          %2264 = vadd.xlane.f32.xlu0 %v2263
          %v2265 = vpop.xlane.xlu0 %2264
          %v2266 = vlog2.pop %v2265
          %v2267 = vmul.f32 %v2266, 0.6931472
          %v2268 = vsub.f32 %v2261, %v2267
          %2269 = vst [vmem:[#allocation15 + $0x10] sm:$0xff] %v2268
          %s2270 = scalar_lea.vmem [#allocation9], 3072
          %v2271 = vld [vmem:[%s2270] sm:$0xff]
          %v2272 = vld [vmem:[%s2270 + $0x8] sm:$0xff]
          %v2273 = vld [vmem:[%s2270 + $0x10] sm:$0xff]
          %v2274 = vld [vmem:[%s2270 + $0x18] sm:$0xff]
          %v2275 = vld [vmem:[%s2270 + $0x20] sm:$0xff]
          %v2276 = vld [vmem:[%s2270 + $0x28] sm:$0xff]
          %v2277 = vld [vmem:[%s2270 + $0x30] sm:$0xff]
          %v2278 = vld [vmem:[%s2270 + $0x38] sm:$0xff]
          %v2279 = vld [vmem:[%s2270 + $0x40] sm:$0xff]
          %v2280 = vld [vmem:[%s2270 + $0x48] sm:$0xff]
          %v2281 = vld [vmem:[%s2270 + $0x50] sm:$0xff]
          %v2282 = vld [vmem:[%s2270 + $0x58] sm:$0xff]
          %v2283 = vld [vmem:[%s2270 + $0x60] sm:$0xff]
          %v2284 = vld [vmem:[%s2270 + $0x68] sm:$0xff]
          %v2285 = vld [vmem:[%s2270 + $0x70] sm:$0xff]
          %v2286 = vld [vmem:[%s2270 + $0x78] sm:$0xff]
          %v2287 = vld [vmem:[%s2270 + $0x80] sm:$0xff]
          %v2288 = vld [vmem:[%s2270 + $0x88] sm:$0xff]
          %v2289 = vld [vmem:[%s2270 + $0x90] sm:$0xff]
          %v2290 = vld [vmem:[%s2270 + $0x98] sm:$0xff]
          %v2291 = vld [vmem:[%s2270 + $0xa0] sm:$0xff]
          %v2292 = vld [vmem:[%s2270 + $0xa8] sm:$0xff]
          %v2293 = vld [vmem:[%s2270 + $0xb0] sm:$0xff]
          %v2294 = vld [vmem:[%s2270 + $0xb8] sm:$0xff]
          %v2295 = vld [vmem:[%s2270 + $0xc0] sm:$0xff]
          %v2296 = vld [vmem:[%s2270 + $0xc8] sm:$0xff]
          %v2297 = vld [vmem:[%s2270 + $0xd0] sm:$0xff]
          %v2298 = vld [vmem:[%s2270 + $0xd8] sm:$0xff]
          %v2299 = vld [vmem:[%s2270 + $0xe0] sm:$0xff]
          %v2300 = vld [vmem:[%s2270 + $0xe8] sm:$0xff]
          %v2301 = vld [vmem:[%s2270 + $0xf0] sm:$0xff]
          %v2302 = vld [vmem:[%s2270 + $0xf8] sm:$0xff]
          %v2303 = vld [vmem:[%s2270 + $0x100] sm:$0xff]
          %v2304 = vld [vmem:[%s2270 + $0x108] sm:$0xff]
          %v2305 = vld [vmem:[%s2270 + $0x110] sm:$0xff]
          %v2306 = vld [vmem:[%s2270 + $0x118] sm:$0xff]
          %v2307 = vld [vmem:[%s2270 + $0x120] sm:$0xff]
          %v2308 = vld [vmem:[%s2270 + $0x128] sm:$0xff]
          %v2309 = vld [vmem:[%s2270 + $0x130] sm:$0xff]
          %v2310 = vld [vmem:[%s2270 + $0x138] sm:$0xff]
          %v2311 = vld [vmem:[%s2270 + $0x140] sm:$0xff]
          %v2312 = vld [vmem:[%s2270 + $0x148] sm:$0xff]
          %v2313 = vld [vmem:[%s2270 + $0x150] sm:$0xff]
          %v2314 = vld [vmem:[%s2270 + $0x158] sm:$0xff]
          %v2315 = vld [vmem:[%s2270 + $0x160] sm:$0xff]
          %v2316 = vld [vmem:[%s2270 + $0x168] sm:$0xff]
          %v2317 = vld [vmem:[%s2270 + $0x170] sm:$0xff]
          %v2318 = vld [vmem:[%s2270 + $0x178] sm:$0xff]
          %v2319 = vld [vmem:[%s2270 + $0x180] sm:$0xff]
          %v2320 = vld [vmem:[%s2270 + $0x188] sm:$0xff]
          %v2321 = vld [vmem:[%s2270 + $0x190] sm:$0xff]
          %v2322 = vld [vmem:[%s2270 + $0x198] sm:$0xff]
          %v2323 = vld [vmem:[%s2270 + $0x1a0] sm:$0xff]
          %v2324 = vld [vmem:[%s2270 + $0x1a8] sm:$0xff]
          %v2325 = vld [vmem:[%s2270 + $0x1b0] sm:$0xff]
          %v2326 = vld [vmem:[%s2270 + $0x1b8] sm:$0xff]
          %v2327 = vld [vmem:[%s2270 + $0x1c0] sm:$0xff]
          %v2328 = vld [vmem:[%s2270 + $0x1c8] sm:$0xff]
          %v2329 = vld [vmem:[%s2270 + $0x1d0] sm:$0xff]
          %v2330 = vld [vmem:[%s2270 + $0x1d8] sm:$0xff]
          %v2331 = vld [vmem:[%s2270 + $0x1e0] sm:$0xff]
          %v2332 = vld [vmem:[%s2270 + $0x1e8] sm:$0xff]
          %v2333 = vld [vmem:[%s2270 + $0x1f0] sm:$0xff]
          %v2334 = vld [vmem:[%s2270 + $0x1f8] sm:$0xff]
          %v2335 = vld [vmem:[%s2270 + $0x200] sm:$0xff]
          %v2336 = vld [vmem:[%s2270 + $0x208] sm:$0xff]
          %v2337 = vld [vmem:[%s2270 + $0x210] sm:$0xff]
          %v2338 = vld [vmem:[%s2270 + $0x218] sm:$0xff]
          %v2339 = vld [vmem:[%s2270 + $0x220] sm:$0xff]
          %v2340 = vld [vmem:[%s2270 + $0x228] sm:$0xff]
          %v2341 = vld [vmem:[%s2270 + $0x230] sm:$0xff]
          %v2342 = vld [vmem:[%s2270 + $0x238] sm:$0xff]
          %v2343 = vld [vmem:[%s2270 + $0x240] sm:$0xff]
          %v2344 = vld [vmem:[%s2270 + $0x248] sm:$0xff]
          %v2345 = vld [vmem:[%s2270 + $0x250] sm:$0xff]
          %v2346 = vld [vmem:[%s2270 + $0x258] sm:$0xff]
          %v2347 = vld [vmem:[%s2270 + $0x260] sm:$0xff]
          %v2348 = vld [vmem:[%s2270 + $0x268] sm:$0xff]
          %v2349 = vld [vmem:[%s2270 + $0x270] sm:$0xff]
          %v2350 = vld [vmem:[%s2270 + $0x278] sm:$0xff]
          %v2351 = vld [vmem:[%s2270 + $0x280] sm:$0xff]
          %v2352 = vld [vmem:[%s2270 + $0x288] sm:$0xff]
          %v2353 = vld [vmem:[%s2270 + $0x290] sm:$0xff]
          %v2354 = vld [vmem:[%s2270 + $0x298] sm:$0xff]
          %v2355 = vld [vmem:[%s2270 + $0x2a0] sm:$0xff]
          %v2356 = vld [vmem:[%s2270 + $0x2a8] sm:$0xff]
          %v2357 = vld [vmem:[%s2270 + $0x2b0] sm:$0xff]
          %v2358 = vld [vmem:[%s2270 + $0x2b8] sm:$0xff]
          %v2359 = vld [vmem:[%s2270 + $0x2c0] sm:$0xff]
          %v2360 = vld [vmem:[%s2270 + $0x2c8] sm:$0xff]
          %v2361 = vld [vmem:[%s2270 + $0x2d0] sm:$0xff]
          %v2362 = vld [vmem:[%s2270 + $0x2d8] sm:$0xff]
          %v2363 = vld [vmem:[%s2270 + $0x2e0] sm:$0xff]
          %v2364 = vld [vmem:[%s2270 + $0x2e8] sm:$0xff]
          %v2365 = vld [vmem:[%s2270 + $0x2f0] sm:$0xff]
          %v2366 = vld [vmem:[%s2270 + $0x2f8] sm:$0xff]
          %v2367 = vld [vmem:[%s2270 + $0x300] sm:$0xff]
          %v2368 = vld [vmem:[%s2270 + $0x308] sm:$0xff]
          %v2369 = vld [vmem:[%s2270 + $0x310] sm:$0xff]
          %v2370 = vld [vmem:[%s2270 + $0x318] sm:$0xff]
          %v2371 = vld [vmem:[%s2270 + $0x320] sm:$0xff]
          %v2372 = vld [vmem:[%s2270 + $0x328] sm:$0xff]
          %v2373 = vld [vmem:[%s2270 + $0x330] sm:$0xff]
          %v2374 = vld [vmem:[%s2270 + $0x338] sm:$0xff]
          %v2375 = vld [vmem:[%s2270 + $0x340] sm:$0xff]
          %v2376 = vld [vmem:[%s2270 + $0x348] sm:$0xff]
          %v2377 = vld [vmem:[%s2270 + $0x350] sm:$0xff]
          %v2378 = vld [vmem:[%s2270 + $0x358] sm:$0xff]
          %v2379 = vld [vmem:[%s2270 + $0x360] sm:$0xff]
          %v2380 = vld [vmem:[%s2270 + $0x368] sm:$0xff]
          %v2381 = vld [vmem:[%s2270 + $0x370] sm:$0xff]
          %v2382 = vld [vmem:[%s2270 + $0x378] sm:$0xff]
          %v2383 = vld [vmem:[%s2270 + $0x380] sm:$0xff]
          %v2384 = vld [vmem:[%s2270 + $0x388] sm:$0xff]
          %v2385 = vld [vmem:[%s2270 + $0x390] sm:$0xff]
          %v2386 = vld [vmem:[%s2270 + $0x398] sm:$0xff]
          %v2387 = vld [vmem:[%s2270 + $0x3a0] sm:$0xff]
          %v2388 = vld [vmem:[%s2270 + $0x3a8] sm:$0xff]
          %v2389 = vld [vmem:[%s2270 + $0x3b0] sm:$0xff]
          %v2390 = vld [vmem:[%s2270 + $0x3b8] sm:$0xff]
          %v2391 = vld [vmem:[%s2270 + $0x3c0] sm:$0xff]
          %v2392 = vld [vmem:[%s2270 + $0x3c8] sm:$0xff]
          %v2393 = vld [vmem:[%s2270 + $0x3d0] sm:$0xff]
          %v2394 = vld [vmem:[%s2270 + $0x3d8] sm:$0xff]
          %v2395 = vld [vmem:[%s2270 + $0x3e0] sm:$0xff]
          %v2396 = vld [vmem:[%s2270 + $0x3e8] sm:$0xff]
          %v2397 = vld [vmem:[%s2270 + $0x3f0] sm:$0xff]
          %v2398 = vld [vmem:[%s2270 + $0x3f8] sm:$0xff]
          %s2399 = scalar_lea.vmem [#allocation11], 6
          %v2400 = vld [vmem:[%s2399] sm:$0x3]
          %v2402 = vperm.slane %v2400, 0
          %v2403 = vperm.slane %v2400, 1
          %2406 = vmatpush.msra.mxu0 %v2301
          %2407 = vmatpush.msra.mxu0 %v2299
          %2408 = vmatpush.msra.mxu0 %v2297
          %2409 = vmatpush.msra.mxu0 %v2295
          %2410 = vmatpush.msra.mxu0 %v2293
          %2411 = vmatpush.msra.mxu0 %v2291
          %2412 = vmatpush.msra.mxu0 %v2289
          %2413 = vmatpush.msra.mxu0 %v2287
          %2414 = vmatpush.msra.mxu0 %v2285
          %2415 = vmatpush.msra.mxu0 %v2283
          %2416 = vmatpush.msra.mxu0 %v2281
          %2417 = vmatpush.msra.mxu0 %v2279
          %2418 = vmatpush.msra.mxu0 %v2277
          %2419 = vmatpush.msra.mxu0 %v2275
          %2420 = vmatpush.msra.mxu0 %v2273
          %2421 = vmatpush.msra.mxu0 %v2271
          %2422 = vmatmul.f32.gmra.mxu0 %v1100
          %v2423 = vpop.f32.mrf.mxu0
          %v2424 = vadd.f32 %v2402, %v2423
          %2425 = vdwg.mxu0
          %2426 = vmatpush.msra.mxu0 %v2333
          %2427 = vmatpush.msra.mxu0 %v2331
          %2428 = vmatpush.msra.mxu0 %v2329
          %2429 = vmatpush.msra.mxu0 %v2327
          %2430 = vmatpush.msra.mxu0 %v2325
          %2431 = vmatpush.msra.mxu0 %v2323
          %2432 = vmatpush.msra.mxu0 %v2321
          %2433 = vmatpush.msra.mxu0 %v2319
          %2434 = vmatpush.msra.mxu0 %v2317
          %2435 = vmatpush.msra.mxu0 %v2315
          %2436 = vmatpush.msra.mxu0 %v2313
          %2437 = vmatpush.msra.mxu0 %v2311
          %2438 = vmatpush.msra.mxu0 %v2309
          %2439 = vmatpush.msra.mxu0 %v2307
          %2440 = vmatpush.msra.mxu0 %v2305
          %2441 = vmatpush.msra.mxu0 %v2303
          %2442 = vmatmul.f32.gmra.mxu0 %v1101
          %v2443 = vpop.f32.mrf.mxu0
          %v2444 = vadd.f32 %v2424, %v2443
          %2445 = vdwg.mxu0
          %2446 = vmatpush.msra.mxu0 %v2365
          %2447 = vmatpush.msra.mxu0 %v2363
          %2448 = vmatpush.msra.mxu0 %v2361
          %2449 = vmatpush.msra.mxu0 %v2359
          %2450 = vmatpush.msra.mxu0 %v2357
          %2451 = vmatpush.msra.mxu0 %v2355
          %2452 = vmatpush.msra.mxu0 %v2353
          %2453 = vmatpush.msra.mxu0 %v2351
          %2454 = vmatpush.msra.mxu0 %v2349
          %2455 = vmatpush.msra.mxu0 %v2347
          %2456 = vmatpush.msra.mxu0 %v2345
          %2457 = vmatpush.msra.mxu0 %v2343
          %2458 = vmatpush.msra.mxu0 %v2341
          %2459 = vmatpush.msra.mxu0 %v2339
          %2460 = vmatpush.msra.mxu0 %v2337
          %2461 = vmatpush.msra.mxu0 %v2335
          %2462 = vmatmul.f32.gmra.mxu0 %v1102
          %v2463 = vpop.f32.mrf.mxu0
          %v2464 = vadd.f32 %v2444, %v2463
          %2465 = vdwg.mxu0
          %2466 = vmatpush.msra.mxu0 %v2397
          %2467 = vmatpush.msra.mxu0 %v2395
          %2468 = vmatpush.msra.mxu0 %v2393
          %2469 = vmatpush.msra.mxu0 %v2391
          %2470 = vmatpush.msra.mxu0 %v2389
          %2471 = vmatpush.msra.mxu0 %v2387
          %2472 = vmatpush.msra.mxu0 %v2385
          %2473 = vmatpush.msra.mxu0 %v2383
          %2474 = vmatpush.msra.mxu0 %v2381
          %2475 = vmatpush.msra.mxu0 %v2379
          %2476 = vmatpush.msra.mxu0 %v2377
          %2477 = vmatpush.msra.mxu0 %v2375
          %2478 = vmatpush.msra.mxu0 %v2373
          %2479 = vmatpush.msra.mxu0 %v2371
          %2480 = vmatpush.msra.mxu0 %v2369
          %2481 = vmatpush.msra.mxu0 %v2367
          %2482 = vmatmul.f32.gmra.mxu0 %v1103
          %v2483 = vpop.f32.mrf.mxu0
          %v2484 = vadd.f32 %v2464, %v2483
          %2485 = vdwg.mxu0
          %2486 = vmatpush.msra.mxu0 %v2302
          %2487 = vmatpush.msra.mxu0 %v2300
          %2488 = vmatpush.msra.mxu0 %v2298
          %2489 = vmatpush.msra.mxu0 %v2296
          %2490 = vmatpush.msra.mxu0 %v2294
          %2491 = vmatpush.msra.mxu0 %v2292
          %2492 = vmatpush.msra.mxu0 %v2290
          %2493 = vmatpush.msra.mxu0 %v2288
          %2494 = vmatpush.msra.mxu0 %v2286
          %2495 = vmatpush.msra.mxu0 %v2284
          %2496 = vmatpush.msra.mxu0 %v2282
          %2497 = vmatpush.msra.mxu0 %v2280
          %2498 = vmatpush.msra.mxu0 %v2278
          %2499 = vmatpush.msra.mxu0 %v2276
          %2500 = vmatpush.msra.mxu0 %v2274
          %2501 = vmatpush.msra.mxu0 %v2272
          %2502 = vmatmul.f32.gmra.mxu0 %v1100
          %v2503 = vpop.f32.mrf.mxu0
          %v2504 = vadd.f32 %v2403, %v2503
          %2505 = vdwg.mxu0
          %2506 = vmatpush.msra.mxu0 %v2334
          %2507 = vmatpush.msra.mxu0 %v2332
          %2508 = vmatpush.msra.mxu0 %v2330
          %2509 = vmatpush.msra.mxu0 %v2328
          %2510 = vmatpush.msra.mxu0 %v2326
          %2511 = vmatpush.msra.mxu0 %v2324
          %2512 = vmatpush.msra.mxu0 %v2322
          %2513 = vmatpush.msra.mxu0 %v2320
          %2514 = vmatpush.msra.mxu0 %v2318
          %2515 = vmatpush.msra.mxu0 %v2316
          %2516 = vmatpush.msra.mxu0 %v2314
          %2517 = vmatpush.msra.mxu0 %v2312
          %2518 = vmatpush.msra.mxu0 %v2310
          %2519 = vmatpush.msra.mxu0 %v2308
          %2520 = vmatpush.msra.mxu0 %v2306
          %2521 = vmatpush.msra.mxu0 %v2304
          %2522 = vmatmul.f32.gmra.mxu0 %v1101
          %v2523 = vpop.f32.mrf.mxu0
          %v2524 = vadd.f32 %v2504, %v2523
          %2525 = vdwg.mxu0
          %2526 = vmatpush.msra.mxu0 %v2366
          %2527 = vmatpush.msra.mxu0 %v2364
          %2528 = vmatpush.msra.mxu0 %v2362
          %2529 = vmatpush.msra.mxu0 %v2360
          %2530 = vmatpush.msra.mxu0 %v2358
          %2531 = vmatpush.msra.mxu0 %v2356
          %2532 = vmatpush.msra.mxu0 %v2354
          %2533 = vmatpush.msra.mxu0 %v2352
          %2534 = vmatpush.msra.mxu0 %v2350
          %2535 = vmatpush.msra.mxu0 %v2348
          %2536 = vmatpush.msra.mxu0 %v2346
          %2537 = vmatpush.msra.mxu0 %v2344
          %2538 = vmatpush.msra.mxu0 %v2342
          %2539 = vmatpush.msra.mxu0 %v2340
          %2540 = vmatpush.msra.mxu0 %v2338
          %2541 = vmatpush.msra.mxu0 %v2336
          %2542 = vmatmul.f32.gmra.mxu0 %v1102
          %v2543 = vpop.f32.mrf.mxu0
          %v2544 = vadd.f32 %v2524, %v2543
          %2545 = vdwg.mxu0
          %2546 = vmatpush.msra.mxu0 %v2398
          %2547 = vmatpush.msra.mxu0 %v2396
          %2548 = vmatpush.msra.mxu0 %v2394
          %2549 = vmatpush.msra.mxu0 %v2392
          %2550 = vmatpush.msra.mxu0 %v2390
          %2551 = vmatpush.msra.mxu0 %v2388
          %2552 = vmatpush.msra.mxu0 %v2386
          %2553 = vmatpush.msra.mxu0 %v2384
          %2554 = vmatpush.msra.mxu0 %v2382
          %2555 = vmatpush.msra.mxu0 %v2380
          %2556 = vmatpush.msra.mxu0 %v2378
          %2557 = vmatpush.msra.mxu0 %v2376
          %2558 = vmatpush.msra.mxu0 %v2374
          %2559 = vmatpush.msra.mxu0 %v2372
          %2560 = vmatpush.msra.mxu0 %v2370
          %2561 = vmatpush.msra.mxu0 %v2368
          %2562 = vmatmul.f32.gmra.mxu0 %v1103
          %v2563 = vpop.f32.mrf.mxu0
          %v2564 = vadd.f32 %v2544, %v2563
          %2565 = vdwg.mxu0
          %v2566 = vmax.f32 %v2484, 0.0
          %v2567 = vmax.f32 %v2564, 0.0
          %s2568 = scalar_lea.vmem [#allocation12], 768
          %v2569 = vld [vmem:[%s2568] sm:$0xff]
          %v2570 = vld [vmem:[%s2568 + $0x8] sm:$0xff]
          %v2571 = vld [vmem:[%s2568 + $0x10] sm:$0xff]
          %v2572 = vld [vmem:[%s2568 + $0x18] sm:$0xff]
          %v2573 = vld [vmem:[%s2568 + $0x20] sm:$0xff]
          %v2574 = vld [vmem:[%s2568 + $0x28] sm:$0xff]
          %v2575 = vld [vmem:[%s2568 + $0x30] sm:$0xff]
          %v2576 = vld [vmem:[%s2568 + $0x38] sm:$0xff]
          %v2577 = vld [vmem:[%s2568 + $0x40] sm:$0xff]
          %v2578 = vld [vmem:[%s2568 + $0x48] sm:$0xff]
          %v2579 = vld [vmem:[%s2568 + $0x50] sm:$0xff]
          %v2580 = vld [vmem:[%s2568 + $0x58] sm:$0xff]
          %v2581 = vld [vmem:[%s2568 + $0x60] sm:$0xff]
          %v2582 = vld [vmem:[%s2568 + $0x68] sm:$0xff]
          %v2583 = vld [vmem:[%s2568 + $0x70] sm:$0xff]
          %v2584 = vld [vmem:[%s2568 + $0x78] sm:$0xff]
          %v2585 = vld [vmem:[%s2568 + $0x80] sm:$0xff]
          %v2586 = vld [vmem:[%s2568 + $0x88] sm:$0xff]
          %v2587 = vld [vmem:[%s2568 + $0x90] sm:$0xff]
          %v2588 = vld [vmem:[%s2568 + $0x98] sm:$0xff]
          %v2589 = vld [vmem:[%s2568 + $0xa0] sm:$0xff]
          %v2590 = vld [vmem:[%s2568 + $0xa8] sm:$0xff]
          %v2591 = vld [vmem:[%s2568 + $0xb0] sm:$0xff]
          %v2592 = vld [vmem:[%s2568 + $0xb8] sm:$0xff]
          %v2593 = vld [vmem:[%s2568 + $0xc0] sm:$0xff]
          %v2594 = vld [vmem:[%s2568 + $0xc8] sm:$0xff]
          %v2595 = vld [vmem:[%s2568 + $0xd0] sm:$0xff]
          %v2596 = vld [vmem:[%s2568 + $0xd8] sm:$0xff]
          %v2597 = vld [vmem:[%s2568 + $0xe0] sm:$0xff]
          %v2598 = vld [vmem:[%s2568 + $0xe8] sm:$0xff]
          %v2599 = vld [vmem:[%s2568 + $0xf0] sm:$0xff]
          %v2600 = vld [vmem:[%s2568 + $0xf8] sm:$0xff]
          %s2601 = scalar_lea.vmem [#allocation14], 3
          %v2602 = vld [vmem:[%s2601] sm:$0x1]
          %v2604 = vperm.slane %v2602, 0
          %2606 = vmatpush.msra.mxu0 %v2584
          %2607 = vmatpush.msra.mxu0 %v2583
          %2608 = vmatpush.msra.mxu0 %v2582
          %2609 = vmatpush.msra.mxu0 %v2581
          %2610 = vmatpush.msra.mxu0 %v2580
          %2611 = vmatpush.msra.mxu0 %v2579
          %2612 = vmatpush.msra.mxu0 %v2578
          %2613 = vmatpush.msra.mxu0 %v2577
          %2614 = vmatpush.msra.mxu0 %v2576
          %2615 = vmatpush.msra.mxu0 %v2575
          %2616 = vmatpush.msra.mxu0 %v2574
          %2617 = vmatpush.msra.mxu0 %v2573
          %2618 = vmatpush.msra.mxu0 %v2572
          %2619 = vmatpush.msra.mxu0 %v2571
          %2620 = vmatpush.msra.mxu0 %v2570
          %2621 = vmatpush.msra.mxu0 %v2569
          %2622 = vmatmul.f32.gmra.mxu0 %v2566
          %v2623 = vpop.f32.mrf.mxu0
          %v2624 = vadd.f32 %v2604, %v2623
          %2625 = vdwg.mxu0
          %2626 = vmatpush.msra.mxu0 %v2600
          %2627 = vmatpush.msra.mxu0 %v2599
          %2628 = vmatpush.msra.mxu0 %v2598
          %2629 = vmatpush.msra.mxu0 %v2597
          %2630 = vmatpush.msra.mxu0 %v2596
          %2631 = vmatpush.msra.mxu0 %v2595
          %2632 = vmatpush.msra.mxu0 %v2594
          %2633 = vmatpush.msra.mxu0 %v2593
          %2634 = vmatpush.msra.mxu0 %v2592
          %2635 = vmatpush.msra.mxu0 %v2591
          %2636 = vmatpush.msra.mxu0 %v2590
          %2637 = vmatpush.msra.mxu0 %v2589
          %2638 = vmatpush.msra.mxu0 %v2588
          %2639 = vmatpush.msra.mxu0 %v2587
          %2640 = vmatpush.msra.mxu0 %v2586
          %2641 = vmatpush.msra.mxu0 %v2585
          %2642 = vmatmul.f32.gmra.mxu0 %v2567
          %v2643 = vpop.f32.mrf.mxu0
          %v2644 = vadd.f32 %v2624, %v2643
          %2645 = vdwg.mxu0
          %v2646 = vmax.f32 %v2644, 0.0
          %v2647 = vsel %vm1106, %v2646, -1e+30
          %2648 = vmax.xlane.f32.xlu0 %v2647
          %v2649 = vpop.xlane.xlu0 %2648
          %v2650 = vsub.f32 %v2647, %v2649
          %v2651 = vmul.f32 %v2650, 1.442695
          %v2652 = vpow.pop %v2651
          %2653 = vadd.xlane.f32.xlu0 %v2652
          %v2654 = vpop.xlane.xlu0 %2653
          %v2655 = vlog2.pop %v2654
          %v2656 = vmul.f32 %v2655, 0.6931472
          %v2657 = vsub.f32 %v2650, %v2656
          %2658 = vst [vmem:[#allocation15 + $0x18] sm:$0xff] %v2657
        $region84: #{tpu_custom_call.1} parent=47 // pred_fallthru
          _
        // Predicated region
        $region85: #{tpu_custom_call.1} parent=47 // pred_check
          %p2659 = pneg %p190
        $region86: #{tpu_custom_call.1} parent=47 // pred_check_branch
          %2661 = sbr.rel (%p2659) target = $region88
        $region87: #{tpu_custom_call.1} parent=47 // pred_region
          %2663 = vsyncadd [#allocation5], 0
          %s2665 = sshll.u32 [#allocation15], 4
          %s2666 = int_to_ptr.vmem [resolvable:$true] %s2665
          %s2667 = sshll.u32 %s7, 4
          %s2668 = int_to_ptr.hbm [resolvable:$true] %s2667
          %2670 = dma.vmem_to_hbm [thread:$0]  %s2666, 512, %s2668, [#allocation5]
        $region88: #{tpu_custom_call.1} parent=47 // pred_fallthru
          _
        // Predicated region
        $region89: #{tpu_custom_call.1} parent=47 // pred_check
          %p2671 = pneg %p190
        $region90: #{tpu_custom_call.1} parent=47 // pred_check_branch
          %2673 = sbr.rel (%p2671) target = $region92
        $region91: #{tpu_custom_call.1} parent=47 // pred_region
          %2675 = dma.done [#allocation5], 512
        $region92: #{tpu_custom_call.1} parent=47 // pred_fallthru
          _
      $region48: #{tpu_custom_call.1} parent=5 // pred_fallthru
        _
      %p2676 = scmp.le.s32.totalorder 2, %s20
      // Predicated region
      $region93: #{tpu_custom_call.1} parent=5 // pred_check
        %p2677 = pneg %p2676
      $region94: #{tpu_custom_call.1} parent=5 // pred_check_branch
        %2679 = sbr.rel (%p2677) target = $region96
      $region95: #{tpu_custom_call.1} parent=5 // pred_region
        %s2680 = ssub.s32 %s20, 2
      $region96: #{tpu_custom_call.1} parent=5 // pred_fallthru
        _
    $region6: #{tpu_custom_call.1} parent=1 // loop_footer
      %s24 = sadd.s32 1, %s20
    $region7: #{tpu_custom_call.1} parent=1 // loop_footer_branch
      %19 = sbr.rel target = $region3
    $region8: #{tpu_custom_call.1} parent=1 // loop_exit
      _
    %2681 = vsyncpa [#allocation4], 1
    %s2682 = scalar_lea.sflag [#allocation4], 1
    %2683 = vsyncpa %s2682, 1
    %2684 = vsyncpa [#allocation7], 1
    %2685 = vsyncpa [#allocation10], 1
    %2686 = vsyncpa [#allocation13], 1
    %2687 = vsyncpa [#allocation5], 1
    %s2688 = scalar_lea.sflag [#allocation5], 1
    %2689 = vsyncpa %s2688, 1

</llo_original>
